<compile_context>
chip_gen: v6e
topology: v6e:2x2x1
jax: 0.10.0
libtpu: 0.0.40
codegen_flags: <defaults>
</compile_context>

<pallas_src>
import functools
import math

import jax
import jax.numpy as jnp
from jax.experimental import pallas as pl
from jax.experimental.pallas import tpu as pltpu


# ----------------------------------------------------------------------------
# Fused ResBlock kernel: conv3x3 -> bias -> ReLU -> conv3x3 -> bias -> + residual
# ----------------------------------------------------------------------------
def _resblock_kernel(x_ref, w1_ref, b1_ref, w2_ref, b2_ref, o_ref,
                     xpad_ref, hpad_ref, *, H, W, C):
    # x_ref:  (1, H, W, C)  bf16        o_ref: (1, H, W, C) f32
    # w*_ref: (3, 3*C, C)   bf16        b*_ref: (1, C)      f32
    # xpad_ref / hpad_ref: (H+2, W+2, C) bf16 VMEM scratch (zero halo, interior data)

    def zero_halo(ref):
        # Zero only the 1-pixel halo strips (rows cover the corners).
        zrow = jnp.zeros((1, W + 2, C), jnp.bfloat16)
        zcol = jnp.zeros((H, 1, C), jnp.bfloat16)
        ref[pl.ds(0, 1), :, :] = zrow
        ref[pl.ds(H + 1, 1), :, :] = zrow
        ref[pl.ds(1, H), pl.ds(0, 1), :] = zcol
        ref[pl.ds(1, H), pl.ds(W + 1, 1), :] = zcol

    zero_halo(xpad_ref)
    zero_halo(hpad_ref)

    # Interior copy of the (already bf16) input — replaces any HBM-side jnp.pad.
    xpad_ref[pl.ds(1, H), pl.ds(1, W), :] = x_ref[0]

    def conv3x3(src_ref, w_ref, b_ref):
        # 3x3 conv as 3 per-dy MXU matmuls with K = 3*C (dx taps folded into the
        # contraction).  Accumulator starts from the broadcast bias (f32).
        acc = jnp.broadcast_to(b_ref[0][None, None, :], (H, W, C))
        for dy in range(3):
            taps = jnp.concatenate(
                [src_ref[pl.ds(dy, H), pl.ds(dx, W), :] for dx in range(3)],
                axis=-1)                                   # (H, W, 3C) bf16
            acc = acc + jnp.einsum(
                "hwk,ko->hwo", taps, w_ref[dy],
                preferred_element_type=jnp.float32)
        return acc

    # conv1 + bias + ReLU -> padded bf16 intermediate (never leaves VMEM)
    h = jnp.maximum(conv3x3(xpad_ref, w1_ref, b1_ref), 0.0)
    hpad_ref[pl.ds(1, H), pl.ds(1, W), :] = h.astype(jnp.bfloat16)

    # conv2 + bias + residual (residual add in f32)
    out = conv3x3(hpad_ref, w2_ref, b2_ref) + x_ref[0].astype(jnp.float32)
    o_ref[0] = out.astype(o_ref.dtype)


# ----------------------------------------------------------------------------
# Wrapper: NCHW in / NCHW out (PyTorch layout), NHWC inside the kernel.
# Weights are HWIO (3, 3, Cin, Cout); torch weights (Cout,Cin,3,3) would map via
# w.transpose(2, 3, 1, 0).  dx taps are pre-folded into K in the wrapper (free).
# ----------------------------------------------------------------------------
def resblock_db(x_nchw, w1, b1, w2, b2):
    N, C, H, W = x_nchw.shape
    x = jnp.transpose(x_nchw, (0, 2, 3, 1)).astype(jnp.bfloat16)  # NCHW -> NHWC, bf16 I/O

    # (3, 3, Cin, Cout) -> (3, 3*Cin, Cout): per-dy weight with k = dx*C + cin,
    # matching the kernel's [dx=0 | dx=1 | dx=2] channel concat order.
    w1b = w1.astype(jnp.bfloat16).reshape(3, 3 * C, C)
    w2b = w2.astype(jnp.bfloat16).reshape(3, 3 * C, C)
    b1r = b1.reshape(1, C).astype(jnp.float32)
    b2r = b2.reshape(1, C).astype(jnp.float32)

    kernel = functools.partial(_resblock_kernel, H=H, W=W, C=C)

    out = pl.pallas_call(
        kernel,
        out_shape=jax.ShapeDtypeStruct((N, H, W, C), jnp.float32),
        grid_spec=pltpu.PrefetchScalarGridSpec(
            num_scalar_prefetch=0,
            grid=(N,),
            in_specs=[
                pl.BlockSpec((1, H, W, C), lambda n: (n, 0, 0, 0)),
                pl.BlockSpec((3, 3 * C, C), lambda n: (0, 0, 0)),
                pl.BlockSpec((1, C), lambda n: (0, 0)),
                pl.BlockSpec((3, 3 * C, C), lambda n: (0, 0, 0)),
                pl.BlockSpec((1, C), lambda n: (0, 0)),
            ],
            out_specs=pl.BlockSpec((1, H, W, C), lambda n: (n, 0, 0, 0)),
            scratch_shapes=[
                pltpu.VMEM((H + 2, W + 2, C), jnp.bfloat16),  # padded input
                pltpu.VMEM((H + 2, W + 2, C), jnp.bfloat16),  # padded intermediate
            ],
        ),
        compiler_params=pltpu.CompilerParams(
            dimension_semantics=("parallel",)),
    )(x, w1b, b1r, w2b, b2r)

    return jnp.transpose(out, (0, 3, 1, 2))  # NHWC -> NCHW


# ----------------------------------------------------------------------------
# f32 XLA reference (loose numerical check against the bf16-MXU kernel)
# ----------------------------------------------------------------------------
def _ref_forward(x_nchw, w1, b1, w2, b2):
    dn = ("NCHW", "HWIO", "NCHW")
    h = jax.lax.conv_general_dilated(x_nchw, w1, (1, 1), "SAME",
                                     dimension_numbers=dn)
    h = jnp.maximum(h + b1[None, :, None, None], 0.0)
    y = jax.lax.conv_general_dilated(h, w2, (1, 1), "SAME",
                                     dimension_numbers=dn)
    y = y + b2[None, :, None, None]
    return x_nchw + y


if __name__ == "__main__":
    key = jax.random.PRNGKey(0)
    kx, k1, k2, kb1, kb2 = jax.random.split(key, 5)

    # Small NCHW input consistent with the module (inchannel == outchannel).
    N, C, H, W = 2, 64, 16, 16
    x = jax.random.normal(kx, (N, C, H, W), jnp.float32)

    # weight ~ N(0, sqrt(2/(k*k*cout))) as in the PyTorch init; small nonzero
    # biases so the bias path is actually exercised.
    std = math.sqrt(2.0 / (3 * 3 * C))
    w1 = jax.random.normal(k1, (3, 3, C, C), jnp.float32) * std
    w2 = jax.random.normal(k2, (3, 3, C, C), jnp.float32) * std
    b1 = jax.random.normal(kb1, (C,), jnp.float32) * 0.1
    b2 = jax.random.normal(kb2, (C,), jnp.float32) * 0.1

    out = jax.jit(resblock_db)(x, w1, b1, w2, b2)
    out = jax.block_until_ready(out)

    assert out.shape == (N, C, H, W), out.shape
    assert out.dtype == jnp.float32

    ref = _ref_forward(x, w1, b1, w2, b2)
    rel_err = float(jnp.linalg.norm(out - ref) / jnp.linalg.norm(ref))
    assert rel_err < 3e-2, f"relative L2 error too large: {rel_err}"

    print("KERNEL_OK")
</pallas_src>

<mosaic_0001>
module attributes {stable_mosaic.version = 11 : i64} {
  func.func @_resblock_kernel(%arg0: i32, %arg1: memref<1x16x16x64xbf16, #tpu.memory_space<vmem>>, %arg2: memref<3x192x64xbf16, #tpu.memory_space<vmem>>, %arg3: memref<1x64xf32, #tpu.memory_space<vmem>>, %arg4: memref<3x192x64xbf16, #tpu.memory_space<vmem>>, %arg5: memref<1x64xf32, #tpu.memory_space<vmem>>, %arg6: memref<1x16x16x64xf32, #tpu.memory_space<vmem>>, %arg7: memref<18x18x64xbf16, #tpu.memory_space<vmem>>, %arg8: memref<18x18x64xbf16, #tpu.memory_space<vmem>>) attributes {dimension_semantics = [#tpu.dimension_semantics<parallel>], iteration_bounds = array<i64: 2>, scalar_prefetch = 0 : i64, scratch_operands = 2 : i64, tpu.core_type = #tpu.core_type<tc>, window_params = [{transform_indices = @transform_0, window_bounds = array<i64: 1, 16, 16, 64>}, {pipeline_mode = #tpu.pipeline_mode<synchronous>, transform_indices = @transform_1, window_bounds = array<i64: 3, 192, 64>}, {pipeline_mode = #tpu.pipeline_mode<synchronous>, transform_indices = @transform_2, window_bounds = array<i64: 1, 64>}, {pipeline_mode = #tpu.pipeline_mode<synchronous>, transform_indices = @transform_3, window_bounds = array<i64: 3, 192, 64>}, {pipeline_mode = #tpu.pipeline_mode<synchronous>, transform_indices = @transform_4, window_bounds = array<i64: 1, 64>}, {transform_indices = @transform_5, window_bounds = array<i64: 1, 16, 16, 64>}]} {
    %cst = arith.constant 0.000000e+00 : bf16
    %0 = vector.broadcast %cst : bf16 to vector<1x18x64xbf16>
    %cst_0 = arith.constant 0.000000e+00 : bf16
    %1 = vector.broadcast %cst_0 : bf16 to vector<16x1x64xbf16>
    %c0 = arith.constant 0 : index
    %c0_1 = arith.constant 0 : index
    %c0_2 = arith.constant 0 : index
    %2 = vector.load %arg7[%c0, %c0_1, %c0_2] : memref<18x18x64xbf16, #tpu.memory_space<vmem>>, vector<1x18x64xbf16>
    tpu.vector_store %arg7[%c0, %c0_1, %c0_2], %0 {strides = array<i32>} : memref<18x18x64xbf16, #tpu.memory_space<vmem>>, vector<1x18x64xbf16>,
    %c17 = arith.constant 17 : index
    %c0_3 = arith.constant 0 : index
    %c0_4 = arith.constant 0 : index
    %3 = vector.load %arg7[%c17, %c0_3, %c0_4] : memref<18x18x64xbf16, #tpu.memory_space<vmem>>, vector<1x18x64xbf16>
    tpu.vector_store %arg7[%c17, %c0_3, %c0_4], %0 {strides = array<i32>} : memref<18x18x64xbf16, #tpu.memory_space<vmem>>, vector<1x18x64xbf16>,
    %c1 = arith.constant 1 : index
    %c0_5 = arith.constant 0 : index
    %c0_6 = arith.constant 0 : index
    %4 = vector.load %arg7[%c1, %c0_5, %c0_6] : memref<18x18x64xbf16, #tpu.memory_space<vmem>>, vector<16x1x64xbf16>
    tpu.vector_store %arg7[%c1, %c0_5, %c0_6], %1 {strides = array<i32>} : memref<18x18x64xbf16, #tpu.memory_space<vmem>>, vector<16x1x64xbf16>,
    %c1_7 = arith.constant 1 : index
    %c17_8 = arith.constant 17 : index
    %c0_9 = arith.constant 0 : index
    %5 = vector.load %arg7[%c1_7, %c17_8, %c0_9] : memref<18x18x64xbf16, #tpu.memory_space<vmem>>, vector<16x1x64xbf16>
    tpu.vector_store %arg7[%c1_7, %c17_8, %c0_9], %1 {strides = array<i32>} : memref<18x18x64xbf16, #tpu.memory_space<vmem>>, vector<16x1x64xbf16>,
    %cst_10 = arith.constant 0.000000e+00 : bf16
    %6 = vector.broadcast %cst_10 : bf16 to vector<1x18x64xbf16>
    %cst_11 = arith.constant 0.000000e+00 : bf16
    %7 = vector.broadcast %cst_11 : bf16 to vector<16x1x64xbf16>
    %c0_12 = arith.constant 0 : index
    %c0_13 = arith.constant 0 : index
    %c0_14 = arith.constant 0 : index
    %8 = vector.load %arg8[%c0_12, %c0_13, %c0_14] : memref<18x18x64xbf16, #tpu.memory_space<vmem>>, vector<1x18x64xbf16>
    tpu.vector_store %arg8[%c0_12, %c0_13, %c0_14], %6 {strides = array<i32>} : memref<18x18x64xbf16, #tpu.memory_space<vmem>>, vector<1x18x64xbf16>,
    %c17_15 = arith.constant 17 : index
    %c0_16 = arith.constant 0 : index
    %c0_17 = arith.constant 0 : index
    %9 = vector.load %arg8[%c17_15, %c0_16, %c0_17] : memref<18x18x64xbf16, #tpu.memory_space<vmem>>, vector<1x18x64xbf16>
    tpu.vector_store %arg8[%c17_15, %c0_16, %c0_17], %6 {strides = array<i32>} : memref<18x18x64xbf16, #tpu.memory_space<vmem>>, vector<1x18x64xbf16>,
    %c1_18 = arith.constant 1 : index
    %c0_19 = arith.constant 0 : index
    %c0_20 = arith.constant 0 : index
    %10 = vector.load %arg8[%c1_18, %c0_19, %c0_20] : memref<18x18x64xbf16, #tpu.memory_space<vmem>>, vector<16x1x64xbf16>
    tpu.vector_store %arg8[%c1_18, %c0_19, %c0_20], %7 {strides = array<i32>} : memref<18x18x64xbf16, #tpu.memory_space<vmem>>, vector<16x1x64xbf16>,
    %c1_21 = arith.constant 1 : index
    %c17_22 = arith.constant 17 : index
    %c0_23 = arith.constant 0 : index
    %11 = vector.load %arg8[%c1_21, %c17_22, %c0_23] : memref<18x18x64xbf16, #tpu.memory_space<vmem>>, vector<16x1x64xbf16>
    tpu.vector_store %arg8[%c1_21, %c17_22, %c0_23], %7 {strides = array<i32>} : memref<18x18x64xbf16, #tpu.memory_space<vmem>>, vector<16x1x64xbf16>,
    %c0_24 = arith.constant 0 : index
    %c0_25 = arith.constant 0 : index
    %c0_26 = arith.constant 0 : index
    %c0_27 = arith.constant 0 : index
    %12 = vector.load %arg1[%c0_24, %c0_25, %c0_26, %c0_27] : memref<1x16x16x64xbf16, #tpu.memory_space<vmem>>, vector<1x16x16x64xbf16>
    %13 = vector.shape_cast %12 : vector<1x16x16x64xbf16> to vector<16x16x64xbf16>
    %c1_28 = arith.constant 1 : index
    %c1_29 = arith.constant 1 : index
    %c0_30 = arith.constant 0 : index
    %14 = vector.load %arg7[%c1_28, %c1_29, %c0_30] : memref<18x18x64xbf16, #tpu.memory_space<vmem>>, vector<16x16x64xbf16>
    tpu.vector_store %arg7[%c1_28, %c1_29, %c0_30], %13 {strides = array<i32>} : memref<18x18x64xbf16, #tpu.memory_space<vmem>>, vector<16x16x64xbf16>,
    %c0_31 = arith.constant 0 : index
    %c0_32 = arith.constant 0 : index
    %15 = vector.load %arg3[%c0_31, %c0_32] : memref<1x64xf32, #tpu.memory_space<vmem>>, vector<1x64xf32>
    %16 = vector.shape_cast %15 : vector<1x64xf32> to vector<64xf32>
    %17 = vector.shape_cast %16 : vector<64xf32> to vector<1x1x64xf32>
    %18 = vector.shape_cast %17 : vector<1x1x64xf32> to vector<1x1x64xf32>
    %19 = vector.broadcast %18 : vector<1x1x64xf32> to vector<16x16x64xf32>
    %c0_33 = arith.constant 0 : index
    %c0_34 = arith.constant 0 : index
    %c0_35 = arith.constant 0 : index
    %20 = vector.load %arg7[%c0_33, %c0_34, %c0_35] : memref<18x18x64xbf16, #tpu.memory_space<vmem>>, vector<16x16x64xbf16>
    %c0_36 = arith.constant 0 : index
    %c1_37 = arith.constant 1 : index
    %c0_38 = arith.constant 0 : index
    %21 = vector.load %arg7[%c0_36, %c1_37, %c0_38] : memref<18x18x64xbf16, #tpu.memory_space<vmem>>, vector<16x16x64xbf16>
    %c0_39 = arith.constant 0 : index
    %c2 = arith.constant 2 : index
    %c0_40 = arith.constant 0 : index
    %22 = vector.load %arg7[%c0_39, %c2, %c0_40] : memref<18x18x64xbf16, #tpu.memory_space<vmem>>, vector<16x16x64xbf16>
    %23 = tpu.concatenate %20, %21, %22 in 2 : vector<16x16x64xbf16>, vector<16x16x64xbf16>, vector<16x16x64xbf16> -> vector<16x16x192xbf16>
    %c0_41 = arith.constant 0 : index
    %c0_42 = arith.constant 0 : index
    %c0_43 = arith.constant 0 : index
    %24 = vector.load %arg2[%c0_41, %c0_42, %c0_43] : memref<3x192x64xbf16, #tpu.memory_space<vmem>>, vector<1x192x64xbf16>
    %25 = vector.shape_cast %24 : vector<1x192x64xbf16> to vector<192x64xbf16>
    "tpu.trace_start"() <{level = 10 : i32, message = "hwk,ko->hwo"}> : () -> ()
    %cst_44 = arith.constant dense<0.000000e+00> : vector<16x16x64xf32>
    %26 = tpu.matmul %23, %25, %cst_44 {dimension_numbers = #tpu.dot_dimension_numbers<[2], [0], [0, 1], [1], [0, 0, 0, 1, 1, 1], [], []>} : vector<16x16x192xbf16>, vector<192x64xbf16>, vector<16x16x64xf32> -> vector<16x16x64xf32>
    "tpu.trace_stop"() : () -> ()
    %27 = arith.addf %19, %26 : vector<16x16x64xf32>
    %c1_45 = arith.constant 1 : index
    %c0_46 = arith.constant 0 : index
    %c0_47 = arith.constant 0 : index
    %28 = vector.load %arg7[%c1_45, %c0_46, %c0_47] : memref<18x18x64xbf16, #tpu.memory_space<vmem>>, vector<16x16x64xbf16>
    %c1_48 = arith.constant 1 : index
    %c1_49 = arith.constant 1 : index
    %c0_50 = arith.constant 0 : index
    %29 = vector.load %arg7[%c1_48, %c1_49, %c0_50] : memref<18x18x64xbf16, #tpu.memory_space<vmem>>, vector<16x16x64xbf16>
    %c1_51 = arith.constant 1 : index
    %c2_52 = arith.constant 2 : index
    %c0_53 = arith.constant 0 : index
    %30 = vector.load %arg7[%c1_51, %c2_52, %c0_53] : memref<18x18x64xbf16, #tpu.memory_space<vmem>>, vector<16x16x64xbf16>
    %31 = tpu.concatenate %28, %29, %30 in 2 : vector<16x16x64xbf16>, vector<16x16x64xbf16>, vector<16x16x64xbf16> -> vector<16x16x192xbf16>
    %c1_54 = arith.constant 1 : index
    %c0_55 = arith.constant 0 : index
    %c0_56 = arith.constant 0 : index
    %32 = vector.load %arg2[%c1_54, %c0_55, %c0_56] : memref<3x192x64xbf16, #tpu.memory_space<vmem>>, vector<1x192x64xbf16>
    %33 = vector.shape_cast %32 : vector<1x192x64xbf16> to vector<192x64xbf16>
    "tpu.trace_start"() <{level = 10 : i32, message = "hwk,ko->hwo"}> : () -> ()
    %cst_57 = arith.constant dense<0.000000e+00> : vector<16x16x64xf32>
    %34 = tpu.matmul %31, %33, %cst_57 {dimension_numbers = #tpu.dot_dimension_numbers<[2], [0], [0, 1], [1], [0, 0, 0, 1, 1, 1], [], []>} : vector<16x16x192xbf16>, vector<192x64xbf16>, vector<16x16x64xf32> -> vector<16x16x64xf32>
    "tpu.trace_stop"() : () -> ()
    %35 = arith.addf %27, %34 : vector<16x16x64xf32>
    %c2_58 = arith.constant 2 : index
    %c0_59 = arith.constant 0 : index
    %c0_60 = arith.constant 0 : index
    %36 = vector.load %arg7[%c2_58, %c0_59, %c0_60] : memref<18x18x64xbf16, #tpu.memory_space<vmem>>, vector<16x16x64xbf16>
    %c2_61 = arith.constant 2 : index
    %c1_62 = arith.constant 1 : index
    %c0_63 = arith.constant 0 : index
    %37 = vector.load %arg7[%c2_61, %c1_62, %c0_63] : memref<18x18x64xbf16, #tpu.memory_space<vmem>>, vector<16x16x64xbf16>
    %c2_64 = arith.constant 2 : index
    %c2_65 = arith.constant 2 : index
    %c0_66 = arith.constant 0 : index
    %38 = vector.load %arg7[%c2_64, %c2_65, %c0_66] : memref<18x18x64xbf16, #tpu.memory_space<vmem>>, vector<16x16x64xbf16>
    %39 = tpu.concatenate %36, %37, %38 in 2 : vector<16x16x64xbf16>, vector<16x16x64xbf16>, vector<16x16x64xbf16> -> vector<16x16x192xbf16>
    %c2_67 = arith.constant 2 : index
    %c0_68 = arith.constant 0 : index
    %c0_69 = arith.constant 0 : index
    %40 = vector.load %arg2[%c2_67, %c0_68, %c0_69] : memref<3x192x64xbf16, #tpu.memory_space<vmem>>, vector<1x192x64xbf16>
    %41 = vector.shape_cast %40 : vector<1x192x64xbf16> to vector<192x64xbf16>
    "tpu.trace_start"() <{level = 10 : i32, message = "hwk,ko->hwo"}> : () -> ()
    %cst_70 = arith.constant dense<0.000000e+00> : vector<16x16x64xf32>
    %42 = tpu.matmul %39, %41, %cst_70 {dimension_numbers = #tpu.dot_dimension_numbers<[2], [0], [0, 1], [1], [0, 0, 0, 1, 1, 1], [], []>} : vector<16x16x192xbf16>, vector<192x64xbf16>, vector<16x16x64xf32> -> vector<16x16x64xf32>
    "tpu.trace_stop"() : () -> ()
    %43 = arith.addf %35, %42 : vector<16x16x64xf32>
    %cst_71 = arith.constant 0.000000e+00 : f32
    %44 = vector.broadcast %cst_71 : f32 to vector<16x16x64xf32>
    %45 = arith.maximumf %43, %44 : vector<16x16x64xf32>
    %46 = arith.truncf %45 : vector<16x16x64xf32> to vector<16x16x64xbf16>
    %c1_72 = arith.constant 1 : index
    %c1_73 = arith.constant 1 : index
    %c0_74 = arith.constant 0 : index
    %47 = vector.load %arg8[%c1_72, %c1_73, %c0_74] : memref<18x18x64xbf16, #tpu.memory_space<vmem>>, vector<16x16x64xbf16>
    tpu.vector_store %arg8[%c1_72, %c1_73, %c0_74], %46 {strides = array<i32>} : memref<18x18x64xbf16, #tpu.memory_space<vmem>>, vector<16x16x64xbf16>,
    %c0_75 = arith.constant 0 : index
    %c0_76 = arith.constant 0 : index
    %48 = vector.load %arg5[%c0_75, %c0_76] : memref<1x64xf32, #tpu.memory_space<vmem>>, vector<1x64xf32>
    %49 = vector.shape_cast %48 : vector<1x64xf32> to vector<64xf32>
    %50 = vector.shape_cast %49 : vector<64xf32> to vector<1x1x64xf32>
    %51 = vector.shape_cast %50 : vector<1x1x64xf32> to vector<1x1x64xf32>
    %52 = vector.broadcast %51 : vector<1x1x64xf32> to vector<16x16x64xf32>
    %c0_77 = arith.constant 0 : index
    %c0_78 = arith.constant 0 : index
    %c0_79 = arith.constant 0 : index
    %53 = vector.load %arg8[%c0_77, %c0_78, %c0_79] : memref<18x18x64xbf16, #tpu.memory_space<vmem>>, vector<16x16x64xbf16>
    %c0_80 = arith.constant 0 : index
    %c1_81 = arith.constant 1 : index
    %c0_82 = arith.constant 0 : index
    %54 = vector.load %arg8[%c0_80, %c1_81, %c0_82] : memref<18x18x64xbf16, #tpu.memory_space<vmem>>, vector<16x16x64xbf16>
    %c0_83 = arith.constant 0 : index
    %c2_84 = arith.constant 2 : index
    %c0_85 = arith.constant 0 : index
    %55 = vector.load %arg8[%c0_83, %c2_84, %c0_85] : memref<18x18x64xbf16, #tpu.memory_space<vmem>>, vector<16x16x64xbf16>
    %56 = tpu.concatenate %53, %54, %55 in 2 : vector<16x16x64xbf16>, vector<16x16x64xbf16>, vector<16x16x64xbf16> -> vector<16x16x192xbf16>
    %c0_86 = arith.constant 0 : index
    %c0_87 = arith.constant 0 : index
    %c0_88 = arith.constant 0 : index
    %57 = vector.load %arg4[%c0_86, %c0_87, %c0_88] : memref<3x192x64xbf16, #tpu.memory_space<vmem>>, vector<1x192x64xbf16>
    %58 = vector.shape_cast %57 : vector<1x192x64xbf16> to vector<192x64xbf16>
    "tpu.trace_start"() <{level = 10 : i32, message = "hwk,ko->hwo"}> : () -> ()
    %cst_89 = arith.constant dense<0.000000e+00> : vector<16x16x64xf32>
    %59 = tpu.matmul %56, %58, %cst_89 {dimension_numbers = #tpu.dot_dimension_numbers<[2], [0], [0, 1], [1], [0, 0, 0, 1, 1, 1], [], []>} : vector<16x16x192xbf16>, vector<192x64xbf16>, vector<16x16x64xf32> -> vector<16x16x64xf32>
    "tpu.trace_stop"() : () -> ()
    %60 = arith.addf %52, %59 : vector<16x16x64xf32>
    %c1_90 = arith.constant 1 : index
    %c0_91 = arith.constant 0 : index
    %c0_92 = arith.constant 0 : index
    %61 = vector.load %arg8[%c1_90, %c0_91, %c0_92] : memref<18x18x64xbf16, #tpu.memory_space<vmem>>, vector<16x16x64xbf16>
    %c1_93 = arith.constant 1 : index
    %c1_94 = arith.constant 1 : index
    %c0_95 = arith.constant 0 : index
    %62 = vector.load %arg8[%c1_93, %c1_94, %c0_95] : memref<18x18x64xbf16, #tpu.memory_space<vmem>>, vector<16x16x64xbf16>
    %c1_96 = arith.constant 1 : index
    %c2_97 = arith.constant 2 : index
    %c0_98 = arith.constant 0 : index
    %63 = vector.load %arg8[%c1_96, %c2_97, %c0_98] : memref<18x18x64xbf16, #tpu.memory_space<vmem>>, vector<16x16x64xbf16>
    %64 = tpu.concatenate %61, %62, %63 in 2 : vector<16x16x64xbf16>, vector<16x16x64xbf16>, vector<16x16x64xbf16> -> vector<16x16x192xbf16>
    %c1_99 = arith.constant 1 : index
    %c0_100 = arith.constant 0 : index
    %c0_101 = arith.constant 0 : index
    %65 = vector.load %arg4[%c1_99, %c0_100, %c0_101] : memref<3x192x64xbf16, #tpu.memory_space<vmem>>, vector<1x192x64xbf16>
    %66 = vector.shape_cast %65 : vector<1x192x64xbf16> to vector<192x64xbf16>
    "tpu.trace_start"() <{level = 10 : i32, message = "hwk,ko->hwo"}> : () -> ()
    %cst_102 = arith.constant dense<0.000000e+00> : vector<16x16x64xf32>
    %67 = tpu.matmul %64, %66, %cst_102 {dimension_numbers = #tpu.dot_dimension_numbers<[2], [0], [0, 1], [1], [0, 0, 0, 1, 1, 1], [], []>} : vector<16x16x192xbf16>, vector<192x64xbf16>, vector<16x16x64xf32> -> vector<16x16x64xf32>
    "tpu.trace_stop"() : () -> ()
    %68 = arith.addf %60, %67 : vector<16x16x64xf32>
    %c2_103 = arith.constant 2 : index
    %c0_104 = arith.constant 0 : index
    %c0_105 = arith.constant 0 : index
    %69 = vector.load %arg8[%c2_103, %c0_104, %c0_105] : memref<18x18x64xbf16, #tpu.memory_space<vmem>>, vector<16x16x64xbf16>
    %c2_106 = arith.constant 2 : index
    %c1_107 = arith.constant 1 : index
    %c0_108 = arith.constant 0 : index
    %70 = vector.load %arg8[%c2_106, %c1_107, %c0_108] : memref<18x18x64xbf16, #tpu.memory_space<vmem>>, vector<16x16x64xbf16>
    %c2_109 = arith.constant 2 : index
    %c2_110 = arith.constant 2 : index
    %c0_111 = arith.constant 0 : index
    %71 = vector.load %arg8[%c2_109, %c2_110, %c0_111] : memref<18x18x64xbf16, #tpu.memory_space<vmem>>, vector<16x16x64xbf16>
    %72 = tpu.concatenate %69, %70, %71 in 2 : vector<16x16x64xbf16>, vector<16x16x64xbf16>, vector<16x16x64xbf16> -> vector<16x16x192xbf16>
    %c2_112 = arith.constant 2 : index
    %c0_113 = arith.constant 0 : index
    %c0_114 = arith.constant 0 : index
    %73 = vector.load %arg4[%c2_112, %c0_113, %c0_114] : memref<3x192x64xbf16, #tpu.memory_space<vmem>>, vector<1x192x64xbf16>
    %74 = vector.shape_cast %73 : vector<1x192x64xbf16> to vector<192x64xbf16>
    "tpu.trace_start"() <{level = 10 : i32, message = "hwk,ko->hwo"}> : () -> ()
    %cst_115 = arith.constant dense<0.000000e+00> : vector<16x16x64xf32>
    %75 = tpu.matmul %72, %74, %cst_115 {dimension_numbers = #tpu.dot_dimension_numbers<[2], [0], [0, 1], [1], [0, 0, 0, 1, 1, 1], [], []>} : vector<16x16x192xbf16>, vector<192x64xbf16>, vector<16x16x64xf32> -> vector<16x16x64xf32>
    "tpu.trace_stop"() : () -> ()
    %76 = arith.addf %68, %75 : vector<16x16x64xf32>
    %c0_116 = arith.constant 0 : index
    %c0_117 = arith.constant 0 : index
    %c0_118 = arith.constant 0 : index
    %c0_119 = arith.constant 0 : index
    %77 = vector.load %arg1[%c0_116, %c0_117, %c0_118, %c0_119] : memref<1x16x16x64xbf16, #tpu.memory_space<vmem>>, vector<1x16x16x64xbf16>
    %78 = vector.shape_cast %77 : vector<1x16x16x64xbf16> to vector<16x16x64xbf16>
    %79 = arith.extf %78 : vector<16x16x64xbf16> to vector<16x16x64xf32>
    %80 = arith.addf %76, %79 : vector<16x16x64xf32>
    %c0_120 = arith.constant 0 : index
    %c0_121 = arith.constant 0 : index
    %c0_122 = arith.constant 0 : index
    %c0_123 = arith.constant 0 : index
    %81 = vector.load %arg6[%c0_120, %c0_121, %c0_122, %c0_123] : memref<1x16x16x64xf32, #tpu.memory_space<vmem>>, vector<1x16x16x64xf32>
    %82 = vector.shape_cast %81 : vector<1x16x16x64xf32> to vector<16x16x64xf32>
    %83 = vector.shape_cast %80 : vector<16x16x64xf32> to vector<1x16x16x64xf32>
    tpu.vector_store %arg6[%c0_120, %c0_121, %c0_122, %c0_123], %83 {strides = array<i32>} : memref<1x16x16x64xf32, #tpu.memory_space<vmem>>, vector<1x16x16x64xf32>,
    return
  }
  func.func @transform_0(%arg0: i32) -> (i32, i32, i32, i32) {
    %c0_i32 = arith.constant 0 : i32
    %c0_i32_0 = arith.constant 0 : i32
    %c0_i32_1 = arith.constant 0 : i32
    %c0_i32_2 = arith.constant 0 : i32
    return %arg0, %c0_i32, %c0_i32_0, %c0_i32_1 : i32, i32, i32, i32
  }
  func.func @transform_1(%arg0: i32) -> (i32, i32, i32) {
    %c0_i32 = arith.constant 0 : i32
    %c0_i32_0 = arith.constant 0 : i32
    %c0_i32_1 = arith.constant 0 : i32
    %c0_i32_2 = arith.constant 0 : i32
    return %c0_i32, %c0_i32_0, %c0_i32_1 : i32, i32, i32
  }
  func.func @transform_2(%arg0: i32) -> (i32, i32) {
    %c0_i32 = arith.constant 0 : i32
    %c0_i32_0 = arith.constant 0 : i32
    %c0_i32_1 = arith.constant 0 : i32
    return %c0_i32, %c0_i32_0 : i32, i32
  }
  func.func @transform_3(%arg0: i32) -> (i32, i32, i32) {
    %c0_i32 = arith.constant 0 : i32
    %c0_i32_0 = arith.constant 0 : i32
    %c0_i32_1 = arith.constant 0 : i32
    %c0_i32_2 = arith.constant 0 : i32
    return %c0_i32, %c0_i32_0, %c0_i32_1 : i32, i32, i32
  }
  func.func @transform_4(%arg0: i32) -> (i32, i32) {
    %c0_i32 = arith.constant 0 : i32
    %c0_i32_0 = arith.constant 0 : i32
    %c0_i32_1 = arith.constant 0 : i32
    return %c0_i32, %c0_i32_0 : i32, i32
  }
  func.func @transform_5(%arg0: i32) -> (i32, i32, i32, i32) {
    %c0_i32 = arith.constant 0 : i32
    %c0_i32_0 = arith.constant 0 : i32
    %c0_i32_1 = arith.constant 0 : i32
    %c0_i32_2 = arith.constant 0 : i32
    return %arg0, %c0_i32, %c0_i32_0, %c0_i32_1 : i32, i32, i32, i32
  }
}

</mosaic_0001>

<llo_original>
// kernel: resblock_db.1
$region0: #{resblock_db.1}
  #allocation0 [shape = 'u32[]', space=smem, size = 0x4, offset = 0x4, fixed_abs, tag = 'smem constant byte address 0x4 - core index']
  #allocation1 [shape = 'u32[144,128]{1,0:T(1,128)}', space=vmem, size = 0x12000, scoped, tag = 'internal scratch']
  #allocation2 [shape = 'bf16[18,18,64]{2,1,0:T(8,128)(2,1)}', space=vmem, size = 0x1b000, scoped, tag = 'scratch operand']
  #allocation3 [shape = 'bf16[18,18,64]{2,1,0:T(8,128)(2,1)}', space=vmem, size = 0x1b000, scoped, tag = 'scratch operand']
  %s0 = inlined_call_operand.vmem [shape: bf16[2,16,16,64], index: 0, kind: input, shape index: {}]
  %s1 = inlined_call_operand.vmem [shape: bf16[3,192,64], index: 1, kind: input, shape index: {}]
  %s2 = inlined_call_operand.vmem [shape: f32[1,64], index: 2, kind: input, shape index: {}]
  %s3 = inlined_call_operand.vmem [shape: bf16[3,192,64], index: 3, kind: input, shape index: {}]
  %s4 = inlined_call_operand.vmem [shape: f32[1,64], index: 4, kind: input, shape index: {}]
  %s5 = inlined_call_operand.hbm [shape: f32[2,16,16,64], index: 5, kind: output, shape index: {}]
  %s6 = sld [smem:[#allocation0]]
  $region53: #{resblock_db.1} parent=0
    _
  %s8 = ssub.s32 1, %s6
  %s9 = scalar_select 0, %s8, %s6
  $region1: #{resblock_db.1} parent=0
    #allocation4 [shape = 'u8[262144]{0}', space=vmem, size = 0x40000, scoped, tag = 'output window, operand 0']
    #allocation5 [shape = 's32[2]{0}', space=sflag, size = 0x8, scoped, tag = 'scoped memory for resblock_db.1']
    %10 = vsyncpa [#allocation5], 0
    %s11 = scalar_lea.sflag [#allocation5], 1
    %12 = vsyncpa %s11, 0
    loop: start=0, step=1, limit=4
    $region2: #{resblock_db.1} parent=1 // loop_pre_header
      _
    $region3: #{resblock_db.1} parent=1 // loop_header
      %s14 = sphi 0, %s18
      %p15 = scmp.ge.s32.totalorder %s14, 4
      %s24 = sphi 0, %s26
      %s27 = sphi 0, %s24
      %s28 = sphi 0, %s27
      %s44 = sphi 0, %s28
      %s48 = sphi 0, %s48
      %s50 = sphi 0, %s48
      %s51 = sphi 0, %s50
      %s65 = sphi 0, %s51
      %s69 = sphi 0, %s69
      %s71 = sphi 0, %s69
      %s72 = sphi 0, %s71
      %s86 = sphi 0, %s72
      %s90 = sphi 0, %s90
      %s92 = sphi 0, %s90
      %s93 = sphi 0, %s92
      %s107 = sphi 0, %s93
      %s111 = sphi 0, %s111
      %s113 = sphi 0, %s111
      %s114 = sphi 0, %s113
      %s128 = sphi 0, %s114
      %s134 = sphi 0, %s136
      %s137 = sphi 0, %s134
      %s138 = sphi 0, %s137
      %s154 = sphi 0, %s138
    $region4: #{resblock_db.1} parent=1 // loop_header_branch
      %17 = sbr.rel (%p15) target = $region8
    $region5: #{resblock_db.1} parent=1 // loop_body
      %s19 = ssub.s32 %s14, 1
      %s20 = ssub.s32 %s14, 2
      %s21 = sadd.s32 %s14, 1
      %s22 = ssub.s32 %s14, %s21
      %p23 = scmp.eq.s32.totalorder %s22, 0
      %s25 = sadd.s32 %s24, 1
      %s26 = scalar_select %p23, %s24, %s25
      %p29 = pneg %p23
      %p30 = scmp.eq.s32.totalorder %s14, 1
      %p31 = por %p29, %p30
      %p32 = scmp.ne.s32.totalorder %s24, %s27
      %p33 = scmp.eq.s32.totalorder %s14, 0
      %p34 = por %p32, %p33
      %p35 = scmp.ne.s32.totalorder %s24, %s27
      %p36 = scmp.eq.s32.totalorder %s19, 1
      %p37 = por %p35, %p36
      %p38 = scmp.ne.s32.totalorder %s27, %s28
      %p39 = scmp.eq.s32.totalorder %s19, 0
      %p40 = por %p38, %p39
      %p41 = scmp.ne.s32.totalorder %s27, %s28
      %p42 = scmp.eq.s32.totalorder %s20, 1
      %p43 = por %p41, %p42
      %p45 = scmp.ne.s32.totalorder %s28, %s44
      %p46 = scmp.eq.s32.totalorder %s20, 0
      %p47 = por %p45, %p46
      %s49 = sadd.s32 %s48, 1
      %p52 = scmp.eq.s32.totalorder %s14, 1
      %p53 = scmp.ne.s32.totalorder %s48, %s50
      %p54 = scmp.eq.s32.totalorder %s14, 0
      %p55 = por %p53, %p54
      %p56 = scmp.ne.s32.totalorder %s48, %s50
      %p57 = scmp.eq.s32.totalorder %s19, 1
      %p58 = por %p56, %p57
      %p59 = scmp.ne.s32.totalorder %s50, %s51
      %p60 = scmp.eq.s32.totalorder %s19, 0
      %p61 = por %p59, %p60
      %p62 = scmp.ne.s32.totalorder %s50, %s51
      %p63 = scmp.eq.s32.totalorder %s20, 1
      %p64 = por %p62, %p63
      %p66 = scmp.ne.s32.totalorder %s51, %s65
      %p67 = scmp.eq.s32.totalorder %s20, 0
      %p68 = por %p66, %p67
      %s70 = sadd.s32 %s69, 1
      %p73 = scmp.eq.s32.totalorder %s14, 1
      %p74 = scmp.ne.s32.totalorder %s69, %s71
      %p75 = scmp.eq.s32.totalorder %s14, 0
      %p76 = por %p74, %p75
      %p77 = scmp.ne.s32.totalorder %s69, %s71
      %p78 = scmp.eq.s32.totalorder %s19, 1
      %p79 = por %p77, %p78
      %p80 = scmp.ne.s32.totalorder %s71, %s72
      %p81 = scmp.eq.s32.totalorder %s19, 0
      %p82 = por %p80, %p81
      %p83 = scmp.ne.s32.totalorder %s71, %s72
      %p84 = scmp.eq.s32.totalorder %s20, 1
      %p85 = por %p83, %p84
      %p87 = scmp.ne.s32.totalorder %s72, %s86
      %p88 = scmp.eq.s32.totalorder %s20, 0
      %p89 = por %p87, %p88
      %s91 = sadd.s32 %s90, 1
      %p94 = scmp.eq.s32.totalorder %s14, 1
      %p95 = scmp.ne.s32.totalorder %s90, %s92
      %p96 = scmp.eq.s32.totalorder %s14, 0
      %p97 = por %p95, %p96
      %p98 = scmp.ne.s32.totalorder %s90, %s92
      %p99 = scmp.eq.s32.totalorder %s19, 1
      %p100 = por %p98, %p99
      %p101 = scmp.ne.s32.totalorder %s92, %s93
      %p102 = scmp.eq.s32.totalorder %s19, 0
      %p103 = por %p101, %p102
      %p104 = scmp.ne.s32.totalorder %s92, %s93
      %p105 = scmp.eq.s32.totalorder %s20, 1
      %p106 = por %p104, %p105
      %p108 = scmp.ne.s32.totalorder %s93, %s107
      %p109 = scmp.eq.s32.totalorder %s20, 0
      %p110 = por %p108, %p109
      %s112 = sadd.s32 %s111, 1
      %p115 = scmp.eq.s32.totalorder %s14, 1
      %p116 = scmp.ne.s32.totalorder %s111, %s113
      %p117 = scmp.eq.s32.totalorder %s14, 0
      %p118 = por %p116, %p117
      %p119 = scmp.ne.s32.totalorder %s111, %s113
      %p120 = scmp.eq.s32.totalorder %s19, 1
      %p121 = por %p119, %p120
      %p122 = scmp.ne.s32.totalorder %s113, %s114
      %p123 = scmp.eq.s32.totalorder %s19, 0
      %p124 = por %p122, %p123
      %p125 = scmp.ne.s32.totalorder %s113, %s114
      %p126 = scmp.eq.s32.totalorder %s20, 1
      %p127 = por %p125, %p126
      %p129 = scmp.ne.s32.totalorder %s114, %s128
      %p130 = scmp.eq.s32.totalorder %s20, 0
      %p131 = por %p129, %p130
      %s132 = ssub.s32 %s14, %s21
      %p133 = scmp.eq.s32.totalorder %s132, 0
      %s135 = sadd.s32 %s134, 1
      %s136 = scalar_select %p133, %s134, %s135
      %p139 = pneg %p133
      %p140 = scmp.eq.s32.totalorder %s14, 1
      %p141 = por %p139, %p140
      %p142 = scmp.ne.s32.totalorder %s134, %s137
      %p143 = scmp.eq.s32.totalorder %s14, 0
      %p144 = por %p142, %p143
      %p145 = scmp.ne.s32.totalorder %s134, %s137
      %p146 = scmp.eq.s32.totalorder %s19, 1
      %p147 = por %p145, %p146
      %p148 = scmp.ne.s32.totalorder %s137, %s138
      %p149 = scmp.eq.s32.totalorder %s19, 0
      %p150 = por %p148, %p149
      %p151 = scmp.ne.s32.totalorder %s137, %s138
      %p152 = scmp.eq.s32.totalorder %s20, 1
      %p153 = por %p151, %p152
      %p155 = scmp.ne.s32.totalorder %s138, %s154
      %p156 = scmp.eq.s32.totalorder %s20, 0
      %p157 = por %p155, %p156
      %p158 = scmp.le.s32.totalorder 1, %s14
      %p159 = scmp.lt.s32.totalorder %s14, 3
      %p160 = pnand %p158, %p159
      %p161 = pneg %p160
      // Predicated region
      $region9: #{resblock_db.1} parent=5 // pred_check
        _
      $region10: #{resblock_db.1} parent=5 // pred_check_branch
        %163 = sbr.rel (%p160) target = $region12
      $region11: #{resblock_db.1} parent=5 // pred_region
        %s164 = ssub.s32 %s14, 1
        // Predicated region
        $region13: #{resblock_db.1} parent=11 // pred_check
          %p165 = pneg %p61
        $region14: #{resblock_db.1} parent=11 // pred_check_branch
          %167 = sbr.rel (%p165) target = $region16
        $region15: #{resblock_db.1} parent=11 // pred_region
          _
        $region16: #{resblock_db.1} parent=11 // pred_fallthru
          _
        // Predicated region
        $region17: #{resblock_db.1} parent=11 // pred_check
          %p168 = pneg %p82
        $region18: #{resblock_db.1} parent=11 // pred_check_branch
          %170 = sbr.rel (%p168) target = $region20
        $region19: #{resblock_db.1} parent=11 // pred_region
          _
        $region20: #{resblock_db.1} parent=11 // pred_fallthru
          _
        // Predicated region
        $region21: #{resblock_db.1} parent=11 // pred_check
          %p171 = pneg %p103
        $region22: #{resblock_db.1} parent=11 // pred_check_branch
          %173 = sbr.rel (%p171) target = $region24
        $region23: #{resblock_db.1} parent=11 // pred_region
          _
        $region24: #{resblock_db.1} parent=11 // pred_fallthru
          _
        // Predicated region
        $region25: #{resblock_db.1} parent=11 // pred_check
          %p174 = pneg %p124
        $region26: #{resblock_db.1} parent=11 // pred_check_branch
          %176 = sbr.rel (%p174) target = $region28
        $region27: #{resblock_db.1} parent=11 // pred_region
          _
        $region28: #{resblock_db.1} parent=11 // pred_fallthru
          _
      $region12: #{resblock_db.1} parent=5 // pred_fallthru
        _
      %p177 = scmp.lt.s32.totalorder %s14, 2
      // Predicated region
      $region29: #{resblock_db.1} parent=5 // pred_check
        %p178 = pneg %p177
      $region30: #{resblock_db.1} parent=5 // pred_check_branch
        %180 = sbr.rel (%p178) target = $region32
      $region31: #{resblock_db.1} parent=5 // pred_region
        // Predicated region
        $region33: #{resblock_db.1} parent=31 // pred_check
          %p181 = pneg %p34
        $region34: #{resblock_db.1} parent=31 // pred_check_branch
          %183 = sbr.rel (%p181) target = $region36
        $region35: #{resblock_db.1} parent=31 // pred_region
          %p184 = scmp.lt.s32.totalorder %s14, 1
          %s185 = scalar_select %p184, %s14, 1
          %s186 = smul.addr %s185, 32
          %s187 = smul.addr %s186, 4
          %s188 = scalar_lea.vmem %s0, %s187
        $region36: #{resblock_db.1} parent=31 // pred_fallthru
          _
      $region32: #{resblock_db.1} parent=5 // pred_fallthru
        _
      %p189 = scmp.le.s32.totalorder 1, %s14
      %p190 = scmp.lt.s32.totalorder %s14, 3
      %p191 = pnand %p189, %p190
      %p192 = pneg %p191
      // Predicated region
      $region37: #{resblock_db.1} parent=5 // pred_check
        _
      $region38: #{resblock_db.1} parent=5 // pred_check_branch
        %194 = sbr.rel (%p191) target = $region40
      $region39: #{resblock_db.1} parent=5 // pred_region
        %s195 = ssub.s32 %s14, 1
        %p196 = scmp.lt.s32.totalorder %s19, 1
        %s197 = scalar_select %p196, %s19, 1
        %s198 = smul.addr %s197, 32
        %s199 = smul.addr %s198, 4
        %s200 = scalar_lea.vmem %s0, %s199
        %p201 = pneg %p40
        %p202 = pneg %p37
        %p203 = pneg %p61
        %p204 = pneg %p58
        %p205 = pneg %p82
        %p206 = pneg %p79
        %p207 = pneg %p103
        %p208 = pneg %p100
        %p209 = pneg %p124
        %p210 = pneg %p121
        %p211 = pneg %p150
        %p212 = pneg %p147
        %s213 = sand.u32 %s137, 1
        %s214 = scalar_lea.sflag [#allocation5], %s213
        %s215 = sand.u32 %s137, 1
        %s216 = smul.addr %s215, 256
        %s217 = scalar_lea.vmem [#allocation4], %s216
        %p218 = scmp.lt.s32.totalorder %s19, 1
        %s219 = scalar_select %p218, %s19, 1
        %s220 = smul.addr %s219, 32
        %s221 = smul.addr %s220, 4
        %s222 = scalar_lea.vmem %s0, %s221
        %vm224 = vcmask 519168
        %225 = vst.msk [vmem:[#allocation2] sm:$0xf] %vm224, 0
        %226 = vst.msk [vmem:[#allocation2 + $0x4] sm:$0xf] %vm224, 0
        %vm227 = vcmask 516096
        %228 = vst.msk [vmem:[#allocation2 + $0x8] sm:$0x1] %vm227, 0
        %s229 = scalar_lea.vmem [#allocation2], 204
        %230 = vst.msk [vmem:[%s229] sm:$0xf] %vm224, 0
        %231 = vst.msk [vmem:[%s229 + $0x4] sm:$0xf] %vm224, 0
        %232 = vst.msk [vmem:[%s229 + $0x8] sm:$0x1] %vm227, 0
        %s233 = scalar_lea.vmem [#allocation2], 12
        %vm234 = vcmask 516096
        %vm235 = vsmask.f32 256
        %vm236 = vmand %vm234, %vm235
        %v237 = vld [vmem:[%s233] sm:$0x1]
        %v238 = vsel %vm236, 0, %v237
        %239 = vst [vmem:[%s233] sm:$0x1] %v238
        %v240 = vld [vmem:[%s233 + $0xc] sm:$0x1]
        %v241 = vsel %vm236, 0, %v240
        %242 = vst [vmem:[%s233 + $0xc] sm:$0x1] %v241
        %v243 = vld [vmem:[%s233 + $0x18] sm:$0x1]
        %v244 = vsel %vm236, 0, %v243
        %245 = vst [vmem:[%s233 + $0x18] sm:$0x1] %v244
        %v246 = vld [vmem:[%s233 + $0x24] sm:$0x1]
        %v247 = vsel %vm236, 0, %v246
        %248 = vst [vmem:[%s233 + $0x24] sm:$0x1] %v247
        %v249 = vld [vmem:[%s233 + $0x30] sm:$0x1]
        %v250 = vsel %vm236, 0, %v249
        %251 = vst [vmem:[%s233 + $0x30] sm:$0x1] %v250
        %v252 = vld [vmem:[%s233 + $0x3c] sm:$0x1]
        %v253 = vsel %vm236, 0, %v252
        %254 = vst [vmem:[%s233 + $0x3c] sm:$0x1] %v253
        %v255 = vld [vmem:[%s233 + $0x48] sm:$0x1]
        %v256 = vsel %vm236, 0, %v255
        %257 = vst [vmem:[%s233 + $0x48] sm:$0x1] %v256
        %v258 = vld [vmem:[%s233 + $0x54] sm:$0x1]
        %v259 = vsel %vm236, 0, %v258
        %260 = vst [vmem:[%s233 + $0x54] sm:$0x1] %v259
        %v261 = vld [vmem:[%s233 + $0x60] sm:$0x1]
        %v262 = vsel %vm236, 0, %v261
        %263 = vst [vmem:[%s233 + $0x60] sm:$0x1] %v262
        %v264 = vld [vmem:[%s233 + $0x6c] sm:$0x1]
        %v265 = vsel %vm236, 0, %v264
        %266 = vst [vmem:[%s233 + $0x6c] sm:$0x1] %v265
        %v267 = vld [vmem:[%s233 + $0x78] sm:$0x1]
        %v268 = vsel %vm236, 0, %v267
        %269 = vst [vmem:[%s233 + $0x78] sm:$0x1] %v268
        %v270 = vld [vmem:[%s233 + $0x84] sm:$0x1]
        %v271 = vsel %vm236, 0, %v270
        %272 = vst [vmem:[%s233 + $0x84] sm:$0x1] %v271
        %v273 = vld [vmem:[%s233 + $0x90] sm:$0x1]
        %v274 = vsel %vm236, 0, %v273
        %275 = vst [vmem:[%s233 + $0x90] sm:$0x1] %v274
        %v276 = vld [vmem:[%s233 + $0x9c] sm:$0x1]
        %v277 = vsel %vm236, 0, %v276
        %278 = vst [vmem:[%s233 + $0x9c] sm:$0x1] %v277
        %v279 = vld [vmem:[%s233 + $0xa8] sm:$0x1]
        %v280 = vsel %vm236, 0, %v279
        %281 = vst [vmem:[%s233 + $0xa8] sm:$0x1] %v280
        %v282 = vld [vmem:[%s233 + $0xb4] sm:$0x1]
        %v283 = vsel %vm236, 0, %v282
        %284 = vst [vmem:[%s233 + $0xb4] sm:$0x1] %v283
        %vm285 = vsmask.f32 7938
        %vm286 = vmand %vm234, %vm285
        %v287 = vld [vmem:[%s233 + $0x8] sm:$0x1]
        %v288 = vsel %vm286, 0, %v287
        %289 = vst [vmem:[%s233 + $0x8] sm:$0x1] %v288
        %v290 = vld [vmem:[%s233 + $0x14] sm:$0x1]
        %v291 = vsel %vm286, 0, %v290
        %292 = vst [vmem:[%s233 + $0x14] sm:$0x1] %v291
        %v293 = vld [vmem:[%s233 + $0x20] sm:$0x1]
        %v294 = vsel %vm286, 0, %v293
        %295 = vst [vmem:[%s233 + $0x20] sm:$0x1] %v294
        %v296 = vld [vmem:[%s233 + $0x2c] sm:$0x1]
        %v297 = vsel %vm286, 0, %v296
        %298 = vst [vmem:[%s233 + $0x2c] sm:$0x1] %v297
        %v299 = vld [vmem:[%s233 + $0x38] sm:$0x1]
        %v300 = vsel %vm286, 0, %v299
        %301 = vst [vmem:[%s233 + $0x38] sm:$0x1] %v300
        %v302 = vld [vmem:[%s233 + $0x44] sm:$0x1]
        %v303 = vsel %vm286, 0, %v302
        %304 = vst [vmem:[%s233 + $0x44] sm:$0x1] %v303
        %v305 = vld [vmem:[%s233 + $0x50] sm:$0x1]
        %v306 = vsel %vm286, 0, %v305
        %307 = vst [vmem:[%s233 + $0x50] sm:$0x1] %v306
        %v308 = vld [vmem:[%s233 + $0x5c] sm:$0x1]
        %v309 = vsel %vm286, 0, %v308
        %310 = vst [vmem:[%s233 + $0x5c] sm:$0x1] %v309
        %v311 = vld [vmem:[%s233 + $0x68] sm:$0x1]
        %v312 = vsel %vm286, 0, %v311
        %313 = vst [vmem:[%s233 + $0x68] sm:$0x1] %v312
        %v314 = vld [vmem:[%s233 + $0x74] sm:$0x1]
        %v315 = vsel %vm286, 0, %v314
        %316 = vst [vmem:[%s233 + $0x74] sm:$0x1] %v315
        %v317 = vld [vmem:[%s233 + $0x80] sm:$0x1]
        %v318 = vsel %vm286, 0, %v317
        %319 = vst [vmem:[%s233 + $0x80] sm:$0x1] %v318
        %v320 = vld [vmem:[%s233 + $0x8c] sm:$0x1]
        %v321 = vsel %vm286, 0, %v320
        %322 = vst [vmem:[%s233 + $0x8c] sm:$0x1] %v321
        %v323 = vld [vmem:[%s233 + $0x98] sm:$0x1]
        %v324 = vsel %vm286, 0, %v323
        %325 = vst [vmem:[%s233 + $0x98] sm:$0x1] %v324
        %v326 = vld [vmem:[%s233 + $0xa4] sm:$0x1]
        %v327 = vsel %vm286, 0, %v326
        %328 = vst [vmem:[%s233 + $0xa4] sm:$0x1] %v327
        %v329 = vld [vmem:[%s233 + $0xb0] sm:$0x1]
        %v330 = vsel %vm286, 0, %v329
        %331 = vst [vmem:[%s233 + $0xb0] sm:$0x1] %v330
        %v332 = vld [vmem:[%s233 + $0xbc] sm:$0x1]
        %v333 = vsel %vm286, 0, %v332
        %334 = vst [vmem:[%s233 + $0xbc] sm:$0x1] %v333
        %335 = vst.msk [vmem:[#allocation3] sm:$0xf] %vm224, 0
        %336 = vst.msk [vmem:[#allocation3 + $0x4] sm:$0xf] %vm224, 0
        %337 = vst.msk [vmem:[#allocation3 + $0x8] sm:$0x1] %vm227, 0
        %s338 = scalar_lea.vmem [#allocation3], 204
        %339 = vst.msk [vmem:[%s338] sm:$0xf] %vm224, 0
        %340 = vst.msk [vmem:[%s338 + $0x4] sm:$0xf] %vm224, 0
        %341 = vst.msk [vmem:[%s338 + $0x8] sm:$0x1] %vm227, 0
        %s342 = scalar_lea.vmem [#allocation3], 12
        %v343 = vld [vmem:[%s342] sm:$0x1]
        %v344 = vsel %vm236, 0, %v343
        %345 = vst [vmem:[%s342] sm:$0x1] %v344
        %v346 = vld [vmem:[%s342 + $0xc] sm:$0x1]
        %v347 = vsel %vm236, 0, %v346
        %348 = vst [vmem:[%s342 + $0xc] sm:$0x1] %v347
        %v349 = vld [vmem:[%s342 + $0x18] sm:$0x1]
        %v350 = vsel %vm236, 0, %v349
        %351 = vst [vmem:[%s342 + $0x18] sm:$0x1] %v350
        %v352 = vld [vmem:[%s342 + $0x24] sm:$0x1]
        %v353 = vsel %vm236, 0, %v352
        %354 = vst [vmem:[%s342 + $0x24] sm:$0x1] %v353
        %v355 = vld [vmem:[%s342 + $0x30] sm:$0x1]
        %v356 = vsel %vm236, 0, %v355
        %357 = vst [vmem:[%s342 + $0x30] sm:$0x1] %v356
        %v358 = vld [vmem:[%s342 + $0x3c] sm:$0x1]
        %v359 = vsel %vm236, 0, %v358
        %360 = vst [vmem:[%s342 + $0x3c] sm:$0x1] %v359
        %v361 = vld [vmem:[%s342 + $0x48] sm:$0x1]
        %v362 = vsel %vm236, 0, %v361
        %363 = vst [vmem:[%s342 + $0x48] sm:$0x1] %v362
        %v364 = vld [vmem:[%s342 + $0x54] sm:$0x1]
        %v365 = vsel %vm236, 0, %v364
        %366 = vst [vmem:[%s342 + $0x54] sm:$0x1] %v365
        %v367 = vld [vmem:[%s342 + $0x60] sm:$0x1]
        %v368 = vsel %vm236, 0, %v367
        %369 = vst [vmem:[%s342 + $0x60] sm:$0x1] %v368
        %v370 = vld [vmem:[%s342 + $0x6c] sm:$0x1]
        %v371 = vsel %vm236, 0, %v370
        %372 = vst [vmem:[%s342 + $0x6c] sm:$0x1] %v371
        %v373 = vld [vmem:[%s342 + $0x78] sm:$0x1]
        %v374 = vsel %vm236, 0, %v373
        %375 = vst [vmem:[%s342 + $0x78] sm:$0x1] %v374
        %v376 = vld [vmem:[%s342 + $0x84] sm:$0x1]
        %v377 = vsel %vm236, 0, %v376
        %378 = vst [vmem:[%s342 + $0x84] sm:$0x1] %v377
        %v379 = vld [vmem:[%s342 + $0x90] sm:$0x1]
        %v380 = vsel %vm236, 0, %v379
        %381 = vst [vmem:[%s342 + $0x90] sm:$0x1] %v380
        %v382 = vld [vmem:[%s342 + $0x9c] sm:$0x1]
        %v383 = vsel %vm236, 0, %v382
        %384 = vst [vmem:[%s342 + $0x9c] sm:$0x1] %v383
        %v385 = vld [vmem:[%s342 + $0xa8] sm:$0x1]
        %v386 = vsel %vm236, 0, %v385
        %387 = vst [vmem:[%s342 + $0xa8] sm:$0x1] %v386
        %v388 = vld [vmem:[%s342 + $0xb4] sm:$0x1]
        %v389 = vsel %vm236, 0, %v388
        %390 = vst [vmem:[%s342 + $0xb4] sm:$0x1] %v389
        %v391 = vld [vmem:[%s342 + $0x8] sm:$0x1]
        %v392 = vsel %vm286, 0, %v391
        %393 = vst [vmem:[%s342 + $0x8] sm:$0x1] %v392
        %v394 = vld [vmem:[%s342 + $0x14] sm:$0x1]
        %v395 = vsel %vm286, 0, %v394
        %396 = vst [vmem:[%s342 + $0x14] sm:$0x1] %v395
        %v397 = vld [vmem:[%s342 + $0x20] sm:$0x1]
        %v398 = vsel %vm286, 0, %v397
        %399 = vst [vmem:[%s342 + $0x20] sm:$0x1] %v398
        %v400 = vld [vmem:[%s342 + $0x2c] sm:$0x1]
        %v401 = vsel %vm286, 0, %v400
        %402 = vst [vmem:[%s342 + $0x2c] sm:$0x1] %v401
        %v403 = vld [vmem:[%s342 + $0x38] sm:$0x1]
        %v404 = vsel %vm286, 0, %v403
        %405 = vst [vmem:[%s342 + $0x38] sm:$0x1] %v404
        %v406 = vld [vmem:[%s342 + $0x44] sm:$0x1]
        %v407 = vsel %vm286, 0, %v406
        %408 = vst [vmem:[%s342 + $0x44] sm:$0x1] %v407
        %v409 = vld [vmem:[%s342 + $0x50] sm:$0x1]
        %v410 = vsel %vm286, 0, %v409
        %411 = vst [vmem:[%s342 + $0x50] sm:$0x1] %v410
        %v412 = vld [vmem:[%s342 + $0x5c] sm:$0x1]
        %v413 = vsel %vm286, 0, %v412
        %414 = vst [vmem:[%s342 + $0x5c] sm:$0x1] %v413
        %v415 = vld [vmem:[%s342 + $0x68] sm:$0x1]
        %v416 = vsel %vm286, 0, %v415
        %417 = vst [vmem:[%s342 + $0x68] sm:$0x1] %v416
        %v418 = vld [vmem:[%s342 + $0x74] sm:$0x1]
        %v419 = vsel %vm286, 0, %v418
        %420 = vst [vmem:[%s342 + $0x74] sm:$0x1] %v419
        %v421 = vld [vmem:[%s342 + $0x80] sm:$0x1]
        %v422 = vsel %vm286, 0, %v421
        %423 = vst [vmem:[%s342 + $0x80] sm:$0x1] %v422
        %v424 = vld [vmem:[%s342 + $0x8c] sm:$0x1]
        %v425 = vsel %vm286, 0, %v424
        %426 = vst [vmem:[%s342 + $0x8c] sm:$0x1] %v425
        %v427 = vld [vmem:[%s342 + $0x98] sm:$0x1]
        %v428 = vsel %vm286, 0, %v427
        %429 = vst [vmem:[%s342 + $0x98] sm:$0x1] %v428
        %v430 = vld [vmem:[%s342 + $0xa4] sm:$0x1]
        %v431 = vsel %vm286, 0, %v430
        %432 = vst [vmem:[%s342 + $0xa4] sm:$0x1] %v431
        %v433 = vld [vmem:[%s342 + $0xb0] sm:$0x1]
        %v434 = vsel %vm286, 0, %v433
        %435 = vst [vmem:[%s342 + $0xb0] sm:$0x1] %v434
        %v436 = vld [vmem:[%s342 + $0xbc] sm:$0x1]
        %v437 = vsel %vm286, 0, %v436
        %438 = vst [vmem:[%s342 + $0xbc] sm:$0x1] %v437
        %v439 = vld [vmem:[%s222] sm:$0xf]
        %v440 = vld [vmem:[%s222 + $0x4] sm:$0xf]
        %v441 = vld [vmem:[%s222 + $0x8] sm:$0xf]
        %v442 = vld [vmem:[%s222 + $0xc] sm:$0xf]
        %v443 = vld [vmem:[%s222 + $0x10] sm:$0xf]
        %v444 = vld [vmem:[%s222 + $0x14] sm:$0xf]
        %v445 = vld [vmem:[%s222 + $0x18] sm:$0xf]
        %v446 = vld [vmem:[%s222 + $0x1c] sm:$0xf]
        %v447 = vld [vmem:[%s222 + $0x20] sm:$0xf]
        %v448 = vld [vmem:[%s222 + $0x24] sm:$0xf]
        %v449 = vld [vmem:[%s222 + $0x28] sm:$0xf]
        %v450 = vld [vmem:[%s222 + $0x2c] sm:$0xf]
        %v451 = vld [vmem:[%s222 + $0x30] sm:$0xf]
        %v452 = vld [vmem:[%s222 + $0x34] sm:$0xf]
        %v453 = vld [vmem:[%s222 + $0x38] sm:$0xf]
        %v454 = vld [vmem:[%s222 + $0x3c] sm:$0xf]
        %v455 = vld [vmem:[%s222 + $0x40] sm:$0xf]
        %v456 = vld [vmem:[%s222 + $0x44] sm:$0xf]
        %v457 = vld [vmem:[%s222 + $0x48] sm:$0xf]
        %v458 = vld [vmem:[%s222 + $0x4c] sm:$0xf]
        %v459 = vld [vmem:[%s222 + $0x50] sm:$0xf]
        %v460 = vld [vmem:[%s222 + $0x54] sm:$0xf]
        %v461 = vld [vmem:[%s222 + $0x58] sm:$0xf]
        %v462 = vld [vmem:[%s222 + $0x5c] sm:$0xf]
        %v463 = vld [vmem:[%s222 + $0x60] sm:$0xf]
        %v464 = vld [vmem:[%s222 + $0x64] sm:$0xf]
        %v465 = vld [vmem:[%s222 + $0x68] sm:$0xf]
        %v466 = vld [vmem:[%s222 + $0x6c] sm:$0xf]
        %v467 = vld [vmem:[%s222 + $0x70] sm:$0xf]
        %v468 = vld [vmem:[%s222 + $0x74] sm:$0xf]
        %v469 = vld [vmem:[%s222 + $0x78] sm:$0xf]
        %v470 = vld [vmem:[%s222 + $0x7c] sm:$0xf]
        %vm471 = vsmask.f32 4368
        %vm472 = vmor %vm235, %vm471
        %v474 = vshrl.u32 %v439, 16
        %v476 = vrot.slane %v474, 7
        %v477 = vshll.u32 %v439, 16
        %v479 = vor.u32 %v476, %v477
        %v480 = vrot.slane %v476, 4
        %v482 = vshrl.u32 %v440, 16
        %v484 = vrot.slane %v482, 7
        %v485 = vshll.u32 %v440, 16
        %v487 = vor.u32 %v484, %v485
        %v488 = vsel %vm472, %v480, %v487
        %v489 = vrot.slane %v484, 4
        %v491 = vshrl.u32 %v441, 16
        %v493 = vrot.slane %v491, 7
        %v494 = vshll.u32 %v441, 16
        %v496 = vor.u32 %v493, %v494
        %v497 = vrot.slane %v493, 4
        %v499 = vshrl.u32 %v442, 16
        %v501 = vrot.slane %v499, 7
        %v502 = vshll.u32 %v442, 16
        %v504 = vor.u32 %v501, %v502
        %v505 = vsel %vm472, %v497, %v504
        %v506 = vrot.slane %v501, 4
        %v508 = vshrl.u32 %v443, 16
        %v510 = vrot.slane %v508, 7
        %v511 = vshll.u32 %v443, 16
        %v513 = vor.u32 %v510, %v511
        %v514 = vrot.slane %v510, 4
        %v516 = vshrl.u32 %v444, 16
        %v518 = vrot.slane %v516, 7
        %v519 = vshll.u32 %v444, 16
        %v521 = vor.u32 %v518, %v519
        %v522 = vsel %vm472, %v514, %v521
        %v523 = vrot.slane %v518, 4
        %v525 = vshrl.u32 %v445, 16
        %v527 = vrot.slane %v525, 7
        %v528 = vshll.u32 %v445, 16
        %v530 = vor.u32 %v527, %v528
        %v531 = vrot.slane %v527, 4
        %v533 = vshrl.u32 %v446, 16
        %v535 = vrot.slane %v533, 7
        %v536 = vshll.u32 %v446, 16
        %v538 = vor.u32 %v535, %v536
        %v539 = vsel %vm472, %v531, %v538
        %v540 = vrot.slane %v535, 4
        %v542 = vshrl.u32 %v447, 16
        %v544 = vrot.slane %v542, 7
        %v545 = vshll.u32 %v447, 16
        %v547 = vor.u32 %v544, %v545
        %v548 = vrot.slane %v544, 4
        %v550 = vshrl.u32 %v448, 16
        %v552 = vrot.slane %v550, 7
        %v553 = vshll.u32 %v448, 16
        %v555 = vor.u32 %v552, %v553
        %v556 = vsel %vm472, %v548, %v555
        %v557 = vrot.slane %v552, 4
        %v559 = vshrl.u32 %v449, 16
        %v561 = vrot.slane %v559, 7
        %v562 = vshll.u32 %v449, 16
        %v564 = vor.u32 %v561, %v562
        %v565 = vrot.slane %v561, 4
        %v567 = vshrl.u32 %v450, 16
        %v569 = vrot.slane %v567, 7
        %v570 = vshll.u32 %v450, 16
        %v572 = vor.u32 %v569, %v570
        %v573 = vsel %vm472, %v565, %v572
        %v574 = vrot.slane %v569, 4
        %v576 = vshrl.u32 %v451, 16
        %v578 = vrot.slane %v576, 7
        %v579 = vshll.u32 %v451, 16
        %v581 = vor.u32 %v578, %v579
        %v582 = vrot.slane %v578, 4
        %v584 = vshrl.u32 %v452, 16
        %v586 = vrot.slane %v584, 7
        %v587 = vshll.u32 %v452, 16
        %v589 = vor.u32 %v586, %v587
        %v590 = vsel %vm472, %v582, %v589
        %v591 = vrot.slane %v586, 4
        %v593 = vshrl.u32 %v453, 16
        %v595 = vrot.slane %v593, 7
        %v596 = vshll.u32 %v453, 16
        %v598 = vor.u32 %v595, %v596
        %v599 = vrot.slane %v595, 4
        %v601 = vshrl.u32 %v454, 16
        %v603 = vrot.slane %v601, 7
        %v604 = vshll.u32 %v454, 16
        %v606 = vor.u32 %v603, %v604
        %v607 = vsel %vm472, %v599, %v606
        %v608 = vrot.slane %v603, 4
        %v610 = vshrl.u32 %v455, 16
        %v612 = vrot.slane %v610, 7
        %v613 = vshll.u32 %v455, 16
        %v615 = vor.u32 %v612, %v613
        %v616 = vrot.slane %v612, 4
        %v618 = vshrl.u32 %v456, 16
        %v620 = vrot.slane %v618, 7
        %v621 = vshll.u32 %v456, 16
        %v623 = vor.u32 %v620, %v621
        %v624 = vsel %vm472, %v616, %v623
        %v625 = vrot.slane %v620, 4
        %v627 = vshrl.u32 %v457, 16
        %v629 = vrot.slane %v627, 7
        %v630 = vshll.u32 %v457, 16
        %v632 = vor.u32 %v629, %v630
        %v633 = vrot.slane %v629, 4
        %v635 = vshrl.u32 %v458, 16
        %v637 = vrot.slane %v635, 7
        %v638 = vshll.u32 %v458, 16
        %v640 = vor.u32 %v637, %v638
        %v641 = vsel %vm472, %v633, %v640
        %v642 = vrot.slane %v637, 4
        %v644 = vshrl.u32 %v459, 16
        %v646 = vrot.slane %v644, 7
        %v647 = vshll.u32 %v459, 16
        %v649 = vor.u32 %v646, %v647
        %v650 = vrot.slane %v646, 4
        %v652 = vshrl.u32 %v460, 16
        %v654 = vrot.slane %v652, 7
        %v655 = vshll.u32 %v460, 16
        %v657 = vor.u32 %v654, %v655
        %v658 = vsel %vm472, %v650, %v657
        %v659 = vrot.slane %v654, 4
        %v661 = vshrl.u32 %v461, 16
        %v663 = vrot.slane %v661, 7
        %v664 = vshll.u32 %v461, 16
        %v666 = vor.u32 %v663, %v664
        %v667 = vrot.slane %v663, 4
        %v669 = vshrl.u32 %v462, 16
        %v671 = vrot.slane %v669, 7
        %v672 = vshll.u32 %v462, 16
        %v674 = vor.u32 %v671, %v672
        %v675 = vsel %vm472, %v667, %v674
        %v676 = vrot.slane %v671, 4
        %v678 = vshrl.u32 %v463, 16
        %v680 = vrot.slane %v678, 7
        %v681 = vshll.u32 %v463, 16
        %v683 = vor.u32 %v680, %v681
        %v684 = vrot.slane %v680, 4
        %v686 = vshrl.u32 %v464, 16
        %v688 = vrot.slane %v686, 7
        %v689 = vshll.u32 %v464, 16
        %v691 = vor.u32 %v688, %v689
        %v692 = vsel %vm472, %v684, %v691
        %v693 = vrot.slane %v688, 4
        %v695 = vshrl.u32 %v465, 16
        %v697 = vrot.slane %v695, 7
        %v698 = vshll.u32 %v465, 16
        %v700 = vor.u32 %v697, %v698
        %v701 = vrot.slane %v697, 4
        %v703 = vshrl.u32 %v466, 16
        %v705 = vrot.slane %v703, 7
        %v706 = vshll.u32 %v466, 16
        %v708 = vor.u32 %v705, %v706
        %v709 = vsel %vm472, %v701, %v708
        %v710 = vrot.slane %v705, 4
        %v712 = vshrl.u32 %v467, 16
        %v714 = vrot.slane %v712, 7
        %v715 = vshll.u32 %v467, 16
        %v717 = vor.u32 %v714, %v715
        %v718 = vrot.slane %v714, 4
        %v720 = vshrl.u32 %v468, 16
        %v722 = vrot.slane %v720, 7
        %v723 = vshll.u32 %v468, 16
        %v725 = vor.u32 %v722, %v723
        %v726 = vsel %vm472, %v718, %v725
        %v727 = vrot.slane %v722, 4
        %v729 = vshrl.u32 %v469, 16
        %v731 = vrot.slane %v729, 7
        %v732 = vshll.u32 %v469, 16
        %v734 = vor.u32 %v731, %v732
        %v735 = vrot.slane %v731, 4
        %v737 = vshrl.u32 %v470, 16
        %v739 = vrot.slane %v737, 7
        %v740 = vshll.u32 %v470, 16
        %v742 = vor.u32 %v739, %v740
        %v743 = vsel %vm472, %v735, %v742
        %v744 = vrot.slane %v739, 4
        %vm793 = vcmask 519168
        %vm794 = vmand %vm793, %vm285
        %v795 = vld [vmem:[%s233] sm:$0xf]
        %v796 = vsel %vm794, %v479, %v795
        %797 = vst [vmem:[%s233] sm:$0xf] %v796
        %798 = vst.msk [vmem:[%s233 + $0x4] sm:$0xf] %vm224, %v488
        %v799 = vld [vmem:[%s233 + $0x8] sm:$0x1]
        %v800 = vsel %vm236, %v489, %v799
        %801 = vst [vmem:[%s233 + $0x8] sm:$0x1] %v800
        %v802 = vld [vmem:[%s233 + $0xc] sm:$0xf]
        %v803 = vsel %vm794, %v496, %v802
        %804 = vst [vmem:[%s233 + $0xc] sm:$0xf] %v803
        %805 = vst.msk [vmem:[%s233 + $0x10] sm:$0xf] %vm224, %v505
        %v806 = vld [vmem:[%s233 + $0x14] sm:$0x1]
        %v807 = vsel %vm236, %v506, %v806
        %808 = vst [vmem:[%s233 + $0x14] sm:$0x1] %v807
        %v809 = vld [vmem:[%s233 + $0x18] sm:$0xf]
        %v810 = vsel %vm794, %v513, %v809
        %811 = vst [vmem:[%s233 + $0x18] sm:$0xf] %v810
        %812 = vst.msk [vmem:[%s233 + $0x1c] sm:$0xf] %vm224, %v522
        %v813 = vld [vmem:[%s233 + $0x20] sm:$0x1]
        %v814 = vsel %vm236, %v523, %v813
        %815 = vst [vmem:[%s233 + $0x20] sm:$0x1] %v814
        %v816 = vld [vmem:[%s233 + $0x24] sm:$0xf]
        %v817 = vsel %vm794, %v530, %v816
        %818 = vst [vmem:[%s233 + $0x24] sm:$0xf] %v817
        %819 = vst.msk [vmem:[%s233 + $0x28] sm:$0xf] %vm224, %v539
        %v820 = vld [vmem:[%s233 + $0x2c] sm:$0x1]
        %v821 = vsel %vm236, %v540, %v820
        %822 = vst [vmem:[%s233 + $0x2c] sm:$0x1] %v821
        %v823 = vld [vmem:[%s233 + $0x30] sm:$0xf]
        %v824 = vsel %vm794, %v547, %v823
        %825 = vst [vmem:[%s233 + $0x30] sm:$0xf] %v824
        %826 = vst.msk [vmem:[%s233 + $0x34] sm:$0xf] %vm224, %v556
        %v827 = vld [vmem:[%s233 + $0x38] sm:$0x1]
        %v828 = vsel %vm236, %v557, %v827
        %829 = vst [vmem:[%s233 + $0x38] sm:$0x1] %v828
        %v830 = vld [vmem:[%s233 + $0x3c] sm:$0xf]
        %v831 = vsel %vm794, %v564, %v830
        %832 = vst [vmem:[%s233 + $0x3c] sm:$0xf] %v831
        %833 = vst.msk [vmem:[%s233 + $0x40] sm:$0xf] %vm224, %v573
        %v834 = vld [vmem:[%s233 + $0x44] sm:$0x1]
        %v835 = vsel %vm236, %v574, %v834
        %836 = vst [vmem:[%s233 + $0x44] sm:$0x1] %v835
        %v837 = vld [vmem:[%s233 + $0x48] sm:$0xf]
        %v838 = vsel %vm794, %v581, %v837
        %839 = vst [vmem:[%s233 + $0x48] sm:$0xf] %v838
        %840 = vst.msk [vmem:[%s233 + $0x4c] sm:$0xf] %vm224, %v590
        %v841 = vld [vmem:[%s233 + $0x50] sm:$0x1]
        %v842 = vsel %vm236, %v591, %v841
        %843 = vst [vmem:[%s233 + $0x50] sm:$0x1] %v842
        %v844 = vld [vmem:[%s233 + $0x54] sm:$0xf]
        %v845 = vsel %vm794, %v598, %v844
        %846 = vst [vmem:[%s233 + $0x54] sm:$0xf] %v845
        %847 = vst.msk [vmem:[%s233 + $0x58] sm:$0xf] %vm224, %v607
        %v848 = vld [vmem:[%s233 + $0x5c] sm:$0x1]
        %v849 = vsel %vm236, %v608, %v848
        %850 = vst [vmem:[%s233 + $0x5c] sm:$0x1] %v849
        %v851 = vld [vmem:[%s233 + $0x60] sm:$0xf]
        %v852 = vsel %vm794, %v615, %v851
        %853 = vst [vmem:[%s233 + $0x60] sm:$0xf] %v852
        %854 = vst.msk [vmem:[%s233 + $0x64] sm:$0xf] %vm224, %v624
        %v855 = vld [vmem:[%s233 + $0x68] sm:$0x1]
        %v856 = vsel %vm236, %v625, %v855
        %857 = vst [vmem:[%s233 + $0x68] sm:$0x1] %v856
        %v858 = vld [vmem:[%s233 + $0x6c] sm:$0xf]
        %v859 = vsel %vm794, %v632, %v858
        %860 = vst [vmem:[%s233 + $0x6c] sm:$0xf] %v859
        %861 = vst.msk [vmem:[%s233 + $0x70] sm:$0xf] %vm224, %v641
        %v862 = vld [vmem:[%s233 + $0x74] sm:$0x1]
        %v863 = vsel %vm236, %v642, %v862
        %864 = vst [vmem:[%s233 + $0x74] sm:$0x1] %v863
        %v865 = vld [vmem:[%s233 + $0x78] sm:$0xf]
        %v866 = vsel %vm794, %v649, %v865
        %867 = vst [vmem:[%s233 + $0x78] sm:$0xf] %v866
        %868 = vst.msk [vmem:[%s233 + $0x7c] sm:$0xf] %vm224, %v658
        %v869 = vld [vmem:[%s233 + $0x80] sm:$0x1]
        %v870 = vsel %vm236, %v659, %v869
        %871 = vst [vmem:[%s233 + $0x80] sm:$0x1] %v870
        %v872 = vld [vmem:[%s233 + $0x84] sm:$0xf]
        %v873 = vsel %vm794, %v666, %v872
        %874 = vst [vmem:[%s233 + $0x84] sm:$0xf] %v873
        %875 = vst.msk [vmem:[%s233 + $0x88] sm:$0xf] %vm224, %v675
        %v876 = vld [vmem:[%s233 + $0x8c] sm:$0x1]
        %v877 = vsel %vm236, %v676, %v876
        %878 = vst [vmem:[%s233 + $0x8c] sm:$0x1] %v877
        %v879 = vld [vmem:[%s233 + $0x90] sm:$0xf]
        %v880 = vsel %vm794, %v683, %v879
        %881 = vst [vmem:[%s233 + $0x90] sm:$0xf] %v880
        %882 = vst.msk [vmem:[%s233 + $0x94] sm:$0xf] %vm224, %v692
        %v883 = vld [vmem:[%s233 + $0x98] sm:$0x1]
        %v884 = vsel %vm236, %v693, %v883
        %885 = vst [vmem:[%s233 + $0x98] sm:$0x1] %v884
        %v886 = vld [vmem:[%s233 + $0x9c] sm:$0xf]
        %v887 = vsel %vm794, %v700, %v886
        %888 = vst [vmem:[%s233 + $0x9c] sm:$0xf] %v887
        %889 = vst.msk [vmem:[%s233 + $0xa0] sm:$0xf] %vm224, %v709
        %v890 = vld [vmem:[%s233 + $0xa4] sm:$0x1]
        %v891 = vsel %vm236, %v710, %v890
        %892 = vst [vmem:[%s233 + $0xa4] sm:$0x1] %v891
        %v893 = vld [vmem:[%s233 + $0xa8] sm:$0xf]
        %v894 = vsel %vm794, %v717, %v893
        %895 = vst [vmem:[%s233 + $0xa8] sm:$0xf] %v894
        %896 = vst.msk [vmem:[%s233 + $0xac] sm:$0xf] %vm224, %v726
        %v897 = vld [vmem:[%s233 + $0xb0] sm:$0x1]
        %v898 = vsel %vm236, %v727, %v897
        %899 = vst [vmem:[%s233 + $0xb0] sm:$0x1] %v898
        %v900 = vld [vmem:[%s233 + $0xb4] sm:$0xf]
        %v901 = vsel %vm794, %v734, %v900
        %902 = vst [vmem:[%s233 + $0xb4] sm:$0xf] %v901
        %903 = vst.msk [vmem:[%s233 + $0xb8] sm:$0xf] %vm224, %v743
        %v904 = vld [vmem:[%s233 + $0xbc] sm:$0x1]
        %v905 = vsel %vm236, %v744, %v904
        %906 = vst [vmem:[%s233 + $0xbc] sm:$0x1] %v905
        %v907 = vld [vmem:[%s2] sm:$0x1]
        %v909 = vlaneseq
        %v910 = vshrl.u32 %v909, 7
        %v911 = vsub.s32 0, %v910
        %v912 = vrot.slane %v907, %v911
        %v914 = vld [vmem:[#allocation2] sm:$0xf]
        %v915 = vld [vmem:[#allocation2 + $0x4] sm:$0xf]
        %v916 = vld [vmem:[#allocation2 + $0xc] sm:$0xf]
        %v917 = vld [vmem:[#allocation2 + $0x10] sm:$0xf]
        %v918 = vld [vmem:[#allocation2 + $0x18] sm:$0xf]
        %v919 = vld [vmem:[#allocation2 + $0x1c] sm:$0xf]
        %v920 = vld [vmem:[#allocation2 + $0x24] sm:$0xf]
        %v921 = vld [vmem:[#allocation2 + $0x28] sm:$0xf]
        %v922 = vld [vmem:[#allocation2 + $0x30] sm:$0xf]
        %v923 = vld [vmem:[#allocation2 + $0x34] sm:$0xf]
        %v924 = vld [vmem:[#allocation2 + $0x3c] sm:$0xf]
        %v925 = vld [vmem:[#allocation2 + $0x40] sm:$0xf]
        %v926 = vld [vmem:[#allocation2 + $0x48] sm:$0xf]
        %v927 = vld [vmem:[#allocation2 + $0x4c] sm:$0xf]
        %v928 = vld [vmem:[#allocation2 + $0x54] sm:$0xf]
        %v929 = vld [vmem:[#allocation2 + $0x58] sm:$0xf]
        %v930 = vld [vmem:[#allocation2 + $0x60] sm:$0xf]
        %v931 = vld [vmem:[#allocation2 + $0x64] sm:$0xf]
        %v932 = vld [vmem:[#allocation2 + $0x6c] sm:$0xf]
        %v933 = vld [vmem:[#allocation2 + $0x70] sm:$0xf]
        %v934 = vld [vmem:[#allocation2 + $0x78] sm:$0xf]
        %v935 = vld [vmem:[#allocation2 + $0x7c] sm:$0xf]
        %v936 = vld [vmem:[#allocation2 + $0x84] sm:$0xf]
        %v937 = vld [vmem:[#allocation2 + $0x88] sm:$0xf]
        %v938 = vld [vmem:[#allocation2 + $0x90] sm:$0xf]
        %v939 = vld [vmem:[#allocation2 + $0x94] sm:$0xf]
        %v940 = vld [vmem:[#allocation2 + $0x9c] sm:$0xf]
        %v941 = vld [vmem:[#allocation2 + $0xa0] sm:$0xf]
        %v942 = vld [vmem:[#allocation2 + $0xa8] sm:$0xf]
        %v943 = vld [vmem:[#allocation2 + $0xac] sm:$0xf]
        %v944 = vld [vmem:[#allocation2 + $0xb4] sm:$0xf]
        %v945 = vld [vmem:[#allocation2 + $0xb8] sm:$0xf]
        %v946 = vld [vmem:[#allocation2 + $0x8] sm:$0x1]
        %v947 = vld [vmem:[#allocation2 + $0x14] sm:$0x1]
        %v948 = vld [vmem:[#allocation2 + $0x20] sm:$0x1]
        %v949 = vld [vmem:[#allocation2 + $0x2c] sm:$0x1]
        %v950 = vld [vmem:[#allocation2 + $0x38] sm:$0x1]
        %v951 = vld [vmem:[#allocation2 + $0x44] sm:$0x1]
        %v952 = vld [vmem:[#allocation2 + $0x50] sm:$0x1]
        %v953 = vld [vmem:[#allocation2 + $0x5c] sm:$0x1]
        %v954 = vld [vmem:[#allocation2 + $0x68] sm:$0x1]
        %v955 = vld [vmem:[#allocation2 + $0x74] sm:$0x1]
        %v956 = vld [vmem:[#allocation2 + $0x80] sm:$0x1]
        %v957 = vld [vmem:[#allocation2 + $0x8c] sm:$0x1]
        %v958 = vld [vmem:[#allocation2 + $0x98] sm:$0x1]
        %v959 = vld [vmem:[#allocation2 + $0xa4] sm:$0x1]
        %v960 = vld [vmem:[#allocation2 + $0xb0] sm:$0x1]
        %v961 = vld [vmem:[#allocation2 + $0xbc] sm:$0x1]
        %v962 = vld [vmem:[#allocation2] sm:$0xe]
        %v963 = vld [vmem:[#allocation2 + $0xc] sm:$0xe]
        %v964 = vld [vmem:[#allocation2 + $0x18] sm:$0xe]
        %v965 = vld [vmem:[#allocation2 + $0x24] sm:$0xe]
        %v966 = vld [vmem:[#allocation2 + $0x30] sm:$0xe]
        %v967 = vld [vmem:[#allocation2 + $0x3c] sm:$0xe]
        %v968 = vld [vmem:[#allocation2 + $0x48] sm:$0xe]
        %v969 = vld [vmem:[#allocation2 + $0x54] sm:$0xe]
        %v970 = vld [vmem:[#allocation2 + $0x60] sm:$0xe]
        %v971 = vld [vmem:[#allocation2 + $0x6c] sm:$0xe]
        %v972 = vld [vmem:[#allocation2 + $0x78] sm:$0xe]
        %v973 = vld [vmem:[#allocation2 + $0x84] sm:$0xe]
        %v974 = vld [vmem:[#allocation2 + $0x90] sm:$0xe]
        %v975 = vld [vmem:[#allocation2 + $0x9c] sm:$0xe]
        %v976 = vld [vmem:[#allocation2 + $0xa8] sm:$0xe]
        %v977 = vld [vmem:[#allocation2 + $0xb4] sm:$0xe]
        %v1010 = vunpack.c.l.b16 %v914
        %v1011 = vunpack.c.l.b16 %v915
        %v1012 = vunpack.c.l.b16 %v916
        %v1013 = vunpack.c.l.b16 %v917
        %v1014 = vunpack.c.l.b16 %v918
        %v1015 = vunpack.c.l.b16 %v919
        %v1016 = vunpack.c.l.b16 %v920
        %v1017 = vunpack.c.l.b16 %v921
        %v1018 = vunpack.c.l.b16 %v922
        %v1019 = vunpack.c.l.b16 %v923
        %v1020 = vunpack.c.l.b16 %v924
        %v1021 = vunpack.c.l.b16 %v925
        %v1022 = vunpack.c.l.b16 %v926
        %v1023 = vunpack.c.l.b16 %v927
        %v1024 = vunpack.c.l.b16 %v928
        %v1025 = vunpack.c.l.b16 %v929
        %v1026 = vunpack.c.l.b16 %v930
        %v1027 = vunpack.c.l.b16 %v931
        %v1028 = vunpack.c.l.b16 %v932
        %v1029 = vunpack.c.l.b16 %v933
        %v1030 = vunpack.c.l.b16 %v934
        %v1031 = vunpack.c.l.b16 %v935
        %v1032 = vunpack.c.l.b16 %v936
        %v1033 = vunpack.c.l.b16 %v937
        %v1034 = vunpack.c.l.b16 %v938
        %v1035 = vunpack.c.l.b16 %v939
        %v1036 = vunpack.c.l.b16 %v940
        %v1037 = vunpack.c.l.b16 %v941
        %v1038 = vunpack.c.l.b16 %v942
        %v1039 = vunpack.c.l.b16 %v943
        %v1040 = vunpack.c.l.b16 %v944
        %v1041 = vunpack.c.l.b16 %v945
        %v1042 = vpack.c.b16 %v1011, %v1010
        %v1043 = vpack.c.b16 %v1013, %v1012
        %v1044 = vpack.c.b16 %v1015, %v1014
        %v1045 = vpack.c.b16 %v1017, %v1016
        %v1046 = vpack.c.b16 %v1019, %v1018
        %v1047 = vpack.c.b16 %v1021, %v1020
        %v1048 = vpack.c.b16 %v1023, %v1022
        %v1049 = vpack.c.b16 %v1025, %v1024
        %v1050 = vpack.c.b16 %v1027, %v1026
        %v1051 = vpack.c.b16 %v1029, %v1028
        %v1052 = vpack.c.b16 %v1031, %v1030
        %v1053 = vpack.c.b16 %v1033, %v1032
        %v1054 = vpack.c.b16 %v1035, %v1034
        %v1055 = vpack.c.b16 %v1037, %v1036
        %v1056 = vpack.c.b16 %v1039, %v1038
        %v1057 = vpack.c.b16 %v1041, %v1040
        %v1074 = vunpack.c.l.b16 %v946
        %v1075 = vunpack.c.l.b16 %v947
        %v1076 = vunpack.c.l.b16 %v948
        %v1077 = vunpack.c.l.b16 %v949
        %v1078 = vunpack.c.l.b16 %v950
        %v1079 = vunpack.c.l.b16 %v951
        %v1080 = vunpack.c.l.b16 %v952
        %v1081 = vunpack.c.l.b16 %v953
        %v1082 = vunpack.c.l.b16 %v954
        %v1083 = vunpack.c.l.b16 %v955
        %v1084 = vunpack.c.l.b16 %v956
        %v1085 = vunpack.c.l.b16 %v957
        %v1086 = vunpack.c.l.b16 %v958
        %v1087 = vunpack.c.l.b16 %v959
        %v1088 = vunpack.c.l.b16 %v960
        %v1089 = vunpack.c.l.b16 %v961
        %v1090 = vpack.c.b16 %v1074, %v1074
        %v1091 = vpack.c.b16 %v1075, %v1075
        %v1092 = vpack.c.b16 %v1076, %v1076
        %v1093 = vpack.c.b16 %v1077, %v1077
        %v1094 = vpack.c.b16 %v1078, %v1078
        %v1095 = vpack.c.b16 %v1079, %v1079
        %v1096 = vpack.c.b16 %v1080, %v1080
        %v1097 = vpack.c.b16 %v1081, %v1081
        %v1098 = vpack.c.b16 %v1082, %v1082
        %v1099 = vpack.c.b16 %v1083, %v1083
        %v1100 = vpack.c.b16 %v1084, %v1084
        %v1101 = vpack.c.b16 %v1085, %v1085
        %v1102 = vpack.c.b16 %v1086, %v1086
        %v1103 = vpack.c.b16 %v1087, %v1087
        %v1104 = vpack.c.b16 %v1088, %v1088
        %v1105 = vpack.c.b16 %v1089, %v1089
        %vm1106 = vsmask.f32 7424
        %v1108 = vshrl.u32 %v1042, 16
        %v1110 = vshll.u32 %v1042, 16
        %v1112 = vrot.slane %v1110, 1
        %v1113 = vor.u32 %v1108, %v1112
        %v1115 = vshll.u32 %v1090, 16
        %v1117 = vrot.slane %v1115, 1
        %v1118 = vsel %vm1106, %v1113, %v1117
        %v1120 = vshrl.u32 %v1043, 16
        %v1122 = vshll.u32 %v1043, 16
        %v1124 = vrot.slane %v1122, 1
        %v1125 = vor.u32 %v1120, %v1124
        %v1127 = vshll.u32 %v1091, 16
        %v1129 = vrot.slane %v1127, 1
        %v1130 = vsel %vm1106, %v1125, %v1129
        %v1132 = vshrl.u32 %v1044, 16
        %v1134 = vshll.u32 %v1044, 16
        %v1136 = vrot.slane %v1134, 1
        %v1137 = vor.u32 %v1132, %v1136
        %v1139 = vshll.u32 %v1092, 16
        %v1141 = vrot.slane %v1139, 1
        %v1142 = vsel %vm1106, %v1137, %v1141
        %v1144 = vshrl.u32 %v1045, 16
        %v1146 = vshll.u32 %v1045, 16
        %v1148 = vrot.slane %v1146, 1
        %v1149 = vor.u32 %v1144, %v1148
        %v1151 = vshll.u32 %v1093, 16
        %v1153 = vrot.slane %v1151, 1
        %v1154 = vsel %vm1106, %v1149, %v1153
        %v1156 = vshrl.u32 %v1046, 16
        %v1158 = vshll.u32 %v1046, 16
        %v1160 = vrot.slane %v1158, 1
        %v1161 = vor.u32 %v1156, %v1160
        %v1163 = vshll.u32 %v1094, 16
        %v1165 = vrot.slane %v1163, 1
        %v1166 = vsel %vm1106, %v1161, %v1165
        %v1168 = vshrl.u32 %v1047, 16
        %v1170 = vshll.u32 %v1047, 16
        %v1172 = vrot.slane %v1170, 1
        %v1173 = vor.u32 %v1168, %v1172
        %v1175 = vshll.u32 %v1095, 16
        %v1177 = vrot.slane %v1175, 1
        %v1178 = vsel %vm1106, %v1173, %v1177
        %v1180 = vshrl.u32 %v1048, 16
        %v1182 = vshll.u32 %v1048, 16
        %v1184 = vrot.slane %v1182, 1
        %v1185 = vor.u32 %v1180, %v1184
        %v1187 = vshll.u32 %v1096, 16
        %v1189 = vrot.slane %v1187, 1
        %v1190 = vsel %vm1106, %v1185, %v1189
        %v1192 = vshrl.u32 %v1049, 16
        %v1194 = vshll.u32 %v1049, 16
        %v1196 = vrot.slane %v1194, 1
        %v1197 = vor.u32 %v1192, %v1196
        %v1199 = vshll.u32 %v1097, 16
        %v1201 = vrot.slane %v1199, 1
        %v1202 = vsel %vm1106, %v1197, %v1201
        %v1204 = vshrl.u32 %v1050, 16
        %v1206 = vshll.u32 %v1050, 16
        %v1208 = vrot.slane %v1206, 1
        %v1209 = vor.u32 %v1204, %v1208
        %v1211 = vshll.u32 %v1098, 16
        %v1213 = vrot.slane %v1211, 1
        %v1214 = vsel %vm1106, %v1209, %v1213
        %v1216 = vshrl.u32 %v1051, 16
        %v1218 = vshll.u32 %v1051, 16
        %v1220 = vrot.slane %v1218, 1
        %v1221 = vor.u32 %v1216, %v1220
        %v1223 = vshll.u32 %v1099, 16
        %v1225 = vrot.slane %v1223, 1
        %v1226 = vsel %vm1106, %v1221, %v1225
        %v1228 = vshrl.u32 %v1052, 16
        %v1230 = vshll.u32 %v1052, 16
        %v1232 = vrot.slane %v1230, 1
        %v1233 = vor.u32 %v1228, %v1232
        %v1235 = vshll.u32 %v1100, 16
        %v1237 = vrot.slane %v1235, 1
        %v1238 = vsel %vm1106, %v1233, %v1237
        %v1240 = vshrl.u32 %v1053, 16
        %v1242 = vshll.u32 %v1053, 16
        %v1244 = vrot.slane %v1242, 1
        %v1245 = vor.u32 %v1240, %v1244
        %v1247 = vshll.u32 %v1101, 16
        %v1249 = vrot.slane %v1247, 1
        %v1250 = vsel %vm1106, %v1245, %v1249
        %v1252 = vshrl.u32 %v1054, 16
        %v1254 = vshll.u32 %v1054, 16
        %v1256 = vrot.slane %v1254, 1
        %v1257 = vor.u32 %v1252, %v1256
        %v1259 = vshll.u32 %v1102, 16
        %v1261 = vrot.slane %v1259, 1
        %v1262 = vsel %vm1106, %v1257, %v1261
        %v1264 = vshrl.u32 %v1055, 16
        %v1266 = vshll.u32 %v1055, 16
        %v1268 = vrot.slane %v1266, 1
        %v1269 = vor.u32 %v1264, %v1268
        %v1271 = vshll.u32 %v1103, 16
        %v1273 = vrot.slane %v1271, 1
        %v1274 = vsel %vm1106, %v1269, %v1273
        %v1276 = vshrl.u32 %v1056, 16
        %v1278 = vshll.u32 %v1056, 16
        %v1280 = vrot.slane %v1278, 1
        %v1281 = vor.u32 %v1276, %v1280
        %v1283 = vshll.u32 %v1104, 16
        %v1285 = vrot.slane %v1283, 1
        %v1286 = vsel %vm1106, %v1281, %v1285
        %v1288 = vshrl.u32 %v1057, 16
        %v1290 = vshll.u32 %v1057, 16
        %v1292 = vrot.slane %v1290, 1
        %v1293 = vor.u32 %v1288, %v1292
        %v1295 = vshll.u32 %v1105, 16
        %v1297 = vrot.slane %v1295, 1
        %v1298 = vsel %vm1106, %v1293, %v1297
        %1299 = vrot.lane.b32.xlu0 %v1118, 64
        %v1300 = vpop.permute.xlu0 %1299
        %1301 = vrot.lane.b32.xlu0 %v1130, 64
        %v1302 = vpop.permute.xlu0 %1301
        %1303 = vrot.lane.b32.xlu0 %v1142, 64
        %v1304 = vpop.permute.xlu0 %1303
        %1305 = vrot.lane.b32.xlu0 %v1154, 64
        %v1306 = vpop.permute.xlu0 %1305
        %1307 = vrot.lane.b32.xlu0 %v1166, 64
        %v1308 = vpop.permute.xlu0 %1307
        %1309 = vrot.lane.b32.xlu0 %v1178, 64
        %v1310 = vpop.permute.xlu0 %1309
        %1311 = vrot.lane.b32.xlu0 %v1190, 64
        %v1312 = vpop.permute.xlu0 %1311
        %1313 = vrot.lane.b32.xlu0 %v1202, 64
        %v1314 = vpop.permute.xlu0 %1313
        %1315 = vrot.lane.b32.xlu0 %v1214, 64
        %v1316 = vpop.permute.xlu0 %1315
        %1317 = vrot.lane.b32.xlu0 %v1226, 64
        %v1318 = vpop.permute.xlu0 %1317
        %1319 = vrot.lane.b32.xlu0 %v1238, 64
        %v1320 = vpop.permute.xlu0 %1319
        %1321 = vrot.lane.b32.xlu0 %v1250, 64
        %v1322 = vpop.permute.xlu0 %1321
        %1323 = vrot.lane.b32.xlu0 %v1262, 64
        %v1324 = vpop.permute.xlu0 %1323
        %1325 = vrot.lane.b32.xlu0 %v1274, 64
        %v1326 = vpop.permute.xlu0 %1325
        %1327 = vrot.lane.b32.xlu0 %v1286, 64
        %v1328 = vpop.permute.xlu0 %1327
        %1329 = vrot.lane.b32.xlu0 %v1298, 64
        %v1330 = vpop.permute.xlu0 %1329
        %v1347 = vunpack.c.l.b16 %v962
        %v1348 = vunpack.c.l.b16 %v963
        %v1349 = vunpack.c.l.b16 %v964
        %v1350 = vunpack.c.l.b16 %v965
        %v1351 = vunpack.c.l.b16 %v966
        %v1352 = vunpack.c.l.b16 %v967
        %v1353 = vunpack.c.l.b16 %v968
        %v1354 = vunpack.c.l.b16 %v969
        %v1355 = vunpack.c.l.b16 %v970
        %v1356 = vunpack.c.l.b16 %v971
        %v1357 = vunpack.c.l.b16 %v972
        %v1358 = vunpack.c.l.b16 %v973
        %v1359 = vunpack.c.l.b16 %v974
        %v1360 = vunpack.c.l.b16 %v975
        %v1361 = vunpack.c.l.b16 %v976
        %v1362 = vunpack.c.l.b16 %v977
        %v1363 = vpack.c.b16 %v1011, %v1347
        %v1364 = vpack.c.b16 %v1013, %v1348
        %v1365 = vpack.c.b16 %v1015, %v1349
        %v1366 = vpack.c.b16 %v1017, %v1350
        %v1367 = vpack.c.b16 %v1019, %v1351
        %v1368 = vpack.c.b16 %v1021, %v1352
        %v1369 = vpack.c.b16 %v1023, %v1353
        %v1370 = vpack.c.b16 %v1025, %v1354
        %v1371 = vpack.c.b16 %v1027, %v1355
        %v1372 = vpack.c.b16 %v1029, %v1356
        %v1373 = vpack.c.b16 %v1031, %v1357
        %v1374 = vpack.c.b16 %v1033, %v1358
        %v1375 = vpack.c.b16 %v1035, %v1359
        %v1376 = vpack.c.b16 %v1037, %v1360
        %v1377 = vpack.c.b16 %v1039, %v1361
        %v1378 = vpack.c.b16 %v1041, %v1362
        %vm1379 = vcmask 1046528
        %v1380 = vrot.slane %v1363, 1
        %v1381 = vrot.slane %v1090, 1
        %v1382 = vsel %vm1379, %v1380, %v1381
        %v1383 = vrot.slane %v1364, 1
        %v1384 = vrot.slane %v1091, 1
        %v1385 = vsel %vm1379, %v1383, %v1384
        %v1386 = vrot.slane %v1365, 1
        %v1387 = vrot.slane %v1092, 1
        %v1388 = vsel %vm1379, %v1386, %v1387
        %v1389 = vrot.slane %v1366, 1
        %v1390 = vrot.slane %v1093, 1
        %v1391 = vsel %vm1379, %v1389, %v1390
        %v1392 = vrot.slane %v1367, 1
        %v1393 = vrot.slane %v1094, 1
        %v1394 = vsel %vm1379, %v1392, %v1393
        %v1395 = vrot.slane %v1368, 1
        %v1396 = vrot.slane %v1095, 1
        %v1397 = vsel %vm1379, %v1395, %v1396
        %v1398 = vrot.slane %v1369, 1
        %v1399 = vrot.slane %v1096, 1
        %v1400 = vsel %vm1379, %v1398, %v1399
        %v1401 = vrot.slane %v1370, 1
        %v1402 = vrot.slane %v1097, 1
        %v1403 = vsel %vm1379, %v1401, %v1402
        %v1404 = vrot.slane %v1371, 1
        %v1405 = vrot.slane %v1098, 1
        %v1406 = vsel %vm1379, %v1404, %v1405
        %v1407 = vrot.slane %v1372, 1
        %v1408 = vrot.slane %v1099, 1
        %v1409 = vsel %vm1379, %v1407, %v1408
        %v1410 = vrot.slane %v1373, 1
        %v1411 = vrot.slane %v1100, 1
        %v1412 = vsel %vm1379, %v1410, %v1411
        %v1413 = vrot.slane %v1374, 1
        %v1414 = vrot.slane %v1101, 1
        %v1415 = vsel %vm1379, %v1413, %v1414
        %v1416 = vrot.slane %v1375, 1
        %v1417 = vrot.slane %v1102, 1
        %v1418 = vsel %vm1379, %v1416, %v1417
        %v1419 = vrot.slane %v1376, 1
        %v1420 = vrot.slane %v1103, 1
        %v1421 = vsel %vm1379, %v1419, %v1420
        %v1422 = vrot.slane %v1377, 1
        %v1423 = vrot.slane %v1104, 1
        %v1424 = vsel %vm1379, %v1422, %v1423
        %v1425 = vrot.slane %v1378, 1
        %v1426 = vrot.slane %v1105, 1
        %v1427 = vsel %vm1379, %v1425, %v1426
        %vm1428 = vcmask 523264
        %v1430 = vsel %vm1428, %v1042, %v1300
        %v1433 = vsel %vm1428, %v1043, %v1302
        %v1436 = vsel %vm1428, %v1044, %v1304
        %v1439 = vsel %vm1428, %v1045, %v1306
        %v1442 = vsel %vm1428, %v1046, %v1308
        %v1445 = vsel %vm1428, %v1047, %v1310
        %v1448 = vsel %vm1428, %v1048, %v1312
        %v1451 = vsel %vm1428, %v1049, %v1314
        %v1454 = vsel %vm1428, %v1050, %v1316
        %v1457 = vsel %vm1428, %v1051, %v1318
        %v1460 = vsel %vm1428, %v1052, %v1320
        %v1463 = vsel %vm1428, %v1053, %v1322
        %v1466 = vsel %vm1428, %v1054, %v1324
        %v1469 = vsel %vm1428, %v1055, %v1326
        %v1472 = vsel %vm1428, %v1056, %v1328
        %v1475 = vsel %vm1428, %v1057, %v1330
        %v1477 = vld [vmem:[%s1] sm:$0xf]
        %v1478 = vld [vmem:[%s1 + $0x4] sm:$0xf]
        %v1479 = vld [vmem:[%s1 + $0x8] sm:$0xf]
        %v1480 = vld [vmem:[%s1 + $0xc] sm:$0xf]
        %v1481 = vld [vmem:[%s1 + $0x10] sm:$0xf]
        %v1482 = vld [vmem:[%s1 + $0x14] sm:$0xf]
        %v1483 = vld [vmem:[%s1 + $0x18] sm:$0xf]
        %v1484 = vld [vmem:[%s1 + $0x1c] sm:$0xf]
        %v1485 = vld [vmem:[%s1 + $0x20] sm:$0xf]
        %v1486 = vld [vmem:[%s1 + $0x24] sm:$0xf]
        %v1487 = vld [vmem:[%s1 + $0x28] sm:$0xf]
        %v1488 = vld [vmem:[%s1 + $0x2c] sm:$0xf]
        %v1489 = vld [vmem:[%s1 + $0x30] sm:$0xf]
        %v1490 = vld [vmem:[%s1 + $0x34] sm:$0xf]
        %v1491 = vld [vmem:[%s1 + $0x38] sm:$0xf]
        %v1492 = vld [vmem:[%s1 + $0x3c] sm:$0xf]
        %v1493 = vld [vmem:[%s1 + $0x40] sm:$0xf]
        %v1494 = vld [vmem:[%s1 + $0x44] sm:$0xf]
        %v1495 = vld [vmem:[%s1 + $0x48] sm:$0xf]
        %v1496 = vld [vmem:[%s1 + $0x4c] sm:$0xf]
        %v1497 = vld [vmem:[%s1 + $0x50] sm:$0xf]
        %v1498 = vld [vmem:[%s1 + $0x54] sm:$0xf]
        %v1499 = vld [vmem:[%s1 + $0x58] sm:$0xf]
        %v1500 = vld [vmem:[%s1 + $0x5c] sm:$0xf]
        %v1525 = vunpack.c.l.b16 %v1477
        %v1526 = vunpack.c.l.b16 %v1478
        %v1527 = vunpack.c.l.b16 %v1479
        %v1528 = vunpack.c.l.b16 %v1480
        %v1529 = vunpack.c.l.b16 %v1481
        %v1530 = vunpack.c.l.b16 %v1482
        %v1531 = vunpack.c.l.b16 %v1483
        %v1532 = vunpack.c.l.b16 %v1484
        %v1533 = vunpack.c.l.b16 %v1485
        %v1534 = vunpack.c.l.b16 %v1486
        %v1535 = vunpack.c.l.b16 %v1487
        %v1536 = vunpack.c.l.b16 %v1488
        %v1537 = vunpack.c.l.b16 %v1489
        %v1538 = vunpack.c.l.b16 %v1490
        %v1539 = vunpack.c.l.b16 %v1491
        %v1540 = vunpack.c.l.b16 %v1492
        %v1541 = vunpack.c.l.b16 %v1493
        %v1542 = vunpack.c.l.b16 %v1494
        %v1543 = vunpack.c.l.b16 %v1495
        %v1544 = vunpack.c.l.b16 %v1496
        %v1545 = vunpack.c.l.b16 %v1497
        %v1546 = vunpack.c.l.b16 %v1498
        %v1547 = vunpack.c.l.b16 %v1499
        %v1548 = vunpack.c.l.b16 %v1500
        %v1549 = vpack.c.b16 %v1526, %v1525
        %v1550 = vpack.c.b16 %v1528, %v1527
        %v1551 = vpack.c.b16 %v1530, %v1529
        %v1552 = vpack.c.b16 %v1532, %v1531
        %v1553 = vpack.c.b16 %v1534, %v1533
        %v1554 = vpack.c.b16 %v1536, %v1535
        %v1555 = vpack.c.b16 %v1538, %v1537
        %v1556 = vpack.c.b16 %v1540, %v1539
        %v1557 = vpack.c.b16 %v1542, %v1541
        %v1558 = vpack.c.b16 %v1544, %v1543
        %v1559 = vpack.c.b16 %v1546, %v1545
        %v1560 = vpack.c.b16 %v1548, %v1547
        %v1574 = vsel %vm1428, %v1382, 0
        %v1577 = vsel %vm1428, %v1385, 0
        %v1580 = vsel %vm1428, %v1388, 0
        %v1583 = vsel %vm1428, %v1391, 0
        %v1586 = vsel %vm1428, %v1394, 0
        %v1589 = vsel %vm1428, %v1397, 0
        %v1592 = vsel %vm1428, %v1400, 0
        %v1595 = vsel %vm1428, %v1403, 0
        %v1598 = vsel %vm1428, %v1406, 0
        %v1601 = vsel %vm1428, %v1409, 0
        %v1604 = vsel %vm1428, %v1412, 0
        %v1607 = vsel %vm1428, %v1415, 0
        %v1610 = vsel %vm1428, %v1418, 0
        %v1613 = vsel %vm1428, %v1421, 0
        %v1616 = vsel %vm1428, %v1424, 0
        %v1619 = vsel %vm1428, %v1427, 0
        %1621 = vmatprep.subr.bf16.mxu0 0
        %1622 = vmatpush1.bf16.msra.mxu0 %v1556
        %1623 = vmatprep.subr.bf16.mxu0 0
        %1624 = vmatpush1.bf16.msra.mxu0 %v1555
        %1625 = vmatprep.subr.bf16.mxu0 0
        %1626 = vmatpush1.bf16.msra.mxu0 %v1554
        %1627 = vmatprep.subr.bf16.mxu0 0
        %1628 = vmatpush1.bf16.msra.mxu0 %v1553
        %1629 = vmatprep.subr.bf16.mxu0 0
        %1630 = vmatpush1.bf16.msra.mxu0 %v1552
        %1631 = vmatprep.subr.bf16.mxu0 0
        %1632 = vmatpush1.bf16.msra.mxu0 %v1551
        %1633 = vmatprep.subr.bf16.mxu0 0
        %1634 = vmatpush1.bf16.msra.mxu0 %v1550
        %1635 = vmatprep.subr.bf16.mxu0 0
        %1636 = vmatpush1.bf16.msra.mxu0 %v1549
        %1637 = vmatprep.subr.bf16.mxu0 0
        %1638 = vmatpush2.bf16.msra.mxu0 0
        %1639 = vmatprep.subr.bf16.mxu0 0
        %1640 = vmatpush2.bf16.msra.mxu0 0
        %1641 = vmatprep.subr.bf16.mxu0 0
        %1642 = vmatpush2.bf16.msra.mxu0 0
        %1643 = vmatprep.subr.bf16.mxu0 0
        %1644 = vmatpush2.bf16.msra.mxu0 0
        %1645 = vmatprep.subr.bf16.mxu0 0
        %1646 = vmatpush2.bf16.msra.mxu0 %v1560
        %1647 = vmatprep.subr.bf16.mxu0 0
        %1648 = vmatpush2.bf16.msra.mxu0 %v1559
        %1649 = vmatprep.subr.bf16.mxu0 0
        %1650 = vmatpush2.bf16.msra.mxu0 %v1558
        %1651 = vmatprep.subr.bf16.mxu0 0
        %1652 = vmatpush2.bf16.msra.mxu0 %v1557
        %1653 = vmatprep.mubr.bf16.mxu0 %v1574
        %1654 = vmatmul.mubr.bf16.gmra.mxu0 %v1430
        %v1655 = vpop.f32.mrf.mxu0
        %v1656 = vadd.f32 0.0, %v1655
        %v1657 = vpop.f32.mrf.mxu0
        %v1658 = vpop.f32.mrf.mxu0
        %v1659 = vadd.f32 0.0, %v1658
        %v1660 = vpop.f32.mrf.mxu0
        %1661 = vmatprep.mubr.bf16.mxu0 %v1577
        %1662 = vmatmul.mubr.bf16.gmra.mxu0 %v1433
        %v1663 = vpop.f32.mrf.mxu0
        %v1664 = vadd.f32 0.0, %v1663
        %v1665 = vpop.f32.mrf.mxu0
        %v1666 = vpop.f32.mrf.mxu0
        %v1667 = vadd.f32 0.0, %v1666
        %v1668 = vpop.f32.mrf.mxu0
        %1669 = vmatprep.mubr.bf16.mxu0 %v1580
        %1670 = vmatmul.mubr.bf16.gmra.mxu0 %v1436
        %v1671 = vpop.f32.mrf.mxu0
        %v1672 = vadd.f32 0.0, %v1671
        %v1673 = vpop.f32.mrf.mxu0
        %v1674 = vpop.f32.mrf.mxu0
        %v1675 = vadd.f32 0.0, %v1674
        %v1676 = vpop.f32.mrf.mxu0
        %1677 = vmatprep.mubr.bf16.mxu0 %v1583
        %1678 = vmatmul.mubr.bf16.gmra.mxu0 %v1439
        %v1679 = vpop.f32.mrf.mxu0
        %v1680 = vadd.f32 0.0, %v1679
        %v1681 = vpop.f32.mrf.mxu0
        %v1682 = vpop.f32.mrf.mxu0
        %v1683 = vadd.f32 0.0, %v1682
        %v1684 = vpop.f32.mrf.mxu0
        %1685 = vmatprep.mubr.bf16.mxu0 %v1586
        %1686 = vmatmul.mubr.bf16.gmra.mxu0 %v1442
        %v1687 = vpop.f32.mrf.mxu0
        %v1688 = vadd.f32 0.0, %v1687
        %v1689 = vpop.f32.mrf.mxu0
        %v1690 = vpop.f32.mrf.mxu0
        %v1691 = vadd.f32 0.0, %v1690
        %v1692 = vpop.f32.mrf.mxu0
        %1693 = vmatprep.mubr.bf16.mxu0 %v1589
        %1694 = vmatmul.mubr.bf16.gmra.mxu0 %v1445
        %v1695 = vpop.f32.mrf.mxu0
        %v1696 = vadd.f32 0.0, %v1695
        %v1697 = vpop.f32.mrf.mxu0
        %v1698 = vpop.f32.mrf.mxu0
        %v1699 = vadd.f32 0.0, %v1698
        %v1700 = vpop.f32.mrf.mxu0
        %1701 = vmatprep.mubr.bf16.mxu0 %v1592
        %1702 = vmatmul.mubr.bf16.gmra.mxu0 %v1448
        %v1703 = vpop.f32.mrf.mxu0
        %v1704 = vadd.f32 0.0, %v1703
        %v1705 = vpop.f32.mrf.mxu0
        %v1706 = vpop.f32.mrf.mxu0
        %v1707 = vadd.f32 0.0, %v1706
        %v1708 = vpop.f32.mrf.mxu0
        %1709 = vmatprep.mubr.bf16.mxu0 %v1595
        %1710 = vmatmul.mubr.bf16.gmra.mxu0 %v1451
        %v1711 = vpop.f32.mrf.mxu0
        %v1712 = vadd.f32 0.0, %v1711
        %v1713 = vpop.f32.mrf.mxu0
        %v1714 = vpop.f32.mrf.mxu0
        %v1715 = vadd.f32 0.0, %v1714
        %v1716 = vpop.f32.mrf.mxu0
        %1717 = vmatprep.mubr.bf16.mxu0 %v1598
        %1718 = vmatmul.mubr.bf16.gmra.mxu0 %v1454
        %v1719 = vpop.f32.mrf.mxu0
        %v1720 = vadd.f32 0.0, %v1719
        %v1721 = vpop.f32.mrf.mxu0
        %v1722 = vpop.f32.mrf.mxu0
        %v1723 = vadd.f32 0.0, %v1722
        %v1724 = vpop.f32.mrf.mxu0
        %1725 = vmatprep.mubr.bf16.mxu0 %v1601
        %1726 = vmatmul.mubr.bf16.gmra.mxu0 %v1457
        %v1727 = vpop.f32.mrf.mxu0
        %v1728 = vadd.f32 0.0, %v1727
        %v1729 = vpop.f32.mrf.mxu0
        %v1730 = vpop.f32.mrf.mxu0
        %v1731 = vadd.f32 0.0, %v1730
        %v1732 = vpop.f32.mrf.mxu0
        %1733 = vmatprep.mubr.bf16.mxu0 %v1604
        %1734 = vmatmul.mubr.bf16.gmra.mxu0 %v1460
        %v1735 = vpop.f32.mrf.mxu0
        %v1736 = vadd.f32 0.0, %v1735
        %v1737 = vpop.f32.mrf.mxu0
        %v1738 = vpop.f32.mrf.mxu0
        %v1739 = vadd.f32 0.0, %v1738
        %v1740 = vpop.f32.mrf.mxu0
        %1741 = vmatprep.mubr.bf16.mxu0 %v1607
        %1742 = vmatmul.mubr.bf16.gmra.mxu0 %v1463
        %v1743 = vpop.f32.mrf.mxu0
        %v1744 = vadd.f32 0.0, %v1743
        %v1745 = vpop.f32.mrf.mxu0
        %v1746 = vpop.f32.mrf.mxu0
        %v1747 = vadd.f32 0.0, %v1746
        %v1748 = vpop.f32.mrf.mxu0
        %1749 = vmatprep.mubr.bf16.mxu0 %v1610
        %1750 = vmatmul.mubr.bf16.gmra.mxu0 %v1466
        %v1751 = vpop.f32.mrf.mxu0
        %v1752 = vadd.f32 0.0, %v1751
        %v1753 = vpop.f32.mrf.mxu0
        %v1754 = vpop.f32.mrf.mxu0
        %v1755 = vadd.f32 0.0, %v1754
        %v1756 = vpop.f32.mrf.mxu0
        %1757 = vmatprep.mubr.bf16.mxu0 %v1613
        %1758 = vmatmul.mubr.bf16.gmra.mxu0 %v1469
        %v1759 = vpop.f32.mrf.mxu0
        %v1760 = vadd.f32 0.0, %v1759
        %v1761 = vpop.f32.mrf.mxu0
        %v1762 = vpop.f32.mrf.mxu0
        %v1763 = vadd.f32 0.0, %v1762
        %v1764 = vpop.f32.mrf.mxu0
        %1765 = vmatprep.mubr.bf16.mxu0 %v1616
        %1766 = vmatmul.mubr.bf16.gmra.mxu0 %v1472
        %v1767 = vpop.f32.mrf.mxu0
        %v1768 = vadd.f32 0.0, %v1767
        %v1769 = vpop.f32.mrf.mxu0
        %v1770 = vpop.f32.mrf.mxu0
        %v1771 = vadd.f32 0.0, %v1770
        %v1772 = vpop.f32.mrf.mxu0
        %1773 = vmatprep.mubr.bf16.mxu0 %v1619
        %1774 = vmatmul.mubr.bf16.gmra.mxu0 %v1475
        %v1775 = vpop.f32.mrf.mxu0
        %v1776 = vadd.f32 0.0, %v1775
        %v1777 = vpop.f32.mrf.mxu0
        %v1778 = vpop.f32.mrf.mxu0
        %v1779 = vadd.f32 0.0, %v1778
        %v1780 = vpop.f32.mrf.mxu0
        %1781 = vdwg.mxu0
        %v1782 = vadd.f32 %v912, %v1656
        %v1783 = vadd.f32 %v912, %v1659
        %v1784 = vadd.f32 %v912, %v1664
        %v1785 = vadd.f32 %v912, %v1667
        %v1786 = vadd.f32 %v912, %v1672
        %v1787 = vadd.f32 %v912, %v1675
        %v1788 = vadd.f32 %v912, %v1680
        %v1789 = vadd.f32 %v912, %v1683
        %v1790 = vadd.f32 %v912, %v1688
        %v1791 = vadd.f32 %v912, %v1691
        %v1792 = vadd.f32 %v912, %v1696
        %v1793 = vadd.f32 %v912, %v1699
        %v1794 = vadd.f32 %v912, %v1704
        %v1795 = vadd.f32 %v912, %v1707
        %v1796 = vadd.f32 %v912, %v1712
        %v1797 = vadd.f32 %v912, %v1715
        %v1798 = vadd.f32 %v912, %v1720
        %v1799 = vadd.f32 %v912, %v1723
        %v1800 = vadd.f32 %v912, %v1728
        %v1801 = vadd.f32 %v912, %v1731
        %v1802 = vadd.f32 %v912, %v1736
        %v1803 = vadd.f32 %v912, %v1739
        %v1804 = vadd.f32 %v912, %v1744
        %v1805 = vadd.f32 %v912, %v1747
        %v1806 = vadd.f32 %v912, %v1752
        %v1807 = vadd.f32 %v912, %v1755
        %v1808 = vadd.f32 %v912, %v1760
        %v1809 = vadd.f32 %v912, %v1763
        %v1810 = vadd.f32 %v912, %v1768
        %v1811 = vadd.f32 %v912, %v1771
        %v1812 = vadd.f32 %v912, %v1776
        %v1813 = vadd.f32 %v912, %v1779
        %v1814 = vld [vmem:[%s233] sm:$0xf]
        %v1815 = vld [vmem:[%s233 + $0x4] sm:$0xf]
        %v1816 = vld [vmem:[%s233 + $0xc] sm:$0xf]
        %v1817 = vld [vmem:[%s233 + $0x10] sm:$0xf]
        %v1818 = vld [vmem:[%s233 + $0x18] sm:$0xf]
        %v1819 = vld [vmem:[%s233 + $0x1c] sm:$0xf]
        %v1820 = vld [vmem:[%s233 + $0x24] sm:$0xf]
        %v1821 = vld [vmem:[%s233 + $0x28] sm:$0xf]
        %v1822 = vld [vmem:[%s233 + $0x30] sm:$0xf]
        %v1823 = vld [vmem:[%s233 + $0x34] sm:$0xf]
        %v1824 = vld [vmem:[%s233 + $0x3c] sm:$0xf]
        %v1825 = vld [vmem:[%s233 + $0x40] sm:$0xf]
        %v1826 = vld [vmem:[%s233 + $0x48] sm:$0xf]
        %v1827 = vld [vmem:[%s233 + $0x4c] sm:$0xf]
        %v1828 = vld [vmem:[%s233 + $0x54] sm:$0xf]
        %v1829 = vld [vmem:[%s233 + $0x58] sm:$0xf]
        %v1830 = vld [vmem:[%s233 + $0x60] sm:$0xf]
        %v1831 = vld [vmem:[%s233 + $0x64] sm:$0xf]
        %v1832 = vld [vmem:[%s233 + $0x6c] sm:$0xf]
        %v1833 = vld [vmem:[%s233 + $0x70] sm:$0xf]
        %v1834 = vld [vmem:[%s233 + $0x78] sm:$0xf]
        %v1835 = vld [vmem:[%s233 + $0x7c] sm:$0xf]
        %v1836 = vld [vmem:[%s233 + $0x84] sm:$0xf]
        %v1837 = vld [vmem:[%s233 + $0x88] sm:$0xf]
        %v1838 = vld [vmem:[%s233 + $0x90] sm:$0xf]
        %v1839 = vld [vmem:[%s233 + $0x94] sm:$0xf]
        %v1840 = vld [vmem:[%s233 + $0x9c] sm:$0xf]
        %v1841 = vld [vmem:[%s233 + $0xa0] sm:$0xf]
        %v1842 = vld [vmem:[%s233 + $0xa8] sm:$0xf]
        %v1843 = vld [vmem:[%s233 + $0xac] sm:$0xf]
        %v1844 = vld [vmem:[%s233 + $0xb4] sm:$0xf]
        %v1845 = vld [vmem:[%s233 + $0xb8] sm:$0xf]
        %v1846 = vld [vmem:[%s233 + $0x8] sm:$0x1]
        %v1847 = vld [vmem:[%s233 + $0x14] sm:$0x1]
        %v1848 = vld [vmem:[%s233 + $0x20] sm:$0x1]
        %v1849 = vld [vmem:[%s233 + $0x2c] sm:$0x1]
        %v1850 = vld [vmem:[%s233 + $0x38] sm:$0x1]
        %v1851 = vld [vmem:[%s233 + $0x44] sm:$0x1]
        %v1852 = vld [vmem:[%s233 + $0x50] sm:$0x1]
        %v1853 = vld [vmem:[%s233 + $0x5c] sm:$0x1]
        %v1854 = vld [vmem:[%s233 + $0x68] sm:$0x1]
        %v1855 = vld [vmem:[%s233 + $0x74] sm:$0x1]
        %v1856 = vld [vmem:[%s233 + $0x80] sm:$0x1]
        %v1857 = vld [vmem:[%s233 + $0x8c] sm:$0x1]
        %v1858 = vld [vmem:[%s233 + $0x98] sm:$0x1]
        %v1859 = vld [vmem:[%s233 + $0xa4] sm:$0x1]
        %v1860 = vld [vmem:[%s233 + $0xb0] sm:$0x1]
        %v1861 = vld [vmem:[%s233 + $0xbc] sm:$0x1]
        %v1862 = vld [vmem:[%s233] sm:$0xe]
        %v1863 = vld [vmem:[%s233 + $0xc] sm:$0xe]
        %v1864 = vld [vmem:[%s233 + $0x18] sm:$0xe]
        %v1865 = vld [vmem:[%s233 + $0x24] sm:$0xe]
        %v1866 = vld [vmem:[%s233 + $0x30] sm:$0xe]
        %v1867 = vld [vmem:[%s233 + $0x3c] sm:$0xe]
        %v1868 = vld [vmem:[%s233 + $0x48] sm:$0xe]
        %v1869 = vld [vmem:[%s233 + $0x54] sm:$0xe]
        %v1870 = vld [vmem:[%s233 + $0x60] sm:$0xe]
        %v1871 = vld [vmem:[%s233 + $0x6c] sm:$0xe]
        %v1872 = vld [vmem:[%s233 + $0x78] sm:$0xe]
        %v1873 = vld [vmem:[%s233 + $0x84] sm:$0xe]
        %v1874 = vld [vmem:[%s233 + $0x90] sm:$0xe]
        %v1875 = vld [vmem:[%s233 + $0x9c] sm:$0xe]
        %v1876 = vld [vmem:[%s233 + $0xa8] sm:$0xe]
        %v1877 = vld [vmem:[%s233 + $0xb4] sm:$0xe]
        %v1910 = vunpack.c.l.b16 %v1814
        %v1911 = vunpack.c.l.b16 %v1815
        %v1912 = vunpack.c.l.b16 %v1816
        %v1913 = vunpack.c.l.b16 %v1817
        %v1914 = vunpack.c.l.b16 %v1818
        %v1915 = vunpack.c.l.b16 %v1819
        %v1916 = vunpack.c.l.b16 %v1820
        %v1917 = vunpack.c.l.b16 %v1821
        %v1918 = vunpack.c.l.b16 %v1822
        %v1919 = vunpack.c.l.b16 %v1823
        %v1920 = vunpack.c.l.b16 %v1824
        %v1921 = vunpack.c.l.b16 %v1825
        %v1922 = vunpack.c.l.b16 %v1826
        %v1923 = vunpack.c.l.b16 %v1827
        %v1924 = vunpack.c.l.b16 %v1828
        %v1925 = vunpack.c.l.b16 %v1829
        %v1926 = vunpack.c.l.b16 %v1830
        %v1927 = vunpack.c.l.b16 %v1831
        %v1928 = vunpack.c.l.b16 %v1832
        %v1929 = vunpack.c.l.b16 %v1833
        %v1930 = vunpack.c.l.b16 %v1834
        %v1931 = vunpack.c.l.b16 %v1835
        %v1932 = vunpack.c.l.b16 %v1836
        %v1933 = vunpack.c.l.b16 %v1837
        %v1934 = vunpack.c.l.b16 %v1838
        %v1935 = vunpack.c.l.b16 %v1839
        %v1936 = vunpack.c.l.b16 %v1840
        %v1937 = vunpack.c.l.b16 %v1841
        %v1938 = vunpack.c.l.b16 %v1842
        %v1939 = vunpack.c.l.b16 %v1843
        %v1940 = vunpack.c.l.b16 %v1844
        %v1941 = vunpack.c.l.b16 %v1845
        %v1942 = vpack.c.b16 %v1911, %v1910
        %v1943 = vpack.c.b16 %v1913, %v1912
        %v1944 = vpack.c.b16 %v1915, %v1914
        %v1945 = vpack.c.b16 %v1917, %v1916
        %v1946 = vpack.c.b16 %v1919, %v1918
        %v1947 = vpack.c.b16 %v1921, %v1920
        %v1948 = vpack.c.b16 %v1923, %v1922
        %v1949 = vpack.c.b16 %v1925, %v1924
        %v1950 = vpack.c.b16 %v1927, %v1926
        %v1951 = vpack.c.b16 %v1929, %v1928
        %v1952 = vpack.c.b16 %v1931, %v1930
        %v1953 = vpack.c.b16 %v1933, %v1932
        %v1954 = vpack.c.b16 %v1935, %v1934
        %v1955 = vpack.c.b16 %v1937, %v1936
        %v1956 = vpack.c.b16 %v1939, %v1938
        %v1957 = vpack.c.b16 %v1941, %v1940
        %v1974 = vunpack.c.l.b16 %v1846
        %v1975 = vunpack.c.l.b16 %v1847
        %v1976 = vunpack.c.l.b16 %v1848
        %v1977 = vunpack.c.l.b16 %v1849
        %v1978 = vunpack.c.l.b16 %v1850
        %v1979 = vunpack.c.l.b16 %v1851
        %v1980 = vunpack.c.l.b16 %v1852
        %v1981 = vunpack.c.l.b16 %v1853
        %v1982 = vunpack.c.l.b16 %v1854
        %v1983 = vunpack.c.l.b16 %v1855
        %v1984 = vunpack.c.l.b16 %v1856
        %v1985 = vunpack.c.l.b16 %v1857
        %v1986 = vunpack.c.l.b16 %v1858
        %v1987 = vunpack.c.l.b16 %v1859
        %v1988 = vunpack.c.l.b16 %v1860
        %v1989 = vunpack.c.l.b16 %v1861
        %v1990 = vpack.c.b16 %v1974, %v1974
        %v1991 = vpack.c.b16 %v1975, %v1975
        %v1992 = vpack.c.b16 %v1976, %v1976
        %v1993 = vpack.c.b16 %v1977, %v1977
        %v1994 = vpack.c.b16 %v1978, %v1978
        %v1995 = vpack.c.b16 %v1979, %v1979
        %v1996 = vpack.c.b16 %v1980, %v1980
        %v1997 = vpack.c.b16 %v1981, %v1981
        %v1998 = vpack.c.b16 %v1982, %v1982
        %v1999 = vpack.c.b16 %v1983, %v1983
        %v2000 = vpack.c.b16 %v1984, %v1984
        %v2001 = vpack.c.b16 %v1985, %v1985
        %v2002 = vpack.c.b16 %v1986, %v1986
        %v2003 = vpack.c.b16 %v1987, %v1987
        %v2004 = vpack.c.b16 %v1988, %v1988
        %v2005 = vpack.c.b16 %v1989, %v1989
        %v2007 = vshrl.u32 %v1942, 16
        %v2009 = vshll.u32 %v1942, 16
        %v2011 = vrot.slane %v2009, 1
        %v2012 = vor.u32 %v2007, %v2011
        %v2014 = vshll.u32 %v1990, 16
        %v2016 = vrot.slane %v2014, 1
        %v2017 = vsel %vm1106, %v2012, %v2016
        %v2019 = vshrl.u32 %v1943, 16
        %v2021 = vshll.u32 %v1943, 16
        %v2023 = vrot.slane %v2021, 1
        %v2024 = vor.u32 %v2019, %v2023
        %v2026 = vshll.u32 %v1991, 16
        %v2028 = vrot.slane %v2026, 1
        %v2029 = vsel %vm1106, %v2024, %v2028
        %v2031 = vshrl.u32 %v1944, 16
        %v2033 = vshll.u32 %v1944, 16
        %v2035 = vrot.slane %v2033, 1
        %v2036 = vor.u32 %v2031, %v2035
        %v2038 = vshll.u32 %v1992, 16
        %v2040 = vrot.slane %v2038, 1
        %v2041 = vsel %vm1106, %v2036, %v2040
        %v2043 = vshrl.u32 %v1945, 16
        %v2045 = vshll.u32 %v1945, 16
        %v2047 = vrot.slane %v2045, 1
        %v2048 = vor.u32 %v2043, %v2047
        %v2050 = vshll.u32 %v1993, 16
        %v2052 = vrot.slane %v2050, 1
        %v2053 = vsel %vm1106, %v2048, %v2052
        %v2055 = vshrl.u32 %v1946, 16
        %v2057 = vshll.u32 %v1946, 16
        %v2059 = vrot.slane %v2057, 1
        %v2060 = vor.u32 %v2055, %v2059
        %v2062 = vshll.u32 %v1994, 16
        %v2064 = vrot.slane %v2062, 1
        %v2065 = vsel %vm1106, %v2060, %v2064
        %v2067 = vshrl.u32 %v1947, 16
        %v2069 = vshll.u32 %v1947, 16
        %v2071 = vrot.slane %v2069, 1
        %v2072 = vor.u32 %v2067, %v2071
        %v2074 = vshll.u32 %v1995, 16
        %v2076 = vrot.slane %v2074, 1
        %v2077 = vsel %vm1106, %v2072, %v2076
        %v2079 = vshrl.u32 %v1948, 16
        %v2081 = vshll.u32 %v1948, 16
        %v2083 = vrot.slane %v2081, 1
        %v2084 = vor.u32 %v2079, %v2083
        %v2086 = vshll.u32 %v1996, 16
        %v2088 = vrot.slane %v2086, 1
        %v2089 = vsel %vm1106, %v2084, %v2088
        %v2091 = vshrl.u32 %v1949, 16
        %v2093 = vshll.u32 %v1949, 16
        %v2095 = vrot.slane %v2093, 1
        %v2096 = vor.u32 %v2091, %v2095
        %v2098 = vshll.u32 %v1997, 16
        %v2100 = vrot.slane %v2098, 1
        %v2101 = vsel %vm1106, %v2096, %v2100
        %v2103 = vshrl.u32 %v1950, 16
        %v2105 = vshll.u32 %v1950, 16
        %v2107 = vrot.slane %v2105, 1
        %v2108 = vor.u32 %v2103, %v2107
        %v2110 = vshll.u32 %v1998, 16
        %v2112 = vrot.slane %v2110, 1
        %v2113 = vsel %vm1106, %v2108, %v2112
        %v2115 = vshrl.u32 %v1951, 16
        %v2117 = vshll.u32 %v1951, 16
        %v2119 = vrot.slane %v2117, 1
        %v2120 = vor.u32 %v2115, %v2119
        %v2122 = vshll.u32 %v1999, 16
        %v2124 = vrot.slane %v2122, 1
        %v2125 = vsel %vm1106, %v2120, %v2124
        %v2127 = vshrl.u32 %v1952, 16
        %v2129 = vshll.u32 %v1952, 16
        %v2131 = vrot.slane %v2129, 1
        %v2132 = vor.u32 %v2127, %v2131
        %v2134 = vshll.u32 %v2000, 16
        %v2136 = vrot.slane %v2134, 1
        %v2137 = vsel %vm1106, %v2132, %v2136
        %v2139 = vshrl.u32 %v1953, 16
        %v2141 = vshll.u32 %v1953, 16
        %v2143 = vrot.slane %v2141, 1
        %v2144 = vor.u32 %v2139, %v2143
        %v2146 = vshll.u32 %v2001, 16
        %v2148 = vrot.slane %v2146, 1
        %v2149 = vsel %vm1106, %v2144, %v2148
        %v2151 = vshrl.u32 %v1954, 16
        %v2153 = vshll.u32 %v1954, 16
        %v2155 = vrot.slane %v2153, 1
        %v2156 = vor.u32 %v2151, %v2155
        %v2158 = vshll.u32 %v2002, 16
        %v2160 = vrot.slane %v2158, 1
        %v2161 = vsel %vm1106, %v2156, %v2160
        %v2163 = vshrl.u32 %v1955, 16
        %v2165 = vshll.u32 %v1955, 16
        %v2167 = vrot.slane %v2165, 1
        %v2168 = vor.u32 %v2163, %v2167
        %v2170 = vshll.u32 %v2003, 16
        %v2172 = vrot.slane %v2170, 1
        %v2173 = vsel %vm1106, %v2168, %v2172
        %v2175 = vshrl.u32 %v1956, 16
        %v2177 = vshll.u32 %v1956, 16
        %v2179 = vrot.slane %v2177, 1
        %v2180 = vor.u32 %v2175, %v2179
        %v2182 = vshll.u32 %v2004, 16
        %v2184 = vrot.slane %v2182, 1
        %v2185 = vsel %vm1106, %v2180, %v2184
        %v2187 = vshrl.u32 %v1957, 16
        %v2189 = vshll.u32 %v1957, 16
        %v2191 = vrot.slane %v2189, 1
        %v2192 = vor.u32 %v2187, %v2191
        %v2194 = vshll.u32 %v2005, 16
        %v2196 = vrot.slane %v2194, 1
        %v2197 = vsel %vm1106, %v2192, %v2196
        %2198 = vrot.lane.b32.xlu0 %v2017, 64
        %v2199 = vpop.permute.xlu0 %2198
        %2200 = vrot.lane.b32.xlu0 %v2029, 64
        %v2201 = vpop.permute.xlu0 %2200
        %2202 = vrot.lane.b32.xlu0 %v2041, 64
        %v2203 = vpop.permute.xlu0 %2202
        %2204 = vrot.lane.b32.xlu0 %v2053, 64
        %v2205 = vpop.permute.xlu0 %2204
        %2206 = vrot.lane.b32.xlu0 %v2065, 64
        %v2207 = vpop.permute.xlu0 %2206
        %2208 = vrot.lane.b32.xlu0 %v2077, 64
        %v2209 = vpop.permute.xlu0 %2208
        %2210 = vrot.lane.b32.xlu0 %v2089, 64
        %v2211 = vpop.permute.xlu0 %2210
        %2212 = vrot.lane.b32.xlu0 %v2101, 64
        %v2213 = vpop.permute.xlu0 %2212
        %2214 = vrot.lane.b32.xlu0 %v2113, 64
        %v2215 = vpop.permute.xlu0 %2214
        %2216 = vrot.lane.b32.xlu0 %v2125, 64
        %v2217 = vpop.permute.xlu0 %2216
        %2218 = vrot.lane.b32.xlu0 %v2137, 64
        %v2219 = vpop.permute.xlu0 %2218
        %2220 = vrot.lane.b32.xlu0 %v2149, 64
        %v2221 = vpop.permute.xlu0 %2220
        %2222 = vrot.lane.b32.xlu0 %v2161, 64
        %v2223 = vpop.permute.xlu0 %2222
        %2224 = vrot.lane.b32.xlu0 %v2173, 64
        %v2225 = vpop.permute.xlu0 %2224
        %2226 = vrot.lane.b32.xlu0 %v2185, 64
        %v2227 = vpop.permute.xlu0 %2226
        %2228 = vrot.lane.b32.xlu0 %v2197, 64
        %v2229 = vpop.permute.xlu0 %2228
        %v2246 = vunpack.c.l.b16 %v1862
        %v2247 = vunpack.c.l.b16 %v1863
        %v2248 = vunpack.c.l.b16 %v1864
        %v2249 = vunpack.c.l.b16 %v1865
        %v2250 = vunpack.c.l.b16 %v1866
        %v2251 = vunpack.c.l.b16 %v1867
        %v2252 = vunpack.c.l.b16 %v1868
        %v2253 = vunpack.c.l.b16 %v1869
        %v2254 = vunpack.c.l.b16 %v1870
        %v2255 = vunpack.c.l.b16 %v1871
        %v2256 = vunpack.c.l.b16 %v1872
        %v2257 = vunpack.c.l.b16 %v1873
        %v2258 = vunpack.c.l.b16 %v1874
        %v2259 = vunpack.c.l.b16 %v1875
        %v2260 = vunpack.c.l.b16 %v1876
        %v2261 = vunpack.c.l.b16 %v1877
        %v2262 = vpack.c.b16 %v1911, %v2246
        %v2263 = vpack.c.b16 %v1913, %v2247
        %v2264 = vpack.c.b16 %v1915, %v2248
        %v2265 = vpack.c.b16 %v1917, %v2249
        %v2266 = vpack.c.b16 %v1919, %v2250
        %v2267 = vpack.c.b16 %v1921, %v2251
        %v2268 = vpack.c.b16 %v1923, %v2252
        %v2269 = vpack.c.b16 %v1925, %v2253
        %v2270 = vpack.c.b16 %v1927, %v2254
        %v2271 = vpack.c.b16 %v1929, %v2255
        %v2272 = vpack.c.b16 %v1931, %v2256
        %v2273 = vpack.c.b16 %v1933, %v2257
        %v2274 = vpack.c.b16 %v1935, %v2258
        %v2275 = vpack.c.b16 %v1937, %v2259
        %v2276 = vpack.c.b16 %v1939, %v2260
        %v2277 = vpack.c.b16 %v1941, %v2261
        %v2278 = vrot.slane %v2262, 1
        %v2279 = vrot.slane %v1990, 1
        %v2280 = vsel %vm1379, %v2278, %v2279
        %v2281 = vrot.slane %v2263, 1
        %v2282 = vrot.slane %v1991, 1
        %v2283 = vsel %vm1379, %v2281, %v2282
        %v2284 = vrot.slane %v2264, 1
        %v2285 = vrot.slane %v1992, 1
        %v2286 = vsel %vm1379, %v2284, %v2285
        %v2287 = vrot.slane %v2265, 1
        %v2288 = vrot.slane %v1993, 1
        %v2289 = vsel %vm1379, %v2287, %v2288
        %v2290 = vrot.slane %v2266, 1
        %v2291 = vrot.slane %v1994, 1
        %v2292 = vsel %vm1379, %v2290, %v2291
        %v2293 = vrot.slane %v2267, 1
        %v2294 = vrot.slane %v1995, 1
        %v2295 = vsel %vm1379, %v2293, %v2294
        %v2296 = vrot.slane %v2268, 1
        %v2297 = vrot.slane %v1996, 1
        %v2298 = vsel %vm1379, %v2296, %v2297
        %v2299 = vrot.slane %v2269, 1
        %v2300 = vrot.slane %v1997, 1
        %v2301 = vsel %vm1379, %v2299, %v2300
        %v2302 = vrot.slane %v2270, 1
        %v2303 = vrot.slane %v1998, 1
        %v2304 = vsel %vm1379, %v2302, %v2303
        %v2305 = vrot.slane %v2271, 1
        %v2306 = vrot.slane %v1999, 1
        %v2307 = vsel %vm1379, %v2305, %v2306
        %v2308 = vrot.slane %v2272, 1
        %v2309 = vrot.slane %v2000, 1
        %v2310 = vsel %vm1379, %v2308, %v2309
        %v2311 = vrot.slane %v2273, 1
        %v2312 = vrot.slane %v2001, 1
        %v2313 = vsel %vm1379, %v2311, %v2312
        %v2314 = vrot.slane %v2274, 1
        %v2315 = vrot.slane %v2002, 1
        %v2316 = vsel %vm1379, %v2314, %v2315
        %v2317 = vrot.slane %v2275, 1
        %v2318 = vrot.slane %v2003, 1
        %v2319 = vsel %vm1379, %v2317, %v2318
        %v2320 = vrot.slane %v2276, 1
        %v2321 = vrot.slane %v2004, 1
        %v2322 = vsel %vm1379, %v2320, %v2321
        %v2323 = vrot.slane %v2277, 1
        %v2324 = vrot.slane %v2005, 1
        %v2325 = vsel %vm1379, %v2323, %v2324
        %v2327 = vsel %vm1428, %v1942, %v2199
        %v2330 = vsel %vm1428, %v1943, %v2201
        %v2333 = vsel %vm1428, %v1944, %v2203
        %v2336 = vsel %vm1428, %v1945, %v2205
        %v2339 = vsel %vm1428, %v1946, %v2207
        %v2342 = vsel %vm1428, %v1947, %v2209
        %v2345 = vsel %vm1428, %v1948, %v2211
        %v2348 = vsel %vm1428, %v1949, %v2213
        %v2351 = vsel %vm1428, %v1950, %v2215
        %v2354 = vsel %vm1428, %v1951, %v2217
        %v2357 = vsel %vm1428, %v1952, %v2219
        %v2360 = vsel %vm1428, %v1953, %v2221
        %v2363 = vsel %vm1428, %v1954, %v2223
        %v2366 = vsel %vm1428, %v1955, %v2225
        %v2369 = vsel %vm1428, %v1956, %v2227
        %v2372 = vsel %vm1428, %v1957, %v2229
        %s2374 = scalar_lea.vmem %s1, 96
        %v2375 = vld [vmem:[%s2374] sm:$0xf]
        %v2376 = vld [vmem:[%s2374 + $0x4] sm:$0xf]
        %v2377 = vld [vmem:[%s2374 + $0x8] sm:$0xf]
        %v2378 = vld [vmem:[%s2374 + $0xc] sm:$0xf]
        %v2379 = vld [vmem:[%s2374 + $0x10] sm:$0xf]
        %v2380 = vld [vmem:[%s2374 + $0x14] sm:$0xf]
        %v2381 = vld [vmem:[%s2374 + $0x18] sm:$0xf]
        %v2382 = vld [vmem:[%s2374 + $0x1c] sm:$0xf]
        %v2383 = vld [vmem:[%s2374 + $0x20] sm:$0xf]
        %v2384 = vld [vmem:[%s2374 + $0x24] sm:$0xf]
        %v2385 = vld [vmem:[%s2374 + $0x28] sm:$0xf]
        %v2386 = vld [vmem:[%s2374 + $0x2c] sm:$0xf]
        %v2387 = vld [vmem:[%s2374 + $0x30] sm:$0xf]
        %v2388 = vld [vmem:[%s2374 + $0x34] sm:$0xf]
        %v2389 = vld [vmem:[%s2374 + $0x38] sm:$0xf]
        %v2390 = vld [vmem:[%s2374 + $0x3c] sm:$0xf]
        %v2391 = vld [vmem:[%s2374 + $0x40] sm:$0xf]
        %v2392 = vld [vmem:[%s2374 + $0x44] sm:$0xf]
        %v2393 = vld [vmem:[%s2374 + $0x48] sm:$0xf]
        %v2394 = vld [vmem:[%s2374 + $0x4c] sm:$0xf]
        %v2395 = vld [vmem:[%s2374 + $0x50] sm:$0xf]
        %v2396 = vld [vmem:[%s2374 + $0x54] sm:$0xf]
        %v2397 = vld [vmem:[%s2374 + $0x58] sm:$0xf]
        %v2398 = vld [vmem:[%s2374 + $0x5c] sm:$0xf]
        %v2423 = vunpack.c.l.b16 %v2375
        %v2424 = vunpack.c.l.b16 %v2376
        %v2425 = vunpack.c.l.b16 %v2377
        %v2426 = vunpack.c.l.b16 %v2378
        %v2427 = vunpack.c.l.b16 %v2379
        %v2428 = vunpack.c.l.b16 %v2380
        %v2429 = vunpack.c.l.b16 %v2381
        %v2430 = vunpack.c.l.b16 %v2382
        %v2431 = vunpack.c.l.b16 %v2383
        %v2432 = vunpack.c.l.b16 %v2384
        %v2433 = vunpack.c.l.b16 %v2385
        %v2434 = vunpack.c.l.b16 %v2386
        %v2435 = vunpack.c.l.b16 %v2387
        %v2436 = vunpack.c.l.b16 %v2388
        %v2437 = vunpack.c.l.b16 %v2389
        %v2438 = vunpack.c.l.b16 %v2390
        %v2439 = vunpack.c.l.b16 %v2391
        %v2440 = vunpack.c.l.b16 %v2392
        %v2441 = vunpack.c.l.b16 %v2393
        %v2442 = vunpack.c.l.b16 %v2394
        %v2443 = vunpack.c.l.b16 %v2395
        %v2444 = vunpack.c.l.b16 %v2396
        %v2445 = vunpack.c.l.b16 %v2397
        %v2446 = vunpack.c.l.b16 %v2398
        %v2447 = vpack.c.b16 %v2424, %v2423
        %v2448 = vpack.c.b16 %v2426, %v2425
        %v2449 = vpack.c.b16 %v2428, %v2427
        %v2450 = vpack.c.b16 %v2430, %v2429
        %v2451 = vpack.c.b16 %v2432, %v2431
        %v2452 = vpack.c.b16 %v2434, %v2433
        %v2453 = vpack.c.b16 %v2436, %v2435
        %v2454 = vpack.c.b16 %v2438, %v2437
        %v2455 = vpack.c.b16 %v2440, %v2439
        %v2456 = vpack.c.b16 %v2442, %v2441
        %v2457 = vpack.c.b16 %v2444, %v2443
        %v2458 = vpack.c.b16 %v2446, %v2445
        %v2472 = vsel %vm1428, %v2280, 0
        %v2475 = vsel %vm1428, %v2283, 0
        %v2478 = vsel %vm1428, %v2286, 0
        %v2481 = vsel %vm1428, %v2289, 0
        %v2484 = vsel %vm1428, %v2292, 0
        %v2487 = vsel %vm1428, %v2295, 0
        %v2490 = vsel %vm1428, %v2298, 0
        %v2493 = vsel %vm1428, %v2301, 0
        %v2496 = vsel %vm1428, %v2304, 0
        %v2499 = vsel %vm1428, %v2307, 0
        %v2502 = vsel %vm1428, %v2310, 0
        %v2505 = vsel %vm1428, %v2313, 0
        %v2508 = vsel %vm1428, %v2316, 0
        %v2511 = vsel %vm1428, %v2319, 0
        %v2514 = vsel %vm1428, %v2322, 0
        %v2517 = vsel %vm1428, %v2325, 0
        %2519 = vmatprep.subr.bf16.mxu0 0
        %2520 = vmatpush1.bf16.msra.mxu0 %v2454
        %2521 = vmatprep.subr.bf16.mxu0 0
        %2522 = vmatpush1.bf16.msra.mxu0 %v2453
        %2523 = vmatprep.subr.bf16.mxu0 0
        %2524 = vmatpush1.bf16.msra.mxu0 %v2452
        %2525 = vmatprep.subr.bf16.mxu0 0
        %2526 = vmatpush1.bf16.msra.mxu0 %v2451
        %2527 = vmatprep.subr.bf16.mxu0 0
        %2528 = vmatpush1.bf16.msra.mxu0 %v2450
        %2529 = vmatprep.subr.bf16.mxu0 0
        %2530 = vmatpush1.bf16.msra.mxu0 %v2449
        %2531 = vmatprep.subr.bf16.mxu0 0
        %2532 = vmatpush1.bf16.msra.mxu0 %v2448
        %2533 = vmatprep.subr.bf16.mxu0 0
        %2534 = vmatpush1.bf16.msra.mxu0 %v2447
        %2535 = vmatprep.subr.bf16.mxu0 0
        %2536 = vmatpush2.bf16.msra.mxu0 0
        %2537 = vmatprep.subr.bf16.mxu0 0
        %2538 = vmatpush2.bf16.msra.mxu0 0
        %2539 = vmatprep.subr.bf16.mxu0 0
        %2540 = vmatpush2.bf16.msra.mxu0 0
        %2541 = vmatprep.subr.bf16.mxu0 0
        %2542 = vmatpush2.bf16.msra.mxu0 0
        %2543 = vmatprep.subr.bf16.mxu0 0
        %2544 = vmatpush2.bf16.msra.mxu0 %v2458
        %2545 = vmatprep.subr.bf16.mxu0 0
        %2546 = vmatpush2.bf16.msra.mxu0 %v2457
        %2547 = vmatprep.subr.bf16.mxu0 0
        %2548 = vmatpush2.bf16.msra.mxu0 %v2456
        %2549 = vmatprep.subr.bf16.mxu0 0
        %2550 = vmatpush2.bf16.msra.mxu0 %v2455
        %2551 = vmatprep.mubr.bf16.mxu0 %v2472
        %2552 = vmatmul.mubr.bf16.gmra.mxu0 %v2327
        %v2553 = vpop.f32.mrf.mxu0
        %v2554 = vadd.f32 0.0, %v2553
        %v2555 = vpop.f32.mrf.mxu0
        %v2556 = vpop.f32.mrf.mxu0
        %v2557 = vadd.f32 0.0, %v2556
        %v2558 = vpop.f32.mrf.mxu0
        %2559 = vmatprep.mubr.bf16.mxu0 %v2475
        %2560 = vmatmul.mubr.bf16.gmra.mxu0 %v2330
        %v2561 = vpop.f32.mrf.mxu0
        %v2562 = vadd.f32 0.0, %v2561
        %v2563 = vpop.f32.mrf.mxu0
        %v2564 = vpop.f32.mrf.mxu0
        %v2565 = vadd.f32 0.0, %v2564
        %v2566 = vpop.f32.mrf.mxu0
        %2567 = vmatprep.mubr.bf16.mxu0 %v2478
        %2568 = vmatmul.mubr.bf16.gmra.mxu0 %v2333
        %v2569 = vpop.f32.mrf.mxu0
        %v2570 = vadd.f32 0.0, %v2569
        %v2571 = vpop.f32.mrf.mxu0
        %v2572 = vpop.f32.mrf.mxu0
        %v2573 = vadd.f32 0.0, %v2572
        %v2574 = vpop.f32.mrf.mxu0
        %2575 = vmatprep.mubr.bf16.mxu0 %v2481
        %2576 = vmatmul.mubr.bf16.gmra.mxu0 %v2336
        %v2577 = vpop.f32.mrf.mxu0
        %v2578 = vadd.f32 0.0, %v2577
        %v2579 = vpop.f32.mrf.mxu0
        %v2580 = vpop.f32.mrf.mxu0
        %v2581 = vadd.f32 0.0, %v2580
        %v2582 = vpop.f32.mrf.mxu0
        %2583 = vmatprep.mubr.bf16.mxu0 %v2484
        %2584 = vmatmul.mubr.bf16.gmra.mxu0 %v2339
        %v2585 = vpop.f32.mrf.mxu0
        %v2586 = vadd.f32 0.0, %v2585
        %v2587 = vpop.f32.mrf.mxu0
        %v2588 = vpop.f32.mrf.mxu0
        %v2589 = vadd.f32 0.0, %v2588
        %v2590 = vpop.f32.mrf.mxu0
        %2591 = vmatprep.mubr.bf16.mxu0 %v2487
        %2592 = vmatmul.mubr.bf16.gmra.mxu0 %v2342
        %v2593 = vpop.f32.mrf.mxu0
        %v2594 = vadd.f32 0.0, %v2593
        %v2595 = vpop.f32.mrf.mxu0
        %v2596 = vpop.f32.mrf.mxu0
        %v2597 = vadd.f32 0.0, %v2596
        %v2598 = vpop.f32.mrf.mxu0
        %2599 = vmatprep.mubr.bf16.mxu0 %v2490
        %2600 = vmatmul.mubr.bf16.gmra.mxu0 %v2345
        %v2601 = vpop.f32.mrf.mxu0
        %v2602 = vadd.f32 0.0, %v2601
        %v2603 = vpop.f32.mrf.mxu0
        %v2604 = vpop.f32.mrf.mxu0
        %v2605 = vadd.f32 0.0, %v2604
        %v2606 = vpop.f32.mrf.mxu0
        %2607 = vmatprep.mubr.bf16.mxu0 %v2493
        %2608 = vmatmul.mubr.bf16.gmra.mxu0 %v2348
        %v2609 = vpop.f32.mrf.mxu0
        %v2610 = vadd.f32 0.0, %v2609
        %v2611 = vpop.f32.mrf.mxu0
        %v2612 = vpop.f32.mrf.mxu0
        %v2613 = vadd.f32 0.0, %v2612
        %v2614 = vpop.f32.mrf.mxu0
        %2615 = vmatprep.mubr.bf16.mxu0 %v2496
        %2616 = vmatmul.mubr.bf16.gmra.mxu0 %v2351
        %v2617 = vpop.f32.mrf.mxu0
        %v2618 = vadd.f32 0.0, %v2617
        %v2619 = vpop.f32.mrf.mxu0
        %v2620 = vpop.f32.mrf.mxu0
        %v2621 = vadd.f32 0.0, %v2620
        %v2622 = vpop.f32.mrf.mxu0
        %2623 = vmatprep.mubr.bf16.mxu0 %v2499
        %2624 = vmatmul.mubr.bf16.gmra.mxu0 %v2354
        %v2625 = vpop.f32.mrf.mxu0
        %v2626 = vadd.f32 0.0, %v2625
        %v2627 = vpop.f32.mrf.mxu0
        %v2628 = vpop.f32.mrf.mxu0
        %v2629 = vadd.f32 0.0, %v2628
        %v2630 = vpop.f32.mrf.mxu0
        %2631 = vmatprep.mubr.bf16.mxu0 %v2502
        %2632 = vmatmul.mubr.bf16.gmra.mxu0 %v2357
        %v2633 = vpop.f32.mrf.mxu0
        %v2634 = vadd.f32 0.0, %v2633
        %v2635 = vpop.f32.mrf.mxu0
        %v2636 = vpop.f32.mrf.mxu0
        %v2637 = vadd.f32 0.0, %v2636
        %v2638 = vpop.f32.mrf.mxu0
        %2639 = vmatprep.mubr.bf16.mxu0 %v2505
        %2640 = vmatmul.mubr.bf16.gmra.mxu0 %v2360
        %v2641 = vpop.f32.mrf.mxu0
        %v2642 = vadd.f32 0.0, %v2641
        %v2643 = vpop.f32.mrf.mxu0
        %v2644 = vpop.f32.mrf.mxu0
        %v2645 = vadd.f32 0.0, %v2644
        %v2646 = vpop.f32.mrf.mxu0
        %2647 = vmatprep.mubr.bf16.mxu0 %v2508
        %2648 = vmatmul.mubr.bf16.gmra.mxu0 %v2363
        %v2649 = vpop.f32.mrf.mxu0
        %v2650 = vadd.f32 0.0, %v2649
        %v2651 = vpop.f32.mrf.mxu0
        %v2652 = vpop.f32.mrf.mxu0
        %v2653 = vadd.f32 0.0, %v2652
        %v2654 = vpop.f32.mrf.mxu0
        %2655 = vmatprep.mubr.bf16.mxu0 %v2511
        %2656 = vmatmul.mubr.bf16.gmra.mxu0 %v2366
        %v2657 = vpop.f32.mrf.mxu0
        %v2658 = vadd.f32 0.0, %v2657
        %v2659 = vpop.f32.mrf.mxu0
        %v2660 = vpop.f32.mrf.mxu0
        %v2661 = vadd.f32 0.0, %v2660
        %v2662 = vpop.f32.mrf.mxu0
        %2663 = vmatprep.mubr.bf16.mxu0 %v2514
        %2664 = vmatmul.mubr.bf16.gmra.mxu0 %v2369
        %v2665 = vpop.f32.mrf.mxu0
        %v2666 = vadd.f32 0.0, %v2665
        %v2667 = vpop.f32.mrf.mxu0
        %v2668 = vpop.f32.mrf.mxu0
        %v2669 = vadd.f32 0.0, %v2668
        %v2670 = vpop.f32.mrf.mxu0
        %2671 = vmatprep.mubr.bf16.mxu0 %v2517
        %2672 = vmatmul.mubr.bf16.gmra.mxu0 %v2372
        %v2673 = vpop.f32.mrf.mxu0
        %v2674 = vadd.f32 0.0, %v2673
        %v2675 = vpop.f32.mrf.mxu0
        %v2676 = vpop.f32.mrf.mxu0
        %v2677 = vadd.f32 0.0, %v2676
        %v2678 = vpop.f32.mrf.mxu0
        %2679 = vdwg.mxu0
        %v2680 = vadd.f32 %v1782, %v2554
        %v2681 = vadd.f32 %v1783, %v2557
        %v2682 = vadd.f32 %v1784, %v2562
        %v2683 = vadd.f32 %v1785, %v2565
        %v2684 = vadd.f32 %v1786, %v2570
        %v2685 = vadd.f32 %v1787, %v2573
        %v2686 = vadd.f32 %v1788, %v2578
        %v2687 = vadd.f32 %v1789, %v2581
        %v2688 = vadd.f32 %v1790, %v2586
        %v2689 = vadd.f32 %v1791, %v2589
        %v2690 = vadd.f32 %v1792, %v2594
        %v2691 = vadd.f32 %v1793, %v2597
        %v2692 = vadd.f32 %v1794, %v2602
        %v2693 = vadd.f32 %v1795, %v2605
        %v2694 = vadd.f32 %v1796, %v2610
        %v2695 = vadd.f32 %v1797, %v2613
        %v2696 = vadd.f32 %v1798, %v2618
        %v2697 = vadd.f32 %v1799, %v2621
        %v2698 = vadd.f32 %v1800, %v2626
        %v2699 = vadd.f32 %v1801, %v2629
        %v2700 = vadd.f32 %v1802, %v2634
        %v2701 = vadd.f32 %v1803, %v2637
        %v2702 = vadd.f32 %v1804, %v2642
        %v2703 = vadd.f32 %v1805, %v2645
        %v2704 = vadd.f32 %v1806, %v2650
        %v2705 = vadd.f32 %v1807, %v2653
        %v2706 = vadd.f32 %v1808, %v2658
        %v2707 = vadd.f32 %v1809, %v2661
        %v2708 = vadd.f32 %v1810, %v2666
        %v2709 = vadd.f32 %v1811, %v2669
        %v2710 = vadd.f32 %v1812, %v2674
        %v2711 = vadd.f32 %v1813, %v2677
        %s2712 = scalar_lea.vmem [#allocation2], 24
        %v2713 = vld [vmem:[%s2712] sm:$0xf]
        %v2714 = vld [vmem:[%s2712 + $0x4] sm:$0xf]
        %v2715 = vld [vmem:[%s2712 + $0xc] sm:$0xf]
        %v2716 = vld [vmem:[%s2712 + $0x10] sm:$0xf]
        %v2717 = vld [vmem:[%s2712 + $0x18] sm:$0xf]
        %v2718 = vld [vmem:[%s2712 + $0x1c] sm:$0xf]
        %v2719 = vld [vmem:[%s2712 + $0x24] sm:$0xf]
        %v2720 = vld [vmem:[%s2712 + $0x28] sm:$0xf]
        %v2721 = vld [vmem:[%s2712 + $0x30] sm:$0xf]
        %v2722 = vld [vmem:[%s2712 + $0x34] sm:$0xf]
        %v2723 = vld [vmem:[%s2712 + $0x3c] sm:$0xf]
        %v2724 = vld [vmem:[%s2712 + $0x40] sm:$0xf]
        %v2725 = vld [vmem:[%s2712 + $0x48] sm:$0xf]
        %v2726 = vld [vmem:[%s2712 + $0x4c] sm:$0xf]
        %v2727 = vld [vmem:[%s2712 + $0x54] sm:$0xf]
        %v2728 = vld [vmem:[%s2712 + $0x58] sm:$0xf]
        %v2729 = vld [vmem:[%s2712 + $0x60] sm:$0xf]
        %v2730 = vld [vmem:[%s2712 + $0x64] sm:$0xf]
        %v2731 = vld [vmem:[%s2712 + $0x6c] sm:$0xf]
        %v2732 = vld [vmem:[%s2712 + $0x70] sm:$0xf]
        %v2733 = vld [vmem:[%s2712 + $0x78] sm:$0xf]
        %v2734 = vld [vmem:[%s2712 + $0x7c] sm:$0xf]
        %v2735 = vld [vmem:[%s2712 + $0x84] sm:$0xf]
        %v2736 = vld [vmem:[%s2712 + $0x88] sm:$0xf]
        %v2737 = vld [vmem:[%s2712 + $0x90] sm:$0xf]
        %v2738 = vld [vmem:[%s2712 + $0x94] sm:$0xf]
        %v2739 = vld [vmem:[%s2712 + $0x9c] sm:$0xf]
        %v2740 = vld [vmem:[%s2712 + $0xa0] sm:$0xf]
        %v2741 = vld [vmem:[%s2712 + $0xa8] sm:$0xf]
        %v2742 = vld [vmem:[%s2712 + $0xac] sm:$0xf]
        %v2743 = vld [vmem:[%s2712 + $0xb4] sm:$0xf]
        %v2744 = vld [vmem:[%s2712 + $0xb8] sm:$0xf]
        %v2745 = vld [vmem:[%s2712 + $0x8] sm:$0x1]
        %v2746 = vld [vmem:[%s2712 + $0x14] sm:$0x1]
        %v2747 = vld [vmem:[%s2712 + $0x20] sm:$0x1]
        %v2748 = vld [vmem:[%s2712 + $0x2c] sm:$0x1]
        %v2749 = vld [vmem:[%s2712 + $0x38] sm:$0x1]
        %v2750 = vld [vmem:[%s2712 + $0x44] sm:$0x1]
        %v2751 = vld [vmem:[%s2712 + $0x50] sm:$0x1]
        %v2752 = vld [vmem:[%s2712 + $0x5c] sm:$0x1]
        %v2753 = vld [vmem:[%s2712 + $0x68] sm:$0x1]
        %v2754 = vld [vmem:[%s2712 + $0x74] sm:$0x1]
        %v2755 = vld [vmem:[%s2712 + $0x80] sm:$0x1]
        %v2756 = vld [vmem:[%s2712 + $0x8c] sm:$0x1]
        %v2757 = vld [vmem:[%s2712 + $0x98] sm:$0x1]
        %v2758 = vld [vmem:[%s2712 + $0xa4] sm:$0x1]
        %v2759 = vld [vmem:[%s2712 + $0xb0] sm:$0x1]
        %v2760 = vld [vmem:[%s2712 + $0xbc] sm:$0x1]
        %v2761 = vld [vmem:[%s2712] sm:$0xe]
        %v2762 = vld [vmem:[%s2712 + $0xc] sm:$0xe]
        %v2763 = vld [vmem:[%s2712 + $0x18] sm:$0xe]
        %v2764 = vld [vmem:[%s2712 + $0x24] sm:$0xe]
        %v2765 = vld [vmem:[%s2712 + $0x30] sm:$0xe]
        %v2766 = vld [vmem:[%s2712 + $0x3c] sm:$0xe]
        %v2767 = vld [vmem:[%s2712 + $0x48] sm:$0xe]
        %v2768 = vld [vmem:[%s2712 + $0x54] sm:$0xe]
        %v2769 = vld [vmem:[%s2712 + $0x60] sm:$0xe]
        %v2770 = vld [vmem:[%s2712 + $0x6c] sm:$0xe]
        %v2771 = vld [vmem:[%s2712 + $0x78] sm:$0xe]
        %v2772 = vld [vmem:[%s2712 + $0x84] sm:$0xe]
        %v2773 = vld [vmem:[%s2712 + $0x90] sm:$0xe]
        %v2774 = vld [vmem:[%s2712 + $0x9c] sm:$0xe]
        %v2775 = vld [vmem:[%s2712 + $0xa8] sm:$0xe]
        %v2776 = vld [vmem:[%s2712 + $0xb4] sm:$0xe]
        %v2809 = vunpack.c.l.b16 %v2713
        %v2810 = vunpack.c.l.b16 %v2714
        %v2811 = vunpack.c.l.b16 %v2715
        %v2812 = vunpack.c.l.b16 %v2716
        %v2813 = vunpack.c.l.b16 %v2717
        %v2814 = vunpack.c.l.b16 %v2718
        %v2815 = vunpack.c.l.b16 %v2719
        %v2816 = vunpack.c.l.b16 %v2720
        %v2817 = vunpack.c.l.b16 %v2721
        %v2818 = vunpack.c.l.b16 %v2722
        %v2819 = vunpack.c.l.b16 %v2723
        %v2820 = vunpack.c.l.b16 %v2724
        %v2821 = vunpack.c.l.b16 %v2725
        %v2822 = vunpack.c.l.b16 %v2726
        %v2823 = vunpack.c.l.b16 %v2727
        %v2824 = vunpack.c.l.b16 %v2728
        %v2825 = vunpack.c.l.b16 %v2729
        %v2826 = vunpack.c.l.b16 %v2730
        %v2827 = vunpack.c.l.b16 %v2731
        %v2828 = vunpack.c.l.b16 %v2732
        %v2829 = vunpack.c.l.b16 %v2733
        %v2830 = vunpack.c.l.b16 %v2734
        %v2831 = vunpack.c.l.b16 %v2735
        %v2832 = vunpack.c.l.b16 %v2736
        %v2833 = vunpack.c.l.b16 %v2737
        %v2834 = vunpack.c.l.b16 %v2738
        %v2835 = vunpack.c.l.b16 %v2739
        %v2836 = vunpack.c.l.b16 %v2740
        %v2837 = vunpack.c.l.b16 %v2741
        %v2838 = vunpack.c.l.b16 %v2742
        %v2839 = vunpack.c.l.b16 %v2743
        %v2840 = vunpack.c.l.b16 %v2744
        %v2841 = vpack.c.b16 %v2810, %v2809
        %v2842 = vpack.c.b16 %v2812, %v2811
        %v2843 = vpack.c.b16 %v2814, %v2813
        %v2844 = vpack.c.b16 %v2816, %v2815
        %v2845 = vpack.c.b16 %v2818, %v2817
        %v2846 = vpack.c.b16 %v2820, %v2819
        %v2847 = vpack.c.b16 %v2822, %v2821
        %v2848 = vpack.c.b16 %v2824, %v2823
        %v2849 = vpack.c.b16 %v2826, %v2825
        %v2850 = vpack.c.b16 %v2828, %v2827
        %v2851 = vpack.c.b16 %v2830, %v2829
        %v2852 = vpack.c.b16 %v2832, %v2831
        %v2853 = vpack.c.b16 %v2834, %v2833
        %v2854 = vpack.c.b16 %v2836, %v2835
        %v2855 = vpack.c.b16 %v2838, %v2837
        %v2856 = vpack.c.b16 %v2840, %v2839
        %v2873 = vunpack.c.l.b16 %v2745
        %v2874 = vunpack.c.l.b16 %v2746
        %v2875 = vunpack.c.l.b16 %v2747
        %v2876 = vunpack.c.l.b16 %v2748
        %v2877 = vunpack.c.l.b16 %v2749
        %v2878 = vunpack.c.l.b16 %v2750
        %v2879 = vunpack.c.l.b16 %v2751
        %v2880 = vunpack.c.l.b16 %v2752
        %v2881 = vunpack.c.l.b16 %v2753
        %v2882 = vunpack.c.l.b16 %v2754
        %v2883 = vunpack.c.l.b16 %v2755
        %v2884 = vunpack.c.l.b16 %v2756
        %v2885 = vunpack.c.l.b16 %v2757
        %v2886 = vunpack.c.l.b16 %v2758
        %v2887 = vunpack.c.l.b16 %v2759
        %v2888 = vunpack.c.l.b16 %v2760
        %v2889 = vpack.c.b16 %v2873, %v2873
        %v2890 = vpack.c.b16 %v2874, %v2874
        %v2891 = vpack.c.b16 %v2875, %v2875
        %v2892 = vpack.c.b16 %v2876, %v2876
        %v2893 = vpack.c.b16 %v2877, %v2877
        %v2894 = vpack.c.b16 %v2878, %v2878
        %v2895 = vpack.c.b16 %v2879, %v2879
        %v2896 = vpack.c.b16 %v2880, %v2880
        %v2897 = vpack.c.b16 %v2881, %v2881
        %v2898 = vpack.c.b16 %v2882, %v2882
        %v2899 = vpack.c.b16 %v2883, %v2883
        %v2900 = vpack.c.b16 %v2884, %v2884
        %v2901 = vpack.c.b16 %v2885, %v2885
        %v2902 = vpack.c.b16 %v2886, %v2886
        %v2903 = vpack.c.b16 %v2887, %v2887
        %v2904 = vpack.c.b16 %v2888, %v2888
        %v2906 = vshrl.u32 %v2841, 16
        %v2908 = vshll.u32 %v2841, 16
        %v2910 = vrot.slane %v2908, 1
        %v2911 = vor.u32 %v2906, %v2910
        %v2913 = vshll.u32 %v2889, 16
        %v2915 = vrot.slane %v2913, 1
        %v2916 = vsel %vm1106, %v2911, %v2915
        %v2918 = vshrl.u32 %v2842, 16
        %v2920 = vshll.u32 %v2842, 16
        %v2922 = vrot.slane %v2920, 1
        %v2923 = vor.u32 %v2918, %v2922
        %v2925 = vshll.u32 %v2890, 16
        %v2927 = vrot.slane %v2925, 1
        %v2928 = vsel %vm1106, %v2923, %v2927
        %v2930 = vshrl.u32 %v2843, 16
        %v2932 = vshll.u32 %v2843, 16
        %v2934 = vrot.slane %v2932, 1
        %v2935 = vor.u32 %v2930, %v2934
        %v2937 = vshll.u32 %v2891, 16
        %v2939 = vrot.slane %v2937, 1
        %v2940 = vsel %vm1106, %v2935, %v2939
        %v2942 = vshrl.u32 %v2844, 16
        %v2944 = vshll.u32 %v2844, 16
        %v2946 = vrot.slane %v2944, 1
        %v2947 = vor.u32 %v2942, %v2946
        %v2949 = vshll.u32 %v2892, 16
        %v2951 = vrot.slane %v2949, 1
        %v2952 = vsel %vm1106, %v2947, %v2951
        %v2954 = vshrl.u32 %v2845, 16
        %v2956 = vshll.u32 %v2845, 16
        %v2958 = vrot.slane %v2956, 1
        %v2959 = vor.u32 %v2954, %v2958
        %v2961 = vshll.u32 %v2893, 16
        %v2963 = vrot.slane %v2961, 1
        %v2964 = vsel %vm1106, %v2959, %v2963
        %v2966 = vshrl.u32 %v2846, 16
        %v2968 = vshll.u32 %v2846, 16
        %v2970 = vrot.slane %v2968, 1
        %v2971 = vor.u32 %v2966, %v2970
        %v2973 = vshll.u32 %v2894, 16
        %v2975 = vrot.slane %v2973, 1
        %v2976 = vsel %vm1106, %v2971, %v2975
        %v2978 = vshrl.u32 %v2847, 16
        %v2980 = vshll.u32 %v2847, 16
        %v2982 = vrot.slane %v2980, 1
        %v2983 = vor.u32 %v2978, %v2982
        %v2985 = vshll.u32 %v2895, 16
        %v2987 = vrot.slane %v2985, 1
        %v2988 = vsel %vm1106, %v2983, %v2987
        %v2990 = vshrl.u32 %v2848, 16
        %v2992 = vshll.u32 %v2848, 16
        %v2994 = vrot.slane %v2992, 1
        %v2995 = vor.u32 %v2990, %v2994
        %v2997 = vshll.u32 %v2896, 16
        %v2999 = vrot.slane %v2997, 1
        %v3000 = vsel %vm1106, %v2995, %v2999
        %v3002 = vshrl.u32 %v2849, 16
        %v3004 = vshll.u32 %v2849, 16
        %v3006 = vrot.slane %v3004, 1
        %v3007 = vor.u32 %v3002, %v3006
        %v3009 = vshll.u32 %v2897, 16
        %v3011 = vrot.slane %v3009, 1
        %v3012 = vsel %vm1106, %v3007, %v3011
        %v3014 = vshrl.u32 %v2850, 16
        %v3016 = vshll.u32 %v2850, 16
        %v3018 = vrot.slane %v3016, 1
        %v3019 = vor.u32 %v3014, %v3018
        %v3021 = vshll.u32 %v2898, 16
        %v3023 = vrot.slane %v3021, 1
        %v3024 = vsel %vm1106, %v3019, %v3023
        %v3026 = vshrl.u32 %v2851, 16
        %v3028 = vshll.u32 %v2851, 16
        %v3030 = vrot.slane %v3028, 1
        %v3031 = vor.u32 %v3026, %v3030
        %v3033 = vshll.u32 %v2899, 16
        %v3035 = vrot.slane %v3033, 1
        %v3036 = vsel %vm1106, %v3031, %v3035
        %v3038 = vshrl.u32 %v2852, 16
        %v3040 = vshll.u32 %v2852, 16
        %v3042 = vrot.slane %v3040, 1
        %v3043 = vor.u32 %v3038, %v3042
        %v3045 = vshll.u32 %v2900, 16
        %v3047 = vrot.slane %v3045, 1
        %v3048 = vsel %vm1106, %v3043, %v3047
        %v3050 = vshrl.u32 %v2853, 16
        %v3052 = vshll.u32 %v2853, 16
        %v3054 = vrot.slane %v3052, 1
        %v3055 = vor.u32 %v3050, %v3054
        %v3057 = vshll.u32 %v2901, 16
        %v3059 = vrot.slane %v3057, 1
        %v3060 = vsel %vm1106, %v3055, %v3059
        %v3062 = vshrl.u32 %v2854, 16
        %v3064 = vshll.u32 %v2854, 16
        %v3066 = vrot.slane %v3064, 1
        %v3067 = vor.u32 %v3062, %v3066
        %v3069 = vshll.u32 %v2902, 16
        %v3071 = vrot.slane %v3069, 1
        %v3072 = vsel %vm1106, %v3067, %v3071
        %v3074 = vshrl.u32 %v2855, 16
        %v3076 = vshll.u32 %v2855, 16
        %v3078 = vrot.slane %v3076, 1
        %v3079 = vor.u32 %v3074, %v3078
        %v3081 = vshll.u32 %v2903, 16
        %v3083 = vrot.slane %v3081, 1
        %v3084 = vsel %vm1106, %v3079, %v3083
        %v3086 = vshrl.u32 %v2856, 16
        %v3088 = vshll.u32 %v2856, 16
        %v3090 = vrot.slane %v3088, 1
        %v3091 = vor.u32 %v3086, %v3090
        %v3093 = vshll.u32 %v2904, 16
        %v3095 = vrot.slane %v3093, 1
        %v3096 = vsel %vm1106, %v3091, %v3095
        %3097 = vrot.lane.b32.xlu0 %v2916, 64
        %v3098 = vpop.permute.xlu0 %3097
        %3099 = vrot.lane.b32.xlu0 %v2928, 64
        %v3100 = vpop.permute.xlu0 %3099
        %3101 = vrot.lane.b32.xlu0 %v2940, 64
        %v3102 = vpop.permute.xlu0 %3101
        %3103 = vrot.lane.b32.xlu0 %v2952, 64
        %v3104 = vpop.permute.xlu0 %3103
        %3105 = vrot.lane.b32.xlu0 %v2964, 64
        %v3106 = vpop.permute.xlu0 %3105
        %3107 = vrot.lane.b32.xlu0 %v2976, 64
        %v3108 = vpop.permute.xlu0 %3107
        %3109 = vrot.lane.b32.xlu0 %v2988, 64
        %v3110 = vpop.permute.xlu0 %3109
        %3111 = vrot.lane.b32.xlu0 %v3000, 64
        %v3112 = vpop.permute.xlu0 %3111
        %3113 = vrot.lane.b32.xlu0 %v3012, 64
        %v3114 = vpop.permute.xlu0 %3113
        %3115 = vrot.lane.b32.xlu0 %v3024, 64
        %v3116 = vpop.permute.xlu0 %3115
        %3117 = vrot.lane.b32.xlu0 %v3036, 64
        %v3118 = vpop.permute.xlu0 %3117
        %3119 = vrot.lane.b32.xlu0 %v3048, 64
        %v3120 = vpop.permute.xlu0 %3119
        %3121 = vrot.lane.b32.xlu0 %v3060, 64
        %v3122 = vpop.permute.xlu0 %3121
        %3123 = vrot.lane.b32.xlu0 %v3072, 64
        %v3124 = vpop.permute.xlu0 %3123
        %3125 = vrot.lane.b32.xlu0 %v3084, 64
        %v3126 = vpop.permute.xlu0 %3125
        %3127 = vrot.lane.b32.xlu0 %v3096, 64
        %v3128 = vpop.permute.xlu0 %3127
        %v3145 = vunpack.c.l.b16 %v2761
        %v3146 = vunpack.c.l.b16 %v2762
        %v3147 = vunpack.c.l.b16 %v2763
        %v3148 = vunpack.c.l.b16 %v2764
        %v3149 = vunpack.c.l.b16 %v2765
        %v3150 = vunpack.c.l.b16 %v2766
        %v3151 = vunpack.c.l.b16 %v2767
        %v3152 = vunpack.c.l.b16 %v2768
        %v3153 = vunpack.c.l.b16 %v2769
        %v3154 = vunpack.c.l.b16 %v2770
        %v3155 = vunpack.c.l.b16 %v2771
        %v3156 = vunpack.c.l.b16 %v2772
        %v3157 = vunpack.c.l.b16 %v2773
        %v3158 = vunpack.c.l.b16 %v2774
        %v3159 = vunpack.c.l.b16 %v2775
        %v3160 = vunpack.c.l.b16 %v2776
        %v3161 = vpack.c.b16 %v2810, %v3145
        %v3162 = vpack.c.b16 %v2812, %v3146
        %v3163 = vpack.c.b16 %v2814, %v3147
        %v3164 = vpack.c.b16 %v2816, %v3148
        %v3165 = vpack.c.b16 %v2818, %v3149
        %v3166 = vpack.c.b16 %v2820, %v3150
        %v3167 = vpack.c.b16 %v2822, %v3151
        %v3168 = vpack.c.b16 %v2824, %v3152
        %v3169 = vpack.c.b16 %v2826, %v3153
        %v3170 = vpack.c.b16 %v2828, %v3154
        %v3171 = vpack.c.b16 %v2830, %v3155
        %v3172 = vpack.c.b16 %v2832, %v3156
        %v3173 = vpack.c.b16 %v2834, %v3157
        %v3174 = vpack.c.b16 %v2836, %v3158
        %v3175 = vpack.c.b16 %v2838, %v3159
        %v3176 = vpack.c.b16 %v2840, %v3160
        %v3177 = vrot.slane %v3161, 1
        %v3178 = vrot.slane %v2889, 1
        %v3179 = vsel %vm1379, %v3177, %v3178
        %v3180 = vrot.slane %v3162, 1
        %v3181 = vrot.slane %v2890, 1
        %v3182 = vsel %vm1379, %v3180, %v3181
        %v3183 = vrot.slane %v3163, 1
        %v3184 = vrot.slane %v2891, 1
        %v3185 = vsel %vm1379, %v3183, %v3184
        %v3186 = vrot.slane %v3164, 1
        %v3187 = vrot.slane %v2892, 1
        %v3188 = vsel %vm1379, %v3186, %v3187
        %v3189 = vrot.slane %v3165, 1
        %v3190 = vrot.slane %v2893, 1
        %v3191 = vsel %vm1379, %v3189, %v3190
        %v3192 = vrot.slane %v3166, 1
        %v3193 = vrot.slane %v2894, 1
        %v3194 = vsel %vm1379, %v3192, %v3193
        %v3195 = vrot.slane %v3167, 1
        %v3196 = vrot.slane %v2895, 1
        %v3197 = vsel %vm1379, %v3195, %v3196
        %v3198 = vrot.slane %v3168, 1
        %v3199 = vrot.slane %v2896, 1
        %v3200 = vsel %vm1379, %v3198, %v3199
        %v3201 = vrot.slane %v3169, 1
        %v3202 = vrot.slane %v2897, 1
        %v3203 = vsel %vm1379, %v3201, %v3202
        %v3204 = vrot.slane %v3170, 1
        %v3205 = vrot.slane %v2898, 1
        %v3206 = vsel %vm1379, %v3204, %v3205
        %v3207 = vrot.slane %v3171, 1
        %v3208 = vrot.slane %v2899, 1
        %v3209 = vsel %vm1379, %v3207, %v3208
        %v3210 = vrot.slane %v3172, 1
        %v3211 = vrot.slane %v2900, 1
        %v3212 = vsel %vm1379, %v3210, %v3211
        %v3213 = vrot.slane %v3173, 1
        %v3214 = vrot.slane %v2901, 1
        %v3215 = vsel %vm1379, %v3213, %v3214
        %v3216 = vrot.slane %v3174, 1
        %v3217 = vrot.slane %v2902, 1
        %v3218 = vsel %vm1379, %v3216, %v3217
        %v3219 = vrot.slane %v3175, 1
        %v3220 = vrot.slane %v2903, 1
        %v3221 = vsel %vm1379, %v3219, %v3220
        %v3222 = vrot.slane %v3176, 1
        %v3223 = vrot.slane %v2904, 1
        %v3224 = vsel %vm1379, %v3222, %v3223
        %v3226 = vsel %vm1428, %v2841, %v3098
        %v3229 = vsel %vm1428, %v2842, %v3100
        %v3232 = vsel %vm1428, %v2843, %v3102
        %v3235 = vsel %vm1428, %v2844, %v3104
        %v3238 = vsel %vm1428, %v2845, %v3106
        %v3241 = vsel %vm1428, %v2846, %v3108
        %v3244 = vsel %vm1428, %v2847, %v3110
        %v3247 = vsel %vm1428, %v2848, %v3112
        %v3250 = vsel %vm1428, %v2849, %v3114
        %v3253 = vsel %vm1428, %v2850, %v3116
        %v3256 = vsel %vm1428, %v2851, %v3118
        %v3259 = vsel %vm1428, %v2852, %v3120
        %v3262 = vsel %vm1428, %v2853, %v3122
        %v3265 = vsel %vm1428, %v2854, %v3124
        %v3268 = vsel %vm1428, %v2855, %v3126
        %v3271 = vsel %vm1428, %v2856, %v3128
        %s3273 = scalar_lea.vmem %s1, 192
        %v3274 = vld [vmem:[%s3273] sm:$0xf]
        %v3275 = vld [vmem:[%s3273 + $0x4] sm:$0xf]
        %v3276 = vld [vmem:[%s3273 + $0x8] sm:$0xf]
        %v3277 = vld [vmem:[%s3273 + $0xc] sm:$0xf]
        %v3278 = vld [vmem:[%s3273 + $0x10] sm:$0xf]
        %v3279 = vld [vmem:[%s3273 + $0x14] sm:$0xf]
        %v3280 = vld [vmem:[%s3273 + $0x18] sm:$0xf]
        %v3281 = vld [vmem:[%s3273 + $0x1c] sm:$0xf]
        %v3282 = vld [vmem:[%s3273 + $0x20] sm:$0xf]
        %v3283 = vld [vmem:[%s3273 + $0x24] sm:$0xf]
        %v3284 = vld [vmem:[%s3273 + $0x28] sm:$0xf]
        %v3285 = vld [vmem:[%s3273 + $0x2c] sm:$0xf]
        %v3286 = vld [vmem:[%s3273 + $0x30] sm:$0xf]
        %v3287 = vld [vmem:[%s3273 + $0x34] sm:$0xf]
        %v3288 = vld [vmem:[%s3273 + $0x38] sm:$0xf]
        %v3289 = vld [vmem:[%s3273 + $0x3c] sm:$0xf]
        %v3290 = vld [vmem:[%s3273 + $0x40] sm:$0xf]
        %v3291 = vld [vmem:[%s3273 + $0x44] sm:$0xf]
        %v3292 = vld [vmem:[%s3273 + $0x48] sm:$0xf]
        %v3293 = vld [vmem:[%s3273 + $0x4c] sm:$0xf]
        %v3294 = vld [vmem:[%s3273 + $0x50] sm:$0xf]
        %v3295 = vld [vmem:[%s3273 + $0x54] sm:$0xf]
        %v3296 = vld [vmem:[%s3273 + $0x58] sm:$0xf]
        %v3297 = vld [vmem:[%s3273 + $0x5c] sm:$0xf]
        %v3322 = vunpack.c.l.b16 %v3274
        %v3323 = vunpack.c.l.b16 %v3275
        %v3324 = vunpack.c.l.b16 %v3276
        %v3325 = vunpack.c.l.b16 %v3277
        %v3326 = vunpack.c.l.b16 %v3278
        %v3327 = vunpack.c.l.b16 %v3279
        %v3328 = vunpack.c.l.b16 %v3280
        %v3329 = vunpack.c.l.b16 %v3281
        %v3330 = vunpack.c.l.b16 %v3282
        %v3331 = vunpack.c.l.b16 %v3283
        %v3332 = vunpack.c.l.b16 %v3284
        %v3333 = vunpack.c.l.b16 %v3285
        %v3334 = vunpack.c.l.b16 %v3286
        %v3335 = vunpack.c.l.b16 %v3287
        %v3336 = vunpack.c.l.b16 %v3288
        %v3337 = vunpack.c.l.b16 %v3289
        %v3338 = vunpack.c.l.b16 %v3290
        %v3339 = vunpack.c.l.b16 %v3291
        %v3340 = vunpack.c.l.b16 %v3292
        %v3341 = vunpack.c.l.b16 %v3293
        %v3342 = vunpack.c.l.b16 %v3294
        %v3343 = vunpack.c.l.b16 %v3295
        %v3344 = vunpack.c.l.b16 %v3296
        %v3345 = vunpack.c.l.b16 %v3297
        %v3346 = vpack.c.b16 %v3323, %v3322
        %v3347 = vpack.c.b16 %v3325, %v3324
        %v3348 = vpack.c.b16 %v3327, %v3326
        %v3349 = vpack.c.b16 %v3329, %v3328
        %v3350 = vpack.c.b16 %v3331, %v3330
        %v3351 = vpack.c.b16 %v3333, %v3332
        %v3352 = vpack.c.b16 %v3335, %v3334
        %v3353 = vpack.c.b16 %v3337, %v3336
        %v3354 = vpack.c.b16 %v3339, %v3338
        %v3355 = vpack.c.b16 %v3341, %v3340
        %v3356 = vpack.c.b16 %v3343, %v3342
        %v3357 = vpack.c.b16 %v3345, %v3344
        %v3371 = vsel %vm1428, %v3179, 0
        %v3374 = vsel %vm1428, %v3182, 0
        %v3377 = vsel %vm1428, %v3185, 0
        %v3380 = vsel %vm1428, %v3188, 0
        %v3383 = vsel %vm1428, %v3191, 0
        %v3386 = vsel %vm1428, %v3194, 0
        %v3389 = vsel %vm1428, %v3197, 0
        %v3392 = vsel %vm1428, %v3200, 0
        %v3395 = vsel %vm1428, %v3203, 0
        %v3398 = vsel %vm1428, %v3206, 0
        %v3401 = vsel %vm1428, %v3209, 0
        %v3404 = vsel %vm1428, %v3212, 0
        %v3407 = vsel %vm1428, %v3215, 0
        %v3410 = vsel %vm1428, %v3218, 0
        %v3413 = vsel %vm1428, %v3221, 0
        %v3416 = vsel %vm1428, %v3224, 0
        %3418 = vmatprep.subr.bf16.mxu0 0
        %3419 = vmatpush1.bf16.msra.mxu0 %v3353
        %3420 = vmatprep.subr.bf16.mxu0 0
        %3421 = vmatpush1.bf16.msra.mxu0 %v3352
        %3422 = vmatprep.subr.bf16.mxu0 0
        %3423 = vmatpush1.bf16.msra.mxu0 %v3351
        %3424 = vmatprep.subr.bf16.mxu0 0
        %3425 = vmatpush1.bf16.msra.mxu0 %v3350
        %3426 = vmatprep.subr.bf16.mxu0 0
        %3427 = vmatpush1.bf16.msra.mxu0 %v3349
        %3428 = vmatprep.subr.bf16.mxu0 0
        %3429 = vmatpush1.bf16.msra.mxu0 %v3348
        %3430 = vmatprep.subr.bf16.mxu0 0
        %3431 = vmatpush1.bf16.msra.mxu0 %v3347
        %3432 = vmatprep.subr.bf16.mxu0 0
        %3433 = vmatpush1.bf16.msra.mxu0 %v3346
        %3434 = vmatprep.subr.bf16.mxu0 0
        %3435 = vmatpush2.bf16.msra.mxu0 0
        %3436 = vmatprep.subr.bf16.mxu0 0
        %3437 = vmatpush2.bf16.msra.mxu0 0
        %3438 = vmatprep.subr.bf16.mxu0 0
        %3439 = vmatpush2.bf16.msra.mxu0 0
        %3440 = vmatprep.subr.bf16.mxu0 0
        %3441 = vmatpush2.bf16.msra.mxu0 0
        %3442 = vmatprep.subr.bf16.mxu0 0
        %3443 = vmatpush2.bf16.msra.mxu0 %v3357
        %3444 = vmatprep.subr.bf16.mxu0 0
        %3445 = vmatpush2.bf16.msra.mxu0 %v3356
        %3446 = vmatprep.subr.bf16.mxu0 0
        %3447 = vmatpush2.bf16.msra.mxu0 %v3355
        %3448 = vmatprep.subr.bf16.mxu0 0
        %3449 = vmatpush2.bf16.msra.mxu0 %v3354
        %3450 = vmatprep.mubr.bf16.mxu0 %v3371
        %3451 = vmatmul.mubr.bf16.gmra.mxu0 %v3226
        %v3452 = vpop.f32.mrf.mxu0
        %v3453 = vadd.f32 0.0, %v3452
        %v3454 = vpop.f32.mrf.mxu0
        %v3455 = vpop.f32.mrf.mxu0
        %v3456 = vadd.f32 0.0, %v3455
        %v3457 = vpop.f32.mrf.mxu0
        %3458 = vmatprep.mubr.bf16.mxu0 %v3374
        %3459 = vmatmul.mubr.bf16.gmra.mxu0 %v3229
        %v3460 = vpop.f32.mrf.mxu0
        %v3461 = vadd.f32 0.0, %v3460
        %v3462 = vpop.f32.mrf.mxu0
        %v3463 = vpop.f32.mrf.mxu0
        %v3464 = vadd.f32 0.0, %v3463
        %v3465 = vpop.f32.mrf.mxu0
        %3466 = vmatprep.mubr.bf16.mxu0 %v3377
        %3467 = vmatmul.mubr.bf16.gmra.mxu0 %v3232
        %v3468 = vpop.f32.mrf.mxu0
        %v3469 = vadd.f32 0.0, %v3468
        %v3470 = vpop.f32.mrf.mxu0
        %v3471 = vpop.f32.mrf.mxu0
        %v3472 = vadd.f32 0.0, %v3471
        %v3473 = vpop.f32.mrf.mxu0
        %3474 = vmatprep.mubr.bf16.mxu0 %v3380
        %3475 = vmatmul.mubr.bf16.gmra.mxu0 %v3235
        %v3476 = vpop.f32.mrf.mxu0
        %v3477 = vadd.f32 0.0, %v3476
        %v3478 = vpop.f32.mrf.mxu0
        %v3479 = vpop.f32.mrf.mxu0
        %v3480 = vadd.f32 0.0, %v3479
        %v3481 = vpop.f32.mrf.mxu0
        %3482 = vmatprep.mubr.bf16.mxu0 %v3383
        %3483 = vmatmul.mubr.bf16.gmra.mxu0 %v3238
        %v3484 = vpop.f32.mrf.mxu0
        %v3485 = vadd.f32 0.0, %v3484
        %v3486 = vpop.f32.mrf.mxu0
        %v3487 = vpop.f32.mrf.mxu0
        %v3488 = vadd.f32 0.0, %v3487
        %v3489 = vpop.f32.mrf.mxu0
        %3490 = vmatprep.mubr.bf16.mxu0 %v3386
        %3491 = vmatmul.mubr.bf16.gmra.mxu0 %v3241
        %v3492 = vpop.f32.mrf.mxu0
        %v3493 = vadd.f32 0.0, %v3492
        %v3494 = vpop.f32.mrf.mxu0
        %v3495 = vpop.f32.mrf.mxu0
        %v3496 = vadd.f32 0.0, %v3495
        %v3497 = vpop.f32.mrf.mxu0
        %3498 = vmatprep.mubr.bf16.mxu0 %v3389
        %3499 = vmatmul.mubr.bf16.gmra.mxu0 %v3244
        %v3500 = vpop.f32.mrf.mxu0
        %v3501 = vadd.f32 0.0, %v3500
        %v3502 = vpop.f32.mrf.mxu0
        %v3503 = vpop.f32.mrf.mxu0
        %v3504 = vadd.f32 0.0, %v3503
        %v3505 = vpop.f32.mrf.mxu0
        %3506 = vmatprep.mubr.bf16.mxu0 %v3392
        %3507 = vmatmul.mubr.bf16.gmra.mxu0 %v3247
        %v3508 = vpop.f32.mrf.mxu0
        %v3509 = vadd.f32 0.0, %v3508
        %v3510 = vpop.f32.mrf.mxu0
        %v3511 = vpop.f32.mrf.mxu0
        %v3512 = vadd.f32 0.0, %v3511
        %v3513 = vpop.f32.mrf.mxu0
        %3514 = vmatprep.mubr.bf16.mxu0 %v3395
        %3515 = vmatmul.mubr.bf16.gmra.mxu0 %v3250
        %v3516 = vpop.f32.mrf.mxu0
        %v3517 = vadd.f32 0.0, %v3516
        %v3518 = vpop.f32.mrf.mxu0
        %v3519 = vpop.f32.mrf.mxu0
        %v3520 = vadd.f32 0.0, %v3519
        %v3521 = vpop.f32.mrf.mxu0
        %3522 = vmatprep.mubr.bf16.mxu0 %v3398
        %3523 = vmatmul.mubr.bf16.gmra.mxu0 %v3253
        %v3524 = vpop.f32.mrf.mxu0
        %v3525 = vadd.f32 0.0, %v3524
        %v3526 = vpop.f32.mrf.mxu0
        %v3527 = vpop.f32.mrf.mxu0
        %v3528 = vadd.f32 0.0, %v3527
        %v3529 = vpop.f32.mrf.mxu0
        %3530 = vmatprep.mubr.bf16.mxu0 %v3401
        %3531 = vmatmul.mubr.bf16.gmra.mxu0 %v3256
        %v3532 = vpop.f32.mrf.mxu0
        %v3533 = vadd.f32 0.0, %v3532
        %v3534 = vpop.f32.mrf.mxu0
        %v3535 = vpop.f32.mrf.mxu0
        %v3536 = vadd.f32 0.0, %v3535
        %v3537 = vpop.f32.mrf.mxu0
        %3538 = vmatprep.mubr.bf16.mxu0 %v3404
        %3539 = vmatmul.mubr.bf16.gmra.mxu0 %v3259
        %v3540 = vpop.f32.mrf.mxu0
        %v3541 = vadd.f32 0.0, %v3540
        %v3542 = vpop.f32.mrf.mxu0
        %v3543 = vpop.f32.mrf.mxu0
        %v3544 = vadd.f32 0.0, %v3543
        %v3545 = vpop.f32.mrf.mxu0
        %3546 = vmatprep.mubr.bf16.mxu0 %v3407
        %3547 = vmatmul.mubr.bf16.gmra.mxu0 %v3262
        %v3548 = vpop.f32.mrf.mxu0
        %v3549 = vadd.f32 0.0, %v3548
        %v3550 = vpop.f32.mrf.mxu0
        %v3551 = vpop.f32.mrf.mxu0
        %v3552 = vadd.f32 0.0, %v3551
        %v3553 = vpop.f32.mrf.mxu0
        %3554 = vmatprep.mubr.bf16.mxu0 %v3410
        %3555 = vmatmul.mubr.bf16.gmra.mxu0 %v3265
        %v3556 = vpop.f32.mrf.mxu0
        %v3557 = vadd.f32 0.0, %v3556
        %v3558 = vpop.f32.mrf.mxu0
        %v3559 = vpop.f32.mrf.mxu0
        %v3560 = vadd.f32 0.0, %v3559
        %v3561 = vpop.f32.mrf.mxu0
        %3562 = vmatprep.mubr.bf16.mxu0 %v3413
        %3563 = vmatmul.mubr.bf16.gmra.mxu0 %v3268
        %v3564 = vpop.f32.mrf.mxu0
        %v3565 = vadd.f32 0.0, %v3564
        %v3566 = vpop.f32.mrf.mxu0
        %v3567 = vpop.f32.mrf.mxu0
        %v3568 = vadd.f32 0.0, %v3567
        %v3569 = vpop.f32.mrf.mxu0
        %3570 = vmatprep.mubr.bf16.mxu0 %v3416
        %3571 = vmatmul.mubr.bf16.gmra.mxu0 %v3271
        %v3572 = vpop.f32.mrf.mxu0
        %v3573 = vadd.f32 0.0, %v3572
        %v3574 = vpop.f32.mrf.mxu0
        %v3575 = vpop.f32.mrf.mxu0
        %v3576 = vadd.f32 0.0, %v3575
        %v3577 = vpop.f32.mrf.mxu0
        %3578 = vdwg.mxu0
        %v3579 = vadd.f32 %v2680, %v3453
        %v3580 = vadd.f32 %v2681, %v3456
        %v3581 = vadd.f32 %v2682, %v3461
        %v3582 = vadd.f32 %v2683, %v3464
        %v3583 = vadd.f32 %v2684, %v3469
        %v3584 = vadd.f32 %v2685, %v3472
        %v3585 = vadd.f32 %v2686, %v3477
        %v3586 = vadd.f32 %v2687, %v3480
        %v3587 = vadd.f32 %v2688, %v3485
        %v3588 = vadd.f32 %v2689, %v3488
        %v3589 = vadd.f32 %v2690, %v3493
        %v3590 = vadd.f32 %v2691, %v3496
        %v3591 = vadd.f32 %v2692, %v3501
        %v3592 = vadd.f32 %v2693, %v3504
        %v3593 = vadd.f32 %v2694, %v3509
        %v3594 = vadd.f32 %v2695, %v3512
        %v3595 = vadd.f32 %v2696, %v3517
        %v3596 = vadd.f32 %v2697, %v3520
        %v3597 = vadd.f32 %v2698, %v3525
        %v3598 = vadd.f32 %v2699, %v3528
        %v3599 = vadd.f32 %v2700, %v3533
        %v3600 = vadd.f32 %v2701, %v3536
        %v3601 = vadd.f32 %v2702, %v3541
        %v3602 = vadd.f32 %v2703, %v3544
        %v3603 = vadd.f32 %v2704, %v3549
        %v3604 = vadd.f32 %v2705, %v3552
        %v3605 = vadd.f32 %v2706, %v3557
        %v3606 = vadd.f32 %v2707, %v3560
        %v3607 = vadd.f32 %v2708, %v3565
        %v3608 = vadd.f32 %v2709, %v3568
        %v3609 = vadd.f32 %v2710, %v3573
        %v3610 = vadd.f32 %v2711, %v3576
        %v3611 = vmax.f32 %v3579, 0.0
        %v3612 = vmax.f32 %v3580, 0.0
        %v3613 = vmax.f32 %v3581, 0.0
        %v3614 = vmax.f32 %v3582, 0.0
        %v3615 = vmax.f32 %v3583, 0.0
        %v3616 = vmax.f32 %v3584, 0.0
        %v3617 = vmax.f32 %v3585, 0.0
        %v3618 = vmax.f32 %v3586, 0.0
        %v3619 = vmax.f32 %v3587, 0.0
        %v3620 = vmax.f32 %v3588, 0.0
        %v3621 = vmax.f32 %v3589, 0.0
        %v3622 = vmax.f32 %v3590, 0.0
        %v3623 = vmax.f32 %v3591, 0.0
        %v3624 = vmax.f32 %v3592, 0.0
        %v3625 = vmax.f32 %v3593, 0.0
        %v3626 = vmax.f32 %v3594, 0.0
        %v3627 = vmax.f32 %v3595, 0.0
        %v3628 = vmax.f32 %v3596, 0.0
        %v3629 = vmax.f32 %v3597, 0.0
        %v3630 = vmax.f32 %v3598, 0.0
        %v3631 = vmax.f32 %v3599, 0.0
        %v3632 = vmax.f32 %v3600, 0.0
        %v3633 = vmax.f32 %v3601, 0.0
        %v3634 = vmax.f32 %v3602, 0.0
        %v3635 = vmax.f32 %v3603, 0.0
        %v3636 = vmax.f32 %v3604, 0.0
        %v3637 = vmax.f32 %v3605, 0.0
        %v3638 = vmax.f32 %v3606, 0.0
        %v3639 = vmax.f32 %v3607, 0.0
        %v3640 = vmax.f32 %v3608, 0.0
        %v3641 = vmax.f32 %v3609, 0.0
        %v3642 = vmax.f32 %v3610, 0.0
        %v3643 = vpack.c.bf16 %v3612, %v3611
        %v3644 = vpack.c.bf16 %v3614, %v3613
        %v3645 = vpack.c.bf16 %v3616, %v3615
        %v3646 = vpack.c.bf16 %v3618, %v3617
        %v3647 = vpack.c.bf16 %v3620, %v3619
        %v3648 = vpack.c.bf16 %v3622, %v3621
        %v3649 = vpack.c.bf16 %v3624, %v3623
        %v3650 = vpack.c.bf16 %v3626, %v3625
        %v3651 = vpack.c.bf16 %v3628, %v3627
        %v3652 = vpack.c.bf16 %v3630, %v3629
        %v3653 = vpack.c.bf16 %v3632, %v3631
        %v3654 = vpack.c.bf16 %v3634, %v3633
        %v3655 = vpack.c.bf16 %v3636, %v3635
        %v3656 = vpack.c.bf16 %v3638, %v3637
        %v3657 = vpack.c.bf16 %v3640, %v3639
        %v3658 = vpack.c.bf16 %v3642, %v3641
        %v3675 = vunpack.c.l.b16 %v3643
        %v3676 = vunpack.c.h.b16 %v3643
        %v3677 = vunpack.c.l.b16 %v3644
        %v3678 = vunpack.c.h.b16 %v3644
        %v3679 = vunpack.c.l.b16 %v3645
        %v3680 = vunpack.c.h.b16 %v3645
        %v3681 = vunpack.c.l.b16 %v3646
        %v3682 = vunpack.c.h.b16 %v3646
        %v3683 = vunpack.c.l.b16 %v3647
        %v3684 = vunpack.c.h.b16 %v3647
        %v3685 = vunpack.c.l.b16 %v3648
        %v3686 = vunpack.c.h.b16 %v3648
        %v3687 = vunpack.c.l.b16 %v3649
        %v3688 = vunpack.c.h.b16 %v3649
        %v3689 = vunpack.c.l.b16 %v3650
        %v3690 = vunpack.c.h.b16 %v3650
        %v3691 = vunpack.c.l.b16 %v3651
        %v3692 = vunpack.c.h.b16 %v3651
        %v3693 = vunpack.c.l.b16 %v3652
        %v3694 = vunpack.c.h.b16 %v3652
        %v3695 = vunpack.c.l.b16 %v3653
        %v3696 = vunpack.c.h.b16 %v3653
        %v3697 = vunpack.c.l.b16 %v3654
        %v3698 = vunpack.c.h.b16 %v3654
        %v3699 = vunpack.c.l.b16 %v3655
        %v3700 = vunpack.c.h.b16 %v3655
        %v3701 = vunpack.c.l.b16 %v3656
        %v3702 = vunpack.c.h.b16 %v3656
        %v3703 = vunpack.c.l.b16 %v3657
        %v3704 = vunpack.c.h.b16 %v3657
        %v3705 = vunpack.c.l.b16 %v3658
        %v3706 = vunpack.c.h.b16 %v3658
        %v3707 = vpack.c.b16 %v3675, %v3675
        %v3708 = vpack.c.b16 %v3676, %v3676
        %v3709 = vpack.c.b16 %v3677, %v3677
        %v3710 = vpack.c.b16 %v3678, %v3678
        %v3711 = vpack.c.b16 %v3679, %v3679
        %v3712 = vpack.c.b16 %v3680, %v3680
        %v3713 = vpack.c.b16 %v3681, %v3681
        %v3714 = vpack.c.b16 %v3682, %v3682
        %v3715 = vpack.c.b16 %v3683, %v3683
        %v3716 = vpack.c.b16 %v3684, %v3684
        %v3717 = vpack.c.b16 %v3685, %v3685
        %v3718 = vpack.c.b16 %v3686, %v3686
        %v3719 = vpack.c.b16 %v3687, %v3687
        %v3720 = vpack.c.b16 %v3688, %v3688
        %v3721 = vpack.c.b16 %v3689, %v3689
        %v3722 = vpack.c.b16 %v3690, %v3690
        %v3723 = vpack.c.b16 %v3691, %v3691
        %v3724 = vpack.c.b16 %v3692, %v3692
        %v3725 = vpack.c.b16 %v3693, %v3693
        %v3726 = vpack.c.b16 %v3694, %v3694
        %v3727 = vpack.c.b16 %v3695, %v3695
        %v3728 = vpack.c.b16 %v3696, %v3696
        %v3729 = vpack.c.b16 %v3697, %v3697
        %v3730 = vpack.c.b16 %v3698, %v3698
        %v3731 = vpack.c.b16 %v3699, %v3699
        %v3732 = vpack.c.b16 %v3700, %v3700
        %v3733 = vpack.c.b16 %v3701, %v3701
        %v3734 = vpack.c.b16 %v3702, %v3702
        %v3735 = vpack.c.b16 %v3703, %v3703
        %v3736 = vpack.c.b16 %v3704, %v3704
        %v3737 = vpack.c.b16 %v3705, %v3705
        %v3738 = vpack.c.b16 %v3706, %v3706
        %v3740 = vshrl.u32 %v3707, 16
        %v3742 = vrot.slane %v3740, 7
        %v3743 = vshll.u32 %v3707, 16
        %v3745 = vor.u32 %v3742, %v3743
        %v3746 = vrot.slane %v3742, 4
        %v3748 = vshrl.u32 %v3708, 16
        %v3750 = vrot.slane %v3748, 7
        %v3751 = vshll.u32 %v3708, 16
        %v3753 = vor.u32 %v3750, %v3751
        %v3754 = vsel %vm472, %v3746, %v3753
        %v3755 = vrot.slane %v3750, 4
        %v3757 = vshrl.u32 %v3709, 16
        %v3759 = vrot.slane %v3757, 7
        %v3760 = vshll.u32 %v3709, 16
        %v3762 = vor.u32 %v3759, %v3760
        %v3763 = vrot.slane %v3759, 4
        %v3765 = vshrl.u32 %v3710, 16
        %v3767 = vrot.slane %v3765, 7
        %v3768 = vshll.u32 %v3710, 16
        %v3770 = vor.u32 %v3767, %v3768
        %v3771 = vsel %vm472, %v3763, %v3770
        %v3772 = vrot.slane %v3767, 4
        %v3774 = vshrl.u32 %v3711, 16
        %v3776 = vrot.slane %v3774, 7
        %v3777 = vshll.u32 %v3711, 16
        %v3779 = vor.u32 %v3776, %v3777
        %v3780 = vrot.slane %v3776, 4
        %v3782 = vshrl.u32 %v3712, 16
        %v3784 = vrot.slane %v3782, 7
        %v3785 = vshll.u32 %v3712, 16
        %v3787 = vor.u32 %v3784, %v3785
        %v3788 = vsel %vm472, %v3780, %v3787
        %v3789 = vrot.slane %v3784, 4
        %v3791 = vshrl.u32 %v3713, 16
        %v3793 = vrot.slane %v3791, 7
        %v3794 = vshll.u32 %v3713, 16
        %v3796 = vor.u32 %v3793, %v3794
        %v3797 = vrot.slane %v3793, 4
        %v3799 = vshrl.u32 %v3714, 16
        %v3801 = vrot.slane %v3799, 7
        %v3802 = vshll.u32 %v3714, 16
        %v3804 = vor.u32 %v3801, %v3802
        %v3805 = vsel %vm472, %v3797, %v3804
        %v3806 = vrot.slane %v3801, 4
        %v3808 = vshrl.u32 %v3715, 16
        %v3810 = vrot.slane %v3808, 7
        %v3811 = vshll.u32 %v3715, 16
        %v3813 = vor.u32 %v3810, %v3811
        %v3814 = vrot.slane %v3810, 4
        %v3816 = vshrl.u32 %v3716, 16
        %v3818 = vrot.slane %v3816, 7
        %v3819 = vshll.u32 %v3716, 16
        %v3821 = vor.u32 %v3818, %v3819
        %v3822 = vsel %vm472, %v3814, %v3821
        %v3823 = vrot.slane %v3818, 4
        %v3825 = vshrl.u32 %v3717, 16
        %v3827 = vrot.slane %v3825, 7
        %v3828 = vshll.u32 %v3717, 16
        %v3830 = vor.u32 %v3827, %v3828
        %v3831 = vrot.slane %v3827, 4
        %v3833 = vshrl.u32 %v3718, 16
        %v3835 = vrot.slane %v3833, 7
        %v3836 = vshll.u32 %v3718, 16
        %v3838 = vor.u32 %v3835, %v3836
        %v3839 = vsel %vm472, %v3831, %v3838
        %v3840 = vrot.slane %v3835, 4
        %v3842 = vshrl.u32 %v3719, 16
        %v3844 = vrot.slane %v3842, 7
        %v3845 = vshll.u32 %v3719, 16
        %v3847 = vor.u32 %v3844, %v3845
        %v3848 = vrot.slane %v3844, 4
        %v3850 = vshrl.u32 %v3720, 16
        %v3852 = vrot.slane %v3850, 7
        %v3853 = vshll.u32 %v3720, 16
        %v3855 = vor.u32 %v3852, %v3853
        %v3856 = vsel %vm472, %v3848, %v3855
        %v3857 = vrot.slane %v3852, 4
        %v3859 = vshrl.u32 %v3721, 16
        %v3861 = vrot.slane %v3859, 7
        %v3862 = vshll.u32 %v3721, 16
        %v3864 = vor.u32 %v3861, %v3862
        %v3865 = vrot.slane %v3861, 4
        %v3867 = vshrl.u32 %v3722, 16
        %v3869 = vrot.slane %v3867, 7
        %v3870 = vshll.u32 %v3722, 16
        %v3872 = vor.u32 %v3869, %v3870
        %v3873 = vsel %vm472, %v3865, %v3872
        %v3874 = vrot.slane %v3869, 4
        %v3876 = vshrl.u32 %v3723, 16
        %v3878 = vrot.slane %v3876, 7
        %v3879 = vshll.u32 %v3723, 16
        %v3881 = vor.u32 %v3878, %v3879
        %v3882 = vrot.slane %v3878, 4
        %v3884 = vshrl.u32 %v3724, 16
        %v3886 = vrot.slane %v3884, 7
        %v3887 = vshll.u32 %v3724, 16
        %v3889 = vor.u32 %v3886, %v3887
        %v3890 = vsel %vm472, %v3882, %v3889
        %v3891 = vrot.slane %v3886, 4
        %v3893 = vshrl.u32 %v3725, 16
        %v3895 = vrot.slane %v3893, 7
        %v3896 = vshll.u32 %v3725, 16
        %v3898 = vor.u32 %v3895, %v3896
        %v3899 = vrot.slane %v3895, 4
        %v3901 = vshrl.u32 %v3726, 16
        %v3903 = vrot.slane %v3901, 7
        %v3904 = vshll.u32 %v3726, 16
        %v3906 = vor.u32 %v3903, %v3904
        %v3907 = vsel %vm472, %v3899, %v3906
        %v3908 = vrot.slane %v3903, 4
        %v3910 = vshrl.u32 %v3727, 16
        %v3912 = vrot.slane %v3910, 7
        %v3913 = vshll.u32 %v3727, 16
        %v3915 = vor.u32 %v3912, %v3913
        %v3916 = vrot.slane %v3912, 4
        %v3918 = vshrl.u32 %v3728, 16
        %v3920 = vrot.slane %v3918, 7
        %v3921 = vshll.u32 %v3728, 16
        %v3923 = vor.u32 %v3920, %v3921
        %v3924 = vsel %vm472, %v3916, %v3923
        %v3925 = vrot.slane %v3920, 4
        %v3927 = vshrl.u32 %v3729, 16
        %v3929 = vrot.slane %v3927, 7
        %v3930 = vshll.u32 %v3729, 16
        %v3932 = vor.u32 %v3929, %v3930
        %v3933 = vrot.slane %v3929, 4
        %v3935 = vshrl.u32 %v3730, 16
        %v3937 = vrot.slane %v3935, 7
        %v3938 = vshll.u32 %v3730, 16
        %v3940 = vor.u32 %v3937, %v3938
        %v3941 = vsel %vm472, %v3933, %v3940
        %v3942 = vrot.slane %v3937, 4
        %v3944 = vshrl.u32 %v3731, 16
        %v3946 = vrot.slane %v3944, 7
        %v3947 = vshll.u32 %v3731, 16
        %v3949 = vor.u32 %v3946, %v3947
        %v3950 = vrot.slane %v3946, 4
        %v3952 = vshrl.u32 %v3732, 16
        %v3954 = vrot.slane %v3952, 7
        %v3955 = vshll.u32 %v3732, 16
        %v3957 = vor.u32 %v3954, %v3955
        %v3958 = vsel %vm472, %v3950, %v3957
        %v3959 = vrot.slane %v3954, 4
        %v3961 = vshrl.u32 %v3733, 16
        %v3963 = vrot.slane %v3961, 7
        %v3964 = vshll.u32 %v3733, 16
        %v3966 = vor.u32 %v3963, %v3964
        %v3967 = vrot.slane %v3963, 4
        %v3969 = vshrl.u32 %v3734, 16
        %v3971 = vrot.slane %v3969, 7
        %v3972 = vshll.u32 %v3734, 16
        %v3974 = vor.u32 %v3971, %v3972
        %v3975 = vsel %vm472, %v3967, %v3974
        %v3976 = vrot.slane %v3971, 4
        %v3978 = vshrl.u32 %v3735, 16
        %v3980 = vrot.slane %v3978, 7
        %v3981 = vshll.u32 %v3735, 16
        %v3983 = vor.u32 %v3980, %v3981
        %v3984 = vrot.slane %v3980, 4
        %v3986 = vshrl.u32 %v3736, 16
        %v3988 = vrot.slane %v3986, 7
        %v3989 = vshll.u32 %v3736, 16
        %v3991 = vor.u32 %v3988, %v3989
        %v3992 = vsel %vm472, %v3984, %v3991
        %v3993 = vrot.slane %v3988, 4
        %v3995 = vshrl.u32 %v3737, 16
        %v3997 = vrot.slane %v3995, 7
        %v3998 = vshll.u32 %v3737, 16
        %v4000 = vor.u32 %v3997, %v3998
        %v4001 = vrot.slane %v3997, 4
        %v4003 = vshrl.u32 %v3738, 16
        %v4005 = vrot.slane %v4003, 7
        %v4006 = vshll.u32 %v3738, 16
        %v4008 = vor.u32 %v4005, %v4006
        %v4009 = vsel %vm472, %v4001, %v4008
        %v4010 = vrot.slane %v4005, 4
        %v4059 = vld [vmem:[%s342] sm:$0xf]
        %v4060 = vsel %vm794, %v3745, %v4059
        %4061 = vst [vmem:[%s342] sm:$0xf] %v4060
        %4062 = vst.msk [vmem:[%s342 + $0x4] sm:$0xf] %vm224, %v3754
        %v4063 = vld [vmem:[%s342 + $0x8] sm:$0x1]
        %v4064 = vsel %vm236, %v3755, %v4063
        %4065 = vst [vmem:[%s342 + $0x8] sm:$0x1] %v4064
        %v4066 = vld [vmem:[%s342 + $0xc] sm:$0xf]
        %v4067 = vsel %vm794, %v3762, %v4066
        %4068 = vst [vmem:[%s342 + $0xc] sm:$0xf] %v4067
        %4069 = vst.msk [vmem:[%s342 + $0x10] sm:$0xf] %vm224, %v3771
        %v4070 = vld [vmem:[%s342 + $0x14] sm:$0x1]
        %v4071 = vsel %vm236, %v3772, %v4070
        %4072 = vst [vmem:[%s342 + $0x14] sm:$0x1] %v4071
        %v4073 = vld [vmem:[%s342 + $0x18] sm:$0xf]
        %v4074 = vsel %vm794, %v3779, %v4073
        %4075 = vst [vmem:[%s342 + $0x18] sm:$0xf] %v4074
        %4076 = vst.msk [vmem:[%s342 + $0x1c] sm:$0xf] %vm224, %v3788
        %v4077 = vld [vmem:[%s342 + $0x20] sm:$0x1]
        %v4078 = vsel %vm236, %v3789, %v4077
        %4079 = vst [vmem:[%s342 + $0x20] sm:$0x1] %v4078
        %v4080 = vld [vmem:[%s342 + $0x24] sm:$0xf]
        %v4081 = vsel %vm794, %v3796, %v4080
        %4082 = vst [vmem:[%s342 + $0x24] sm:$0xf] %v4081
        %4083 = vst.msk [vmem:[%s342 + $0x28] sm:$0xf] %vm224, %v3805
        %v4084 = vld [vmem:[%s342 + $0x2c] sm:$0x1]
        %v4085 = vsel %vm236, %v3806, %v4084
        %4086 = vst [vmem:[%s342 + $0x2c] sm:$0x1] %v4085
        %v4087 = vld [vmem:[%s342 + $0x30] sm:$0xf]
        %v4088 = vsel %vm794, %v3813, %v4087
        %4089 = vst [vmem:[%s342 + $0x30] sm:$0xf] %v4088
        %4090 = vst.msk [vmem:[%s342 + $0x34] sm:$0xf] %vm224, %v3822
        %v4091 = vld [vmem:[%s342 + $0x38] sm:$0x1]
        %v4092 = vsel %vm236, %v3823, %v4091
        %4093 = vst [vmem:[%s342 + $0x38] sm:$0x1] %v4092
        %v4094 = vld [vmem:[%s342 + $0x3c] sm:$0xf]
        %v4095 = vsel %vm794, %v3830, %v4094
        %4096 = vst [vmem:[%s342 + $0x3c] sm:$0xf] %v4095
        %4097 = vst.msk [vmem:[%s342 + $0x40] sm:$0xf] %vm224, %v3839
        %v4098 = vld [vmem:[%s342 + $0x44] sm:$0x1]
        %v4099 = vsel %vm236, %v3840, %v4098
        %4100 = vst [vmem:[%s342 + $0x44] sm:$0x1] %v4099
        %v4101 = vld [vmem:[%s342 + $0x48] sm:$0xf]
        %v4102 = vsel %vm794, %v3847, %v4101
        %4103 = vst [vmem:[%s342 + $0x48] sm:$0xf] %v4102
        %4104 = vst.msk [vmem:[%s342 + $0x4c] sm:$0xf] %vm224, %v3856
        %v4105 = vld [vmem:[%s342 + $0x50] sm:$0x1]
        %v4106 = vsel %vm236, %v3857, %v4105
        %4107 = vst [vmem:[%s342 + $0x50] sm:$0x1] %v4106
        %v4108 = vld [vmem:[%s342 + $0x54] sm:$0xf]
        %v4109 = vsel %vm794, %v3864, %v4108
        %4110 = vst [vmem:[%s342 + $0x54] sm:$0xf] %v4109
        %4111 = vst.msk [vmem:[%s342 + $0x58] sm:$0xf] %vm224, %v3873
        %v4112 = vld [vmem:[%s342 + $0x5c] sm:$0x1]
        %v4113 = vsel %vm236, %v3874, %v4112
        %4114 = vst [vmem:[%s342 + $0x5c] sm:$0x1] %v4113
        %v4115 = vld [vmem:[%s342 + $0x60] sm:$0xf]
        %v4116 = vsel %vm794, %v3881, %v4115
        %4117 = vst [vmem:[%s342 + $0x60] sm:$0xf] %v4116
        %4118 = vst.msk [vmem:[%s342 + $0x64] sm:$0xf] %vm224, %v3890
        %v4119 = vld [vmem:[%s342 + $0x68] sm:$0x1]
        %v4120 = vsel %vm236, %v3891, %v4119
        %4121 = vst [vmem:[%s342 + $0x68] sm:$0x1] %v4120
        %v4122 = vld [vmem:[%s342 + $0x6c] sm:$0xf]
        %v4123 = vsel %vm794, %v3898, %v4122
        %4124 = vst [vmem:[%s342 + $0x6c] sm:$0xf] %v4123
        %4125 = vst.msk [vmem:[%s342 + $0x70] sm:$0xf] %vm224, %v3907
        %v4126 = vld [vmem:[%s342 + $0x74] sm:$0x1]
        %v4127 = vsel %vm236, %v3908, %v4126
        %4128 = vst [vmem:[%s342 + $0x74] sm:$0x1] %v4127
        %v4129 = vld [vmem:[%s342 + $0x78] sm:$0xf]
        %v4130 = vsel %vm794, %v3915, %v4129
        %4131 = vst [vmem:[%s342 + $0x78] sm:$0xf] %v4130
        %4132 = vst.msk [vmem:[%s342 + $0x7c] sm:$0xf] %vm224, %v3924
        %v4133 = vld [vmem:[%s342 + $0x80] sm:$0x1]
        %v4134 = vsel %vm236, %v3925, %v4133
        %4135 = vst [vmem:[%s342 + $0x80] sm:$0x1] %v4134
        %v4136 = vld [vmem:[%s342 + $0x84] sm:$0xf]
        %v4137 = vsel %vm794, %v3932, %v4136
        %4138 = vst [vmem:[%s342 + $0x84] sm:$0xf] %v4137
        %4139 = vst.msk [vmem:[%s342 + $0x88] sm:$0xf] %vm224, %v3941
        %v4140 = vld [vmem:[%s342 + $0x8c] sm:$0x1]
        %v4141 = vsel %vm236, %v3942, %v4140
        %4142 = vst [vmem:[%s342 + $0x8c] sm:$0x1] %v4141
        %v4143 = vld [vmem:[%s342 + $0x90] sm:$0xf]
        %v4144 = vsel %vm794, %v3949, %v4143
        %4145 = vst [vmem:[%s342 + $0x90] sm:$0xf] %v4144
        %4146 = vst.msk [vmem:[%s342 + $0x94] sm:$0xf] %vm224, %v3958
        %v4147 = vld [vmem:[%s342 + $0x98] sm:$0x1]
        %v4148 = vsel %vm236, %v3959, %v4147
        %4149 = vst [vmem:[%s342 + $0x98] sm:$0x1] %v4148
        %v4150 = vld [vmem:[%s342 + $0x9c] sm:$0xf]
        %v4151 = vsel %vm794, %v3966, %v4150
        %4152 = vst [vmem:[%s342 + $0x9c] sm:$0xf] %v4151
        %4153 = vst.msk [vmem:[%s342 + $0xa0] sm:$0xf] %vm224, %v3975
        %v4154 = vld [vmem:[%s342 + $0xa4] sm:$0x1]
        %v4155 = vsel %vm236, %v3976, %v4154
        %4156 = vst [vmem:[%s342 + $0xa4] sm:$0x1] %v4155
        %v4157 = vld [vmem:[%s342 + $0xa8] sm:$0xf]
        %v4158 = vsel %vm794, %v3983, %v4157
        %4159 = vst [vmem:[%s342 + $0xa8] sm:$0xf] %v4158
        %4160 = vst.msk [vmem:[%s342 + $0xac] sm:$0xf] %vm224, %v3992
        %v4161 = vld [vmem:[%s342 + $0xb0] sm:$0x1]
        %v4162 = vsel %vm236, %v3993, %v4161
        %4163 = vst [vmem:[%s342 + $0xb0] sm:$0x1] %v4162
        %v4164 = vld [vmem:[%s342 + $0xb4] sm:$0xf]
        %v4165 = vsel %vm794, %v4000, %v4164
        %4166 = vst [vmem:[%s342 + $0xb4] sm:$0xf] %v4165
        %4167 = vst.msk [vmem:[%s342 + $0xb8] sm:$0xf] %vm224, %v4009
        %v4168 = vld [vmem:[%s342 + $0xbc] sm:$0x1]
        %v4169 = vsel %vm236, %v4010, %v4168
        %4170 = vst [vmem:[%s342 + $0xbc] sm:$0x1] %v4169
        %v4171 = vld [vmem:[%s4] sm:$0x1]
        %v4173 = vlaneseq
        %v4174 = vshrl.u32 %v4173, 7
        %v4175 = vsub.s32 0, %v4174
        %v4176 = vrot.slane %v4171, %v4175
        %v4178 = vld [vmem:[#allocation3] sm:$0xf]
        %v4179 = vld [vmem:[#allocation3 + $0x4] sm:$0xf]
        %v4180 = vld [vmem:[#allocation3 + $0xc] sm:$0xf]
        %v4181 = vld [vmem:[#allocation3 + $0x10] sm:$0xf]
        %v4182 = vld [vmem:[#allocation3 + $0x18] sm:$0xf]
        %v4183 = vld [vmem:[#allocation3 + $0x1c] sm:$0xf]
        %v4184 = vld [vmem:[#allocation3 + $0x24] sm:$0xf]
        %v4185 = vld [vmem:[#allocation3 + $0x28] sm:$0xf]
        %v4186 = vld [vmem:[#allocation3 + $0x30] sm:$0xf]
        %v4187 = vld [vmem:[#allocation3 + $0x34] sm:$0xf]
        %v4188 = vld [vmem:[#allocation3 + $0x3c] sm:$0xf]
        %v4189 = vld [vmem:[#allocation3 + $0x40] sm:$0xf]
        %v4190 = vld [vmem:[#allocation3 + $0x48] sm:$0xf]
        %v4191 = vld [vmem:[#allocation3 + $0x4c] sm:$0xf]
        %v4192 = vld [vmem:[#allocation3 + $0x54] sm:$0xf]
        %v4193 = vld [vmem:[#allocation3 + $0x58] sm:$0xf]
        %v4194 = vld [vmem:[#allocation3 + $0x60] sm:$0xf]
        %v4195 = vld [vmem:[#allocation3 + $0x64] sm:$0xf]
        %v4196 = vld [vmem:[#allocation3 + $0x6c] sm:$0xf]
        %v4197 = vld [vmem:[#allocation3 + $0x70] sm:$0xf]
        %v4198 = vld [vmem:[#allocation3 + $0x78] sm:$0xf]
        %v4199 = vld [vmem:[#allocation3 + $0x7c] sm:$0xf]
        %v4200 = vld [vmem:[#allocation3 + $0x84] sm:$0xf]
        %v4201 = vld [vmem:[#allocation3 + $0x88] sm:$0xf]
        %v4202 = vld [vmem:[#allocation3 + $0x90] sm:$0xf]
        %v4203 = vld [vmem:[#allocation3 + $0x94] sm:$0xf]
        %v4204 = vld [vmem:[#allocation3 + $0x9c] sm:$0xf]
        %v4205 = vld [vmem:[#allocation3 + $0xa0] sm:$0xf]
        %v4206 = vld [vmem:[#allocation3 + $0xa8] sm:$0xf]
        %v4207 = vld [vmem:[#allocation3 + $0xac] sm:$0xf]
        %v4208 = vld [vmem:[#allocation3 + $0xb4] sm:$0xf]
        %v4209 = vld [vmem:[#allocation3 + $0xb8] sm:$0xf]
        %v4210 = vld [vmem:[#allocation3 + $0x8] sm:$0x1]
        %v4211 = vld [vmem:[#allocation3 + $0x14] sm:$0x1]
        %v4212 = vld [vmem:[#allocation3 + $0x20] sm:$0x1]
        %v4213 = vld [vmem:[#allocation3 + $0x2c] sm:$0x1]
        %v4214 = vld [vmem:[#allocation3 + $0x38] sm:$0x1]
        %v4215 = vld [vmem:[#allocation3 + $0x44] sm:$0x1]
        %v4216 = vld [vmem:[#allocation3 + $0x50] sm:$0x1]
        %v4217 = vld [vmem:[#allocation3 + $0x5c] sm:$0x1]
        %v4218 = vld [vmem:[#allocation3 + $0x68] sm:$0x1]
        %v4219 = vld [vmem:[#allocation3 + $0x74] sm:$0x1]
        %v4220 = vld [vmem:[#allocation3 + $0x80] sm:$0x1]
        %v4221 = vld [vmem:[#allocation3 + $0x8c] sm:$0x1]
        %v4222 = vld [vmem:[#allocation3 + $0x98] sm:$0x1]
        %v4223 = vld [vmem:[#allocation3 + $0xa4] sm:$0x1]
        %v4224 = vld [vmem:[#allocation3 + $0xb0] sm:$0x1]
        %v4225 = vld [vmem:[#allocation3 + $0xbc] sm:$0x1]
        %v4226 = vld [vmem:[#allocation3] sm:$0xe]
        %v4227 = vld [vmem:[#allocation3 + $0xc] sm:$0xe]
        %v4228 = vld [vmem:[#allocation3 + $0x18] sm:$0xe]
        %v4229 = vld [vmem:[#allocation3 + $0x24] sm:$0xe]
        %v4230 = vld [vmem:[#allocation3 + $0x30] sm:$0xe]
        %v4231 = vld [vmem:[#allocation3 + $0x3c] sm:$0xe]
        %v4232 = vld [vmem:[#allocation3 + $0x48] sm:$0xe]
        %v4233 = vld [vmem:[#allocation3 + $0x54] sm:$0xe]
        %v4234 = vld [vmem:[#allocation3 + $0x60] sm:$0xe]
        %v4235 = vld [vmem:[#allocation3 + $0x6c] sm:$0xe]
        %v4236 = vld [vmem:[#allocation3 + $0x78] sm:$0xe]
        %v4237 = vld [vmem:[#allocation3 + $0x84] sm:$0xe]
        %v4238 = vld [vmem:[#allocation3 + $0x90] sm:$0xe]
        %v4239 = vld [vmem:[#allocation3 + $0x9c] sm:$0xe]
        %v4240 = vld [vmem:[#allocation3 + $0xa8] sm:$0xe]
        %v4241 = vld [vmem:[#allocation3 + $0xb4] sm:$0xe]
        %v4274 = vunpack.c.l.b16 %v4178
        %v4275 = vunpack.c.l.b16 %v4179
        %v4276 = vunpack.c.l.b16 %v4180
        %v4277 = vunpack.c.l.b16 %v4181
        %v4278 = vunpack.c.l.b16 %v4182
        %v4279 = vunpack.c.l.b16 %v4183
        %v4280 = vunpack.c.l.b16 %v4184
        %v4281 = vunpack.c.l.b16 %v4185
        %v4282 = vunpack.c.l.b16 %v4186
        %v4283 = vunpack.c.l.b16 %v4187
        %v4284 = vunpack.c.l.b16 %v4188
        %v4285 = vunpack.c.l.b16 %v4189
        %v4286 = vunpack.c.l.b16 %v4190
        %v4287 = vunpack.c.l.b16 %v4191
        %v4288 = vunpack.c.l.b16 %v4192
        %v4289 = vunpack.c.l.b16 %v4193
        %v4290 = vunpack.c.l.b16 %v4194
        %v4291 = vunpack.c.l.b16 %v4195
        %v4292 = vunpack.c.l.b16 %v4196
        %v4293 = vunpack.c.l.b16 %v4197
        %v4294 = vunpack.c.l.b16 %v4198
        %v4295 = vunpack.c.l.b16 %v4199
        %v4296 = vunpack.c.l.b16 %v4200
        %v4297 = vunpack.c.l.b16 %v4201
        %v4298 = vunpack.c.l.b16 %v4202
        %v4299 = vunpack.c.l.b16 %v4203
        %v4300 = vunpack.c.l.b16 %v4204
        %v4301 = vunpack.c.l.b16 %v4205
        %v4302 = vunpack.c.l.b16 %v4206
        %v4303 = vunpack.c.l.b16 %v4207
        %v4304 = vunpack.c.l.b16 %v4208
        %v4305 = vunpack.c.l.b16 %v4209
        %v4306 = vpack.c.b16 %v4275, %v4274
        %v4307 = vpack.c.b16 %v4277, %v4276
        %v4308 = vpack.c.b16 %v4279, %v4278
        %v4309 = vpack.c.b16 %v4281, %v4280
        %v4310 = vpack.c.b16 %v4283, %v4282
        %v4311 = vpack.c.b16 %v4285, %v4284
        %v4312 = vpack.c.b16 %v4287, %v4286
        %v4313 = vpack.c.b16 %v4289, %v4288
        %v4314 = vpack.c.b16 %v4291, %v4290
        %v4315 = vpack.c.b16 %v4293, %v4292
        %v4316 = vpack.c.b16 %v4295, %v4294
        %v4317 = vpack.c.b16 %v4297, %v4296
        %v4318 = vpack.c.b16 %v4299, %v4298
        %v4319 = vpack.c.b16 %v4301, %v4300
        %v4320 = vpack.c.b16 %v4303, %v4302
        %v4321 = vpack.c.b16 %v4305, %v4304
        %v4338 = vunpack.c.l.b16 %v4210
        %v4339 = vunpack.c.l.b16 %v4211
        %v4340 = vunpack.c.l.b16 %v4212
        %v4341 = vunpack.c.l.b16 %v4213
        %v4342 = vunpack.c.l.b16 %v4214
        %v4343 = vunpack.c.l.b16 %v4215
        %v4344 = vunpack.c.l.b16 %v4216
        %v4345 = vunpack.c.l.b16 %v4217
        %v4346 = vunpack.c.l.b16 %v4218
        %v4347 = vunpack.c.l.b16 %v4219
        %v4348 = vunpack.c.l.b16 %v4220
        %v4349 = vunpack.c.l.b16 %v4221
        %v4350 = vunpack.c.l.b16 %v4222
        %v4351 = vunpack.c.l.b16 %v4223
        %v4352 = vunpack.c.l.b16 %v4224
        %v4353 = vunpack.c.l.b16 %v4225
        %v4354 = vpack.c.b16 %v4338, %v4338
        %v4355 = vpack.c.b16 %v4339, %v4339
        %v4356 = vpack.c.b16 %v4340, %v4340
        %v4357 = vpack.c.b16 %v4341, %v4341
        %v4358 = vpack.c.b16 %v4342, %v4342
        %v4359 = vpack.c.b16 %v4343, %v4343
        %v4360 = vpack.c.b16 %v4344, %v4344
        %v4361 = vpack.c.b16 %v4345, %v4345
        %v4362 = vpack.c.b16 %v4346, %v4346
        %v4363 = vpack.c.b16 %v4347, %v4347
        %v4364 = vpack.c.b16 %v4348, %v4348
        %v4365 = vpack.c.b16 %v4349, %v4349
        %v4366 = vpack.c.b16 %v4350, %v4350
        %v4367 = vpack.c.b16 %v4351, %v4351
        %v4368 = vpack.c.b16 %v4352, %v4352
        %v4369 = vpack.c.b16 %v4353, %v4353
        %v4371 = vshrl.u32 %v4306, 16
        %v4373 = vshll.u32 %v4306, 16
        %v4375 = vrot.slane %v4373, 1
        %v4376 = vor.u32 %v4371, %v4375
        %v4378 = vshll.u32 %v4354, 16
        %v4380 = vrot.slane %v4378, 1
        %v4381 = vsel %vm1106, %v4376, %v4380
        %v4383 = vshrl.u32 %v4307, 16
        %v4385 = vshll.u32 %v4307, 16
        %v4387 = vrot.slane %v4385, 1
        %v4388 = vor.u32 %v4383, %v4387
        %v4390 = vshll.u32 %v4355, 16
        %v4392 = vrot.slane %v4390, 1
        %v4393 = vsel %vm1106, %v4388, %v4392
        %v4395 = vshrl.u32 %v4308, 16
        %v4397 = vshll.u32 %v4308, 16
        %v4399 = vrot.slane %v4397, 1
        %v4400 = vor.u32 %v4395, %v4399
        %v4402 = vshll.u32 %v4356, 16
        %v4404 = vrot.slane %v4402, 1
        %v4405 = vsel %vm1106, %v4400, %v4404
        %v4407 = vshrl.u32 %v4309, 16
        %v4409 = vshll.u32 %v4309, 16
        %v4411 = vrot.slane %v4409, 1
        %v4412 = vor.u32 %v4407, %v4411
        %v4414 = vshll.u32 %v4357, 16
        %v4416 = vrot.slane %v4414, 1
        %v4417 = vsel %vm1106, %v4412, %v4416
        %v4419 = vshrl.u32 %v4310, 16
        %v4421 = vshll.u32 %v4310, 16
        %v4423 = vrot.slane %v4421, 1
        %v4424 = vor.u32 %v4419, %v4423
        %v4426 = vshll.u32 %v4358, 16
        %v4428 = vrot.slane %v4426, 1
        %v4429 = vsel %vm1106, %v4424, %v4428
        %v4431 = vshrl.u32 %v4311, 16
        %v4433 = vshll.u32 %v4311, 16
        %v4435 = vrot.slane %v4433, 1
        %v4436 = vor.u32 %v4431, %v4435
        %v4438 = vshll.u32 %v4359, 16
        %v4440 = vrot.slane %v4438, 1
        %v4441 = vsel %vm1106, %v4436, %v4440
        %v4443 = vshrl.u32 %v4312, 16
        %v4445 = vshll.u32 %v4312, 16
        %v4447 = vrot.slane %v4445, 1
        %v4448 = vor.u32 %v4443, %v4447
        %v4450 = vshll.u32 %v4360, 16
        %v4452 = vrot.slane %v4450, 1
        %v4453 = vsel %vm1106, %v4448, %v4452
        %v4455 = vshrl.u32 %v4313, 16
        %v4457 = vshll.u32 %v4313, 16
        %v4459 = vrot.slane %v4457, 1
        %v4460 = vor.u32 %v4455, %v4459
        %v4462 = vshll.u32 %v4361, 16
        %v4464 = vrot.slane %v4462, 1
        %v4465 = vsel %vm1106, %v4460, %v4464
        %v4467 = vshrl.u32 %v4314, 16
        %v4469 = vshll.u32 %v4314, 16
        %v4471 = vrot.slane %v4469, 1
        %v4472 = vor.u32 %v4467, %v4471
        %v4474 = vshll.u32 %v4362, 16
        %v4476 = vrot.slane %v4474, 1
        %v4477 = vsel %vm1106, %v4472, %v4476
        %v4479 = vshrl.u32 %v4315, 16
        %v4481 = vshll.u32 %v4315, 16
        %v4483 = vrot.slane %v4481, 1
        %v4484 = vor.u32 %v4479, %v4483
        %v4486 = vshll.u32 %v4363, 16
        %v4488 = vrot.slane %v4486, 1
        %v4489 = vsel %vm1106, %v4484, %v4488
        %v4491 = vshrl.u32 %v4316, 16
        %v4493 = vshll.u32 %v4316, 16
        %v4495 = vrot.slane %v4493, 1
        %v4496 = vor.u32 %v4491, %v4495
        %v4498 = vshll.u32 %v4364, 16
        %v4500 = vrot.slane %v4498, 1
        %v4501 = vsel %vm1106, %v4496, %v4500
        %v4503 = vshrl.u32 %v4317, 16
        %v4505 = vshll.u32 %v4317, 16
        %v4507 = vrot.slane %v4505, 1
        %v4508 = vor.u32 %v4503, %v4507
        %v4510 = vshll.u32 %v4365, 16
        %v4512 = vrot.slane %v4510, 1
        %v4513 = vsel %vm1106, %v4508, %v4512
        %v4515 = vshrl.u32 %v4318, 16
        %v4517 = vshll.u32 %v4318, 16
        %v4519 = vrot.slane %v4517, 1
        %v4520 = vor.u32 %v4515, %v4519
        %v4522 = vshll.u32 %v4366, 16
        %v4524 = vrot.slane %v4522, 1
        %v4525 = vsel %vm1106, %v4520, %v4524
        %v4527 = vshrl.u32 %v4319, 16
        %v4529 = vshll.u32 %v4319, 16
        %v4531 = vrot.slane %v4529, 1
        %v4532 = vor.u32 %v4527, %v4531
        %v4534 = vshll.u32 %v4367, 16
        %v4536 = vrot.slane %v4534, 1
        %v4537 = vsel %vm1106, %v4532, %v4536
        %v4539 = vshrl.u32 %v4320, 16
        %v4541 = vshll.u32 %v4320, 16
        %v4543 = vrot.slane %v4541, 1
        %v4544 = vor.u32 %v4539, %v4543
        %v4546 = vshll.u32 %v4368, 16
        %v4548 = vrot.slane %v4546, 1
        %v4549 = vsel %vm1106, %v4544, %v4548
        %v4551 = vshrl.u32 %v4321, 16
        %v4553 = vshll.u32 %v4321, 16
        %v4555 = vrot.slane %v4553, 1
        %v4556 = vor.u32 %v4551, %v4555
        %v4558 = vshll.u32 %v4369, 16
        %v4560 = vrot.slane %v4558, 1
        %v4561 = vsel %vm1106, %v4556, %v4560
        %4562 = vrot.lane.b32.xlu0 %v4381, 64
        %v4563 = vpop.permute.xlu0 %4562
        %4564 = vrot.lane.b32.xlu0 %v4393, 64
        %v4565 = vpop.permute.xlu0 %4564
        %4566 = vrot.lane.b32.xlu0 %v4405, 64
        %v4567 = vpop.permute.xlu0 %4566
        %4568 = vrot.lane.b32.xlu0 %v4417, 64
        %v4569 = vpop.permute.xlu0 %4568
        %4570 = vrot.lane.b32.xlu0 %v4429, 64
        %v4571 = vpop.permute.xlu0 %4570
        %4572 = vrot.lane.b32.xlu0 %v4441, 64
        %v4573 = vpop.permute.xlu0 %4572
        %4574 = vrot.lane.b32.xlu0 %v4453, 64
        %v4575 = vpop.permute.xlu0 %4574
        %4576 = vrot.lane.b32.xlu0 %v4465, 64
        %v4577 = vpop.permute.xlu0 %4576
        %4578 = vrot.lane.b32.xlu0 %v4477, 64
        %v4579 = vpop.permute.xlu0 %4578
        %4580 = vrot.lane.b32.xlu0 %v4489, 64
        %v4581 = vpop.permute.xlu0 %4580
        %4582 = vrot.lane.b32.xlu0 %v4501, 64
        %v4583 = vpop.permute.xlu0 %4582
        %4584 = vrot.lane.b32.xlu0 %v4513, 64
        %v4585 = vpop.permute.xlu0 %4584
        %4586 = vrot.lane.b32.xlu0 %v4525, 64
        %v4587 = vpop.permute.xlu0 %4586
        %4588 = vrot.lane.b32.xlu0 %v4537, 64
        %v4589 = vpop.permute.xlu0 %4588
        %4590 = vrot.lane.b32.xlu0 %v4549, 64
        %v4591 = vpop.permute.xlu0 %4590
        %4592 = vrot.lane.b32.xlu0 %v4561, 64
        %v4593 = vpop.permute.xlu0 %4592
        %v4610 = vunpack.c.l.b16 %v4226
        %v4611 = vunpack.c.l.b16 %v4227
        %v4612 = vunpack.c.l.b16 %v4228
        %v4613 = vunpack.c.l.b16 %v4229
        %v4614 = vunpack.c.l.b16 %v4230
        %v4615 = vunpack.c.l.b16 %v4231
        %v4616 = vunpack.c.l.b16 %v4232
        %v4617 = vunpack.c.l.b16 %v4233
        %v4618 = vunpack.c.l.b16 %v4234
        %v4619 = vunpack.c.l.b16 %v4235
        %v4620 = vunpack.c.l.b16 %v4236
        %v4621 = vunpack.c.l.b16 %v4237
        %v4622 = vunpack.c.l.b16 %v4238
        %v4623 = vunpack.c.l.b16 %v4239
        %v4624 = vunpack.c.l.b16 %v4240
        %v4625 = vunpack.c.l.b16 %v4241
        %v4626 = vpack.c.b16 %v4275, %v4610
        %v4627 = vpack.c.b16 %v4277, %v4611
        %v4628 = vpack.c.b16 %v4279, %v4612
        %v4629 = vpack.c.b16 %v4281, %v4613
        %v4630 = vpack.c.b16 %v4283, %v4614
        %v4631 = vpack.c.b16 %v4285, %v4615
        %v4632 = vpack.c.b16 %v4287, %v4616
        %v4633 = vpack.c.b16 %v4289, %v4617
        %v4634 = vpack.c.b16 %v4291, %v4618
        %v4635 = vpack.c.b16 %v4293, %v4619
        %v4636 = vpack.c.b16 %v4295, %v4620
        %v4637 = vpack.c.b16 %v4297, %v4621
        %v4638 = vpack.c.b16 %v4299, %v4622
        %v4639 = vpack.c.b16 %v4301, %v4623
        %v4640 = vpack.c.b16 %v4303, %v4624
        %v4641 = vpack.c.b16 %v4305, %v4625
        %v4642 = vrot.slane %v4626, 1
        %v4643 = vrot.slane %v4354, 1
        %v4644 = vsel %vm1379, %v4642, %v4643
        %v4645 = vrot.slane %v4627, 1
        %v4646 = vrot.slane %v4355, 1
        %v4647 = vsel %vm1379, %v4645, %v4646
        %v4648 = vrot.slane %v4628, 1
        %v4649 = vrot.slane %v4356, 1
        %v4650 = vsel %vm1379, %v4648, %v4649
        %v4651 = vrot.slane %v4629, 1
        %v4652 = vrot.slane %v4357, 1
        %v4653 = vsel %vm1379, %v4651, %v4652
        %v4654 = vrot.slane %v4630, 1
        %v4655 = vrot.slane %v4358, 1
        %v4656 = vsel %vm1379, %v4654, %v4655
        %v4657 = vrot.slane %v4631, 1
        %v4658 = vrot.slane %v4359, 1
        %v4659 = vsel %vm1379, %v4657, %v4658
        %v4660 = vrot.slane %v4632, 1
        %v4661 = vrot.slane %v4360, 1
        %v4662 = vsel %vm1379, %v4660, %v4661
        %v4663 = vrot.slane %v4633, 1
        %v4664 = vrot.slane %v4361, 1
        %v4665 = vsel %vm1379, %v4663, %v4664
        %v4666 = vrot.slane %v4634, 1
        %v4667 = vrot.slane %v4362, 1
        %v4668 = vsel %vm1379, %v4666, %v4667
        %v4669 = vrot.slane %v4635, 1
        %v4670 = vrot.slane %v4363, 1
        %v4671 = vsel %vm1379, %v4669, %v4670
        %v4672 = vrot.slane %v4636, 1
        %v4673 = vrot.slane %v4364, 1
        %v4674 = vsel %vm1379, %v4672, %v4673
        %v4675 = vrot.slane %v4637, 1
        %v4676 = vrot.slane %v4365, 1
        %v4677 = vsel %vm1379, %v4675, %v4676
        %v4678 = vrot.slane %v4638, 1
        %v4679 = vrot.slane %v4366, 1
        %v4680 = vsel %vm1379, %v4678, %v4679
        %v4681 = vrot.slane %v4639, 1
        %v4682 = vrot.slane %v4367, 1
        %v4683 = vsel %vm1379, %v4681, %v4682
        %v4684 = vrot.slane %v4640, 1
        %v4685 = vrot.slane %v4368, 1
        %v4686 = vsel %vm1379, %v4684, %v4685
        %v4687 = vrot.slane %v4641, 1
        %v4688 = vrot.slane %v4369, 1
        %v4689 = vsel %vm1379, %v4687, %v4688
        %v4691 = vsel %vm1428, %v4306, %v4563
        %v4694 = vsel %vm1428, %v4307, %v4565
        %v4697 = vsel %vm1428, %v4308, %v4567
        %v4700 = vsel %vm1428, %v4309, %v4569
        %v4703 = vsel %vm1428, %v4310, %v4571
        %v4706 = vsel %vm1428, %v4311, %v4573
        %v4709 = vsel %vm1428, %v4312, %v4575
        %v4712 = vsel %vm1428, %v4313, %v4577
        %v4715 = vsel %vm1428, %v4314, %v4579
        %v4718 = vsel %vm1428, %v4315, %v4581
        %v4721 = vsel %vm1428, %v4316, %v4583
        %v4724 = vsel %vm1428, %v4317, %v4585
        %v4727 = vsel %vm1428, %v4318, %v4587
        %v4730 = vsel %vm1428, %v4319, %v4589
        %v4733 = vsel %vm1428, %v4320, %v4591
        %v4736 = vsel %vm1428, %v4321, %v4593
        %v4738 = vld [vmem:[%s3] sm:$0xf]
        %v4739 = vld [vmem:[%s3 + $0x4] sm:$0xf]
        %v4740 = vld [vmem:[%s3 + $0x8] sm:$0xf]
        %v4741 = vld [vmem:[%s3 + $0xc] sm:$0xf]
        %v4742 = vld [vmem:[%s3 + $0x10] sm:$0xf]
        %v4743 = vld [vmem:[%s3 + $0x14] sm:$0xf]
        %v4744 = vld [vmem:[%s3 + $0x18] sm:$0xf]
        %v4745 = vld [vmem:[%s3 + $0x1c] sm:$0xf]
        %v4746 = vld [vmem:[%s3 + $0x20] sm:$0xf]
        %v4747 = vld [vmem:[%s3 + $0x24] sm:$0xf]
        %v4748 = vld [vmem:[%s3 + $0x28] sm:$0xf]
        %v4749 = vld [vmem:[%s3 + $0x2c] sm:$0xf]
        %v4750 = vld [vmem:[%s3 + $0x30] sm:$0xf]
        %v4751 = vld [vmem:[%s3 + $0x34] sm:$0xf]
        %v4752 = vld [vmem:[%s3 + $0x38] sm:$0xf]
        %v4753 = vld [vmem:[%s3 + $0x3c] sm:$0xf]
        %v4754 = vld [vmem:[%s3 + $0x40] sm:$0xf]
        %v4755 = vld [vmem:[%s3 + $0x44] sm:$0xf]
        %v4756 = vld [vmem:[%s3 + $0x48] sm:$0xf]
        %v4757 = vld [vmem:[%s3 + $0x4c] sm:$0xf]
        %v4758 = vld [vmem:[%s3 + $0x50] sm:$0xf]
        %v4759 = vld [vmem:[%s3 + $0x54] sm:$0xf]
        %v4760 = vld [vmem:[%s3 + $0x58] sm:$0xf]
        %v4761 = vld [vmem:[%s3 + $0x5c] sm:$0xf]
        %v4786 = vunpack.c.l.b16 %v4738
        %v4787 = vunpack.c.l.b16 %v4739
        %v4788 = vunpack.c.l.b16 %v4740
        %v4789 = vunpack.c.l.b16 %v4741
        %v4790 = vunpack.c.l.b16 %v4742
        %v4791 = vunpack.c.l.b16 %v4743
        %v4792 = vunpack.c.l.b16 %v4744
        %v4793 = vunpack.c.l.b16 %v4745
        %v4794 = vunpack.c.l.b16 %v4746
        %v4795 = vunpack.c.l.b16 %v4747
        %v4796 = vunpack.c.l.b16 %v4748
        %v4797 = vunpack.c.l.b16 %v4749
        %v4798 = vunpack.c.l.b16 %v4750
        %v4799 = vunpack.c.l.b16 %v4751
        %v4800 = vunpack.c.l.b16 %v4752
        %v4801 = vunpack.c.l.b16 %v4753
        %v4802 = vunpack.c.l.b16 %v4754
        %v4803 = vunpack.c.l.b16 %v4755
        %v4804 = vunpack.c.l.b16 %v4756
        %v4805 = vunpack.c.l.b16 %v4757
        %v4806 = vunpack.c.l.b16 %v4758
        %v4807 = vunpack.c.l.b16 %v4759
        %v4808 = vunpack.c.l.b16 %v4760
        %v4809 = vunpack.c.l.b16 %v4761
        %v4810 = vpack.c.b16 %v4787, %v4786
        %v4811 = vpack.c.b16 %v4789, %v4788
        %v4812 = vpack.c.b16 %v4791, %v4790
        %v4813 = vpack.c.b16 %v4793, %v4792
        %v4814 = vpack.c.b16 %v4795, %v4794
        %v4815 = vpack.c.b16 %v4797, %v4796
        %v4816 = vpack.c.b16 %v4799, %v4798
        %v4817 = vpack.c.b16 %v4801, %v4800
        %v4818 = vpack.c.b16 %v4803, %v4802
        %v4819 = vpack.c.b16 %v4805, %v4804
        %v4820 = vpack.c.b16 %v4807, %v4806
        %v4821 = vpack.c.b16 %v4809, %v4808
        %v4835 = vsel %vm1428, %v4644, 0
        %v4838 = vsel %vm1428, %v4647, 0
        %v4841 = vsel %vm1428, %v4650, 0
        %v4844 = vsel %vm1428, %v4653, 0
        %v4847 = vsel %vm1428, %v4656, 0
        %v4850 = vsel %vm1428, %v4659, 0
        %v4853 = vsel %vm1428, %v4662, 0
        %v4856 = vsel %vm1428, %v4665, 0
        %v4859 = vsel %vm1428, %v4668, 0
        %v4862 = vsel %vm1428, %v4671, 0
        %v4865 = vsel %vm1428, %v4674, 0
        %v4868 = vsel %vm1428, %v4677, 0
        %v4871 = vsel %vm1428, %v4680, 0
        %v4874 = vsel %vm1428, %v4683, 0
        %v4877 = vsel %vm1428, %v4686, 0
        %v4880 = vsel %vm1428, %v4689, 0
        %4882 = vmatprep.subr.bf16.mxu0 0
        %4883 = vmatpush1.bf16.msra.mxu0 %v4817
        %4884 = vmatprep.subr.bf16.mxu0 0
        %4885 = vmatpush1.bf16.msra.mxu0 %v4816
        %4886 = vmatprep.subr.bf16.mxu0 0
        %4887 = vmatpush1.bf16.msra.mxu0 %v4815
        %4888 = vmatprep.subr.bf16.mxu0 0
        %4889 = vmatpush1.bf16.msra.mxu0 %v4814
        %4890 = vmatprep.subr.bf16.mxu0 0
        %4891 = vmatpush1.bf16.msra.mxu0 %v4813
        %4892 = vmatprep.subr.bf16.mxu0 0
        %4893 = vmatpush1.bf16.msra.mxu0 %v4812
        %4894 = vmatprep.subr.bf16.mxu0 0
        %4895 = vmatpush1.bf16.msra.mxu0 %v4811
        %4896 = vmatprep.subr.bf16.mxu0 0
        %4897 = vmatpush1.bf16.msra.mxu0 %v4810
        %4898 = vmatprep.subr.bf16.mxu0 0
        %4899 = vmatpush2.bf16.msra.mxu0 0
        %4900 = vmatprep.subr.bf16.mxu0 0
        %4901 = vmatpush2.bf16.msra.mxu0 0
        %4902 = vmatprep.subr.bf16.mxu0 0
        %4903 = vmatpush2.bf16.msra.mxu0 0
        %4904 = vmatprep.subr.bf16.mxu0 0
        %4905 = vmatpush2.bf16.msra.mxu0 0
        %4906 = vmatprep.subr.bf16.mxu0 0
        %4907 = vmatpush2.bf16.msra.mxu0 %v4821
        %4908 = vmatprep.subr.bf16.mxu0 0
        %4909 = vmatpush2.bf16.msra.mxu0 %v4820
        %4910 = vmatprep.subr.bf16.mxu0 0
        %4911 = vmatpush2.bf16.msra.mxu0 %v4819
        %4912 = vmatprep.subr.bf16.mxu0 0
        %4913 = vmatpush2.bf16.msra.mxu0 %v4818
        %4914 = vmatprep.mubr.bf16.mxu0 %v4835
        %4915 = vmatmul.mubr.bf16.gmra.mxu0 %v4691
        %v4916 = vpop.f32.mrf.mxu0
        %v4917 = vadd.f32 0.0, %v4916
        %v4918 = vpop.f32.mrf.mxu0
        %v4919 = vpop.f32.mrf.mxu0
        %v4920 = vadd.f32 0.0, %v4919
        %v4921 = vpop.f32.mrf.mxu0
        %4922 = vmatprep.mubr.bf16.mxu0 %v4838
        %4923 = vmatmul.mubr.bf16.gmra.mxu0 %v4694
        %v4924 = vpop.f32.mrf.mxu0
        %v4925 = vadd.f32 0.0, %v4924
        %v4926 = vpop.f32.mrf.mxu0
        %v4927 = vpop.f32.mrf.mxu0
        %v4928 = vadd.f32 0.0, %v4927
        %v4929 = vpop.f32.mrf.mxu0
        %4930 = vmatprep.mubr.bf16.mxu0 %v4841
        %4931 = vmatmul.mubr.bf16.gmra.mxu0 %v4697
        %v4932 = vpop.f32.mrf.mxu0
        %v4933 = vadd.f32 0.0, %v4932
        %v4934 = vpop.f32.mrf.mxu0
        %v4935 = vpop.f32.mrf.mxu0
        %v4936 = vadd.f32 0.0, %v4935
        %v4937 = vpop.f32.mrf.mxu0
        %4938 = vmatprep.mubr.bf16.mxu0 %v4844
        %4939 = vmatmul.mubr.bf16.gmra.mxu0 %v4700
        %v4940 = vpop.f32.mrf.mxu0
        %v4941 = vadd.f32 0.0, %v4940
        %v4942 = vpop.f32.mrf.mxu0
        %v4943 = vpop.f32.mrf.mxu0
        %v4944 = vadd.f32 0.0, %v4943
        %v4945 = vpop.f32.mrf.mxu0
        %4946 = vmatprep.mubr.bf16.mxu0 %v4847
        %4947 = vmatmul.mubr.bf16.gmra.mxu0 %v4703
        %v4948 = vpop.f32.mrf.mxu0
        %v4949 = vadd.f32 0.0, %v4948
        %v4950 = vpop.f32.mrf.mxu0
        %v4951 = vpop.f32.mrf.mxu0
        %v4952 = vadd.f32 0.0, %v4951
        %v4953 = vpop.f32.mrf.mxu0
        %4954 = vmatprep.mubr.bf16.mxu0 %v4850
        %4955 = vmatmul.mubr.bf16.gmra.mxu0 %v4706
        %v4956 = vpop.f32.mrf.mxu0
        %v4957 = vadd.f32 0.0, %v4956
        %v4958 = vpop.f32.mrf.mxu0
        %v4959 = vpop.f32.mrf.mxu0
        %v4960 = vadd.f32 0.0, %v4959
        %v4961 = vpop.f32.mrf.mxu0
        %4962 = vmatprep.mubr.bf16.mxu0 %v4853
        %4963 = vmatmul.mubr.bf16.gmra.mxu0 %v4709
        %v4964 = vpop.f32.mrf.mxu0
        %v4965 = vadd.f32 0.0, %v4964
        %v4966 = vpop.f32.mrf.mxu0
        %v4967 = vpop.f32.mrf.mxu0
        %v4968 = vadd.f32 0.0, %v4967
        %v4969 = vpop.f32.mrf.mxu0
        %4970 = vmatprep.mubr.bf16.mxu0 %v4856
        %4971 = vmatmul.mubr.bf16.gmra.mxu0 %v4712
        %v4972 = vpop.f32.mrf.mxu0
        %v4973 = vadd.f32 0.0, %v4972
        %v4974 = vpop.f32.mrf.mxu0
        %v4975 = vpop.f32.mrf.mxu0
        %v4976 = vadd.f32 0.0, %v4975
        %v4977 = vpop.f32.mrf.mxu0
        %4978 = vmatprep.mubr.bf16.mxu0 %v4859
        %4979 = vmatmul.mubr.bf16.gmra.mxu0 %v4715
        %v4980 = vpop.f32.mrf.mxu0
        %v4981 = vadd.f32 0.0, %v4980
        %v4982 = vpop.f32.mrf.mxu0
        %v4983 = vpop.f32.mrf.mxu0
        %v4984 = vadd.f32 0.0, %v4983
        %v4985 = vpop.f32.mrf.mxu0
        %4986 = vmatprep.mubr.bf16.mxu0 %v4862
        %4987 = vmatmul.mubr.bf16.gmra.mxu0 %v4718
        %v4988 = vpop.f32.mrf.mxu0
        %v4989 = vadd.f32 0.0, %v4988
        %v4990 = vpop.f32.mrf.mxu0
        %v4991 = vpop.f32.mrf.mxu0
        %v4992 = vadd.f32 0.0, %v4991
        %v4993 = vpop.f32.mrf.mxu0
        %4994 = vmatprep.mubr.bf16.mxu0 %v4865
        %4995 = vmatmul.mubr.bf16.gmra.mxu0 %v4721
        %v4996 = vpop.f32.mrf.mxu0
        %v4997 = vadd.f32 0.0, %v4996
        %v4998 = vpop.f32.mrf.mxu0
        %v4999 = vpop.f32.mrf.mxu0
        %v5000 = vadd.f32 0.0, %v4999
        %v5001 = vpop.f32.mrf.mxu0
        %5002 = vmatprep.mubr.bf16.mxu0 %v4868
        %5003 = vmatmul.mubr.bf16.gmra.mxu0 %v4724
        %v5004 = vpop.f32.mrf.mxu0
        %v5005 = vadd.f32 0.0, %v5004
        %v5006 = vpop.f32.mrf.mxu0
        %v5007 = vpop.f32.mrf.mxu0
        %v5008 = vadd.f32 0.0, %v5007
        %v5009 = vpop.f32.mrf.mxu0
        %5010 = vmatprep.mubr.bf16.mxu0 %v4871
        %5011 = vmatmul.mubr.bf16.gmra.mxu0 %v4727
        %v5012 = vpop.f32.mrf.mxu0
        %v5013 = vadd.f32 0.0, %v5012
        %v5014 = vpop.f32.mrf.mxu0
        %v5015 = vpop.f32.mrf.mxu0
        %v5016 = vadd.f32 0.0, %v5015
        %v5017 = vpop.f32.mrf.mxu0
        %5018 = vmatprep.mubr.bf16.mxu0 %v4874
        %5019 = vmatmul.mubr.bf16.gmra.mxu0 %v4730
        %v5020 = vpop.f32.mrf.mxu0
        %v5021 = vadd.f32 0.0, %v5020
        %v5022 = vpop.f32.mrf.mxu0
        %v5023 = vpop.f32.mrf.mxu0
        %v5024 = vadd.f32 0.0, %v5023
        %v5025 = vpop.f32.mrf.mxu0
        %5026 = vmatprep.mubr.bf16.mxu0 %v4877
        %5027 = vmatmul.mubr.bf16.gmra.mxu0 %v4733
        %v5028 = vpop.f32.mrf.mxu0
        %v5029 = vadd.f32 0.0, %v5028
        %v5030 = vpop.f32.mrf.mxu0
        %v5031 = vpop.f32.mrf.mxu0
        %v5032 = vadd.f32 0.0, %v5031
        %v5033 = vpop.f32.mrf.mxu0
        %5034 = vmatprep.mubr.bf16.mxu0 %v4880
        %5035 = vmatmul.mubr.bf16.gmra.mxu0 %v4736
        %v5036 = vpop.f32.mrf.mxu0
        %v5037 = vadd.f32 0.0, %v5036
        %v5038 = vpop.f32.mrf.mxu0
        %v5039 = vpop.f32.mrf.mxu0
        %v5040 = vadd.f32 0.0, %v5039
        %v5041 = vpop.f32.mrf.mxu0
        %5042 = vdwg.mxu0
        %v5043 = vadd.f32 %v4176, %v4917
        %v5044 = vadd.f32 %v4176, %v4920
        %v5045 = vadd.f32 %v4176, %v4925
        %v5046 = vadd.f32 %v4176, %v4928
        %v5047 = vadd.f32 %v4176, %v4933
        %v5048 = vadd.f32 %v4176, %v4936
        %v5049 = vadd.f32 %v4176, %v4941
        %v5050 = vadd.f32 %v4176, %v4944
        %v5051 = vadd.f32 %v4176, %v4949
        %v5052 = vadd.f32 %v4176, %v4952
        %v5053 = vadd.f32 %v4176, %v4957
        %v5054 = vadd.f32 %v4176, %v4960
        %v5055 = vadd.f32 %v4176, %v4965
        %v5056 = vadd.f32 %v4176, %v4968
        %v5057 = vadd.f32 %v4176, %v4973
        %v5058 = vadd.f32 %v4176, %v4976
        %v5059 = vadd.f32 %v4176, %v4981
        %v5060 = vadd.f32 %v4176, %v4984
        %v5061 = vadd.f32 %v4176, %v4989
        %v5062 = vadd.f32 %v4176, %v4992
        %v5063 = vadd.f32 %v4176, %v4997
        %v5064 = vadd.f32 %v4176, %v5000
        %v5065 = vadd.f32 %v4176, %v5005
        %v5066 = vadd.f32 %v4176, %v5008
        %v5067 = vadd.f32 %v4176, %v5013
        %v5068 = vadd.f32 %v4176, %v5016
        %v5069 = vadd.f32 %v4176, %v5021
        %v5070 = vadd.f32 %v4176, %v5024
        %v5071 = vadd.f32 %v4176, %v5029
        %v5072 = vadd.f32 %v4176, %v5032
        %v5073 = vadd.f32 %v4176, %v5037
        %v5074 = vadd.f32 %v4176, %v5040
        %v5075 = vld [vmem:[%s342] sm:$0xf]
        %v5076 = vld [vmem:[%s342 + $0x4] sm:$0xf]
        %v5077 = vld [vmem:[%s342 + $0xc] sm:$0xf]
        %v5078 = vld [vmem:[%s342 + $0x10] sm:$0xf]
        %v5079 = vld [vmem:[%s342 + $0x18] sm:$0xf]
        %v5080 = vld [vmem:[%s342 + $0x1c] sm:$0xf]
        %v5081 = vld [vmem:[%s342 + $0x24] sm:$0xf]
        %v5082 = vld [vmem:[%s342 + $0x28] sm:$0xf]
        %v5083 = vld [vmem:[%s342 + $0x30] sm:$0xf]
        %v5084 = vld [vmem:[%s342 + $0x34] sm:$0xf]
        %v5085 = vld [vmem:[%s342 + $0x3c] sm:$0xf]
        %v5086 = vld [vmem:[%s342 + $0x40] sm:$0xf]
        %v5087 = vld [vmem:[%s342 + $0x48] sm:$0xf]
        %v5088 = vld [vmem:[%s342 + $0x4c] sm:$0xf]
        %v5089 = vld [vmem:[%s342 + $0x54] sm:$0xf]
        %v5090 = vld [vmem:[%s342 + $0x58] sm:$0xf]
        %v5091 = vld [vmem:[%s342 + $0x60] sm:$0xf]
        %v5092 = vld [vmem:[%s342 + $0x64] sm:$0xf]
        %v5093 = vld [vmem:[%s342 + $0x6c] sm:$0xf]
        %v5094 = vld [vmem:[%s342 + $0x70] sm:$0xf]
        %v5095 = vld [vmem:[%s342 + $0x78] sm:$0xf]
        %v5096 = vld [vmem:[%s342 + $0x7c] sm:$0xf]
        %v5097 = vld [vmem:[%s342 + $0x84] sm:$0xf]
        %v5098 = vld [vmem:[%s342 + $0x88] sm:$0xf]
        %v5099 = vld [vmem:[%s342 + $0x90] sm:$0xf]
        %v5100 = vld [vmem:[%s342 + $0x94] sm:$0xf]
        %v5101 = vld [vmem:[%s342 + $0x9c] sm:$0xf]
        %v5102 = vld [vmem:[%s342 + $0xa0] sm:$0xf]
        %v5103 = vld [vmem:[%s342 + $0xa8] sm:$0xf]
        %v5104 = vld [vmem:[%s342 + $0xac] sm:$0xf]
        %v5105 = vld [vmem:[%s342 + $0xb4] sm:$0xf]
        %v5106 = vld [vmem:[%s342 + $0xb8] sm:$0xf]
        %v5107 = vld [vmem:[%s342 + $0x8] sm:$0x1]
        %v5108 = vld [vmem:[%s342 + $0x14] sm:$0x1]
        %v5109 = vld [vmem:[%s342 + $0x20] sm:$0x1]
        %v5110 = vld [vmem:[%s342 + $0x2c] sm:$0x1]
        %v5111 = vld [vmem:[%s342 + $0x38] sm:$0x1]
        %v5112 = vld [vmem:[%s342 + $0x44] sm:$0x1]
        %v5113 = vld [vmem:[%s342 + $0x50] sm:$0x1]
        %v5114 = vld [vmem:[%s342 + $0x5c] sm:$0x1]
        %v5115 = vld [vmem:[%s342 + $0x68] sm:$0x1]
        %v5116 = vld [vmem:[%s342 + $0x74] sm:$0x1]
        %v5117 = vld [vmem:[%s342 + $0x80] sm:$0x1]
        %v5118 = vld [vmem:[%s342 + $0x8c] sm:$0x1]
        %v5119 = vld [vmem:[%s342 + $0x98] sm:$0x1]
        %v5120 = vld [vmem:[%s342 + $0xa4] sm:$0x1]
        %v5121 = vld [vmem:[%s342 + $0xb0] sm:$0x1]
        %v5122 = vld [vmem:[%s342 + $0xbc] sm:$0x1]
        %v5123 = vld [vmem:[%s342] sm:$0xe]
        %v5124 = vld [vmem:[%s342 + $0xc] sm:$0xe]
        %v5125 = vld [vmem:[%s342 + $0x18] sm:$0xe]
        %v5126 = vld [vmem:[%s342 + $0x24] sm:$0xe]
        %v5127 = vld [vmem:[%s342 + $0x30] sm:$0xe]
        %v5128 = vld [vmem:[%s342 + $0x3c] sm:$0xe]
        %v5129 = vld [vmem:[%s342 + $0x48] sm:$0xe]
        %v5130 = vld [vmem:[%s342 + $0x54] sm:$0xe]
        %v5131 = vld [vmem:[%s342 + $0x60] sm:$0xe]
        %v5132 = vld [vmem:[%s342 + $0x6c] sm:$0xe]
        %v5133 = vld [vmem:[%s342 + $0x78] sm:$0xe]
        %v5134 = vld [vmem:[%s342 + $0x84] sm:$0xe]
        %v5135 = vld [vmem:[%s342 + $0x90] sm:$0xe]
        %v5136 = vld [vmem:[%s342 + $0x9c] sm:$0xe]
        %v5137 = vld [vmem:[%s342 + $0xa8] sm:$0xe]
        %v5138 = vld [vmem:[%s342 + $0xb4] sm:$0xe]
        %v5171 = vunpack.c.l.b16 %v5075
        %v5172 = vunpack.c.l.b16 %v5076
        %v5173 = vunpack.c.l.b16 %v5077
        %v5174 = vunpack.c.l.b16 %v5078
        %v5175 = vunpack.c.l.b16 %v5079
        %v5176 = vunpack.c.l.b16 %v5080
        %v5177 = vunpack.c.l.b16 %v5081
        %v5178 = vunpack.c.l.b16 %v5082
        %v5179 = vunpack.c.l.b16 %v5083
        %v5180 = vunpack.c.l.b16 %v5084
        %v5181 = vunpack.c.l.b16 %v5085
        %v5182 = vunpack.c.l.b16 %v5086
        %v5183 = vunpack.c.l.b16 %v5087
        %v5184 = vunpack.c.l.b16 %v5088
        %v5185 = vunpack.c.l.b16 %v5089
        %v5186 = vunpack.c.l.b16 %v5090
        %v5187 = vunpack.c.l.b16 %v5091
        %v5188 = vunpack.c.l.b16 %v5092
        %v5189 = vunpack.c.l.b16 %v5093
        %v5190 = vunpack.c.l.b16 %v5094
        %v5191 = vunpack.c.l.b16 %v5095
        %v5192 = vunpack.c.l.b16 %v5096
        %v5193 = vunpack.c.l.b16 %v5097
        %v5194 = vunpack.c.l.b16 %v5098
        %v5195 = vunpack.c.l.b16 %v5099
        %v5196 = vunpack.c.l.b16 %v5100
        %v5197 = vunpack.c.l.b16 %v5101
        %v5198 = vunpack.c.l.b16 %v5102
        %v5199 = vunpack.c.l.b16 %v5103
        %v5200 = vunpack.c.l.b16 %v5104
        %v5201 = vunpack.c.l.b16 %v5105
        %v5202 = vunpack.c.l.b16 %v5106
        %v5203 = vpack.c.b16 %v5172, %v5171
        %v5204 = vpack.c.b16 %v5174, %v5173
        %v5205 = vpack.c.b16 %v5176, %v5175
        %v5206 = vpack.c.b16 %v5178, %v5177
        %v5207 = vpack.c.b16 %v5180, %v5179
        %v5208 = vpack.c.b16 %v5182, %v5181
        %v5209 = vpack.c.b16 %v5184, %v5183
        %v5210 = vpack.c.b16 %v5186, %v5185
        %v5211 = vpack.c.b16 %v5188, %v5187
        %v5212 = vpack.c.b16 %v5190, %v5189
        %v5213 = vpack.c.b16 %v5192, %v5191
        %v5214 = vpack.c.b16 %v5194, %v5193
        %v5215 = vpack.c.b16 %v5196, %v5195
        %v5216 = vpack.c.b16 %v5198, %v5197
        %v5217 = vpack.c.b16 %v5200, %v5199
        %v5218 = vpack.c.b16 %v5202, %v5201
        %v5235 = vunpack.c.l.b16 %v5107
        %v5236 = vunpack.c.l.b16 %v5108
        %v5237 = vunpack.c.l.b16 %v5109
        %v5238 = vunpack.c.l.b16 %v5110
        %v5239 = vunpack.c.l.b16 %v5111
        %v5240 = vunpack.c.l.b16 %v5112
        %v5241 = vunpack.c.l.b16 %v5113
        %v5242 = vunpack.c.l.b16 %v5114
        %v5243 = vunpack.c.l.b16 %v5115
        %v5244 = vunpack.c.l.b16 %v5116
        %v5245 = vunpack.c.l.b16 %v5117
        %v5246 = vunpack.c.l.b16 %v5118
        %v5247 = vunpack.c.l.b16 %v5119
        %v5248 = vunpack.c.l.b16 %v5120
        %v5249 = vunpack.c.l.b16 %v5121
        %v5250 = vunpack.c.l.b16 %v5122
        %v5251 = vpack.c.b16 %v5235, %v5235
        %v5252 = vpack.c.b16 %v5236, %v5236
        %v5253 = vpack.c.b16 %v5237, %v5237
        %v5254 = vpack.c.b16 %v5238, %v5238
        %v5255 = vpack.c.b16 %v5239, %v5239
        %v5256 = vpack.c.b16 %v5240, %v5240
        %v5257 = vpack.c.b16 %v5241, %v5241
        %v5258 = vpack.c.b16 %v5242, %v5242
        %v5259 = vpack.c.b16 %v5243, %v5243
        %v5260 = vpack.c.b16 %v5244, %v5244
        %v5261 = vpack.c.b16 %v5245, %v5245
        %v5262 = vpack.c.b16 %v5246, %v5246
        %v5263 = vpack.c.b16 %v5247, %v5247
        %v5264 = vpack.c.b16 %v5248, %v5248
        %v5265 = vpack.c.b16 %v5249, %v5249
        %v5266 = vpack.c.b16 %v5250, %v5250
        %v5268 = vshrl.u32 %v5203, 16
        %v5270 = vshll.u32 %v5203, 16
        %v5272 = vrot.slane %v5270, 1
        %v5273 = vor.u32 %v5268, %v5272
        %v5275 = vshll.u32 %v5251, 16
        %v5277 = vrot.slane %v5275, 1
        %v5278 = vsel %vm1106, %v5273, %v5277
        %v5280 = vshrl.u32 %v5204, 16
        %v5282 = vshll.u32 %v5204, 16
        %v5284 = vrot.slane %v5282, 1
        %v5285 = vor.u32 %v5280, %v5284
        %v5287 = vshll.u32 %v5252, 16
        %v5289 = vrot.slane %v5287, 1
        %v5290 = vsel %vm1106, %v5285, %v5289
        %v5292 = vshrl.u32 %v5205, 16
        %v5294 = vshll.u32 %v5205, 16
        %v5296 = vrot.slane %v5294, 1
        %v5297 = vor.u32 %v5292, %v5296
        %v5299 = vshll.u32 %v5253, 16
        %v5301 = vrot.slane %v5299, 1
        %v5302 = vsel %vm1106, %v5297, %v5301
        %v5304 = vshrl.u32 %v5206, 16
        %v5306 = vshll.u32 %v5206, 16
        %v5308 = vrot.slane %v5306, 1
        %v5309 = vor.u32 %v5304, %v5308
        %v5311 = vshll.u32 %v5254, 16
        %v5313 = vrot.slane %v5311, 1
        %v5314 = vsel %vm1106, %v5309, %v5313
        %v5316 = vshrl.u32 %v5207, 16
        %v5318 = vshll.u32 %v5207, 16
        %v5320 = vrot.slane %v5318, 1
        %v5321 = vor.u32 %v5316, %v5320
        %v5323 = vshll.u32 %v5255, 16
        %v5325 = vrot.slane %v5323, 1
        %v5326 = vsel %vm1106, %v5321, %v5325
        %v5328 = vshrl.u32 %v5208, 16
        %v5330 = vshll.u32 %v5208, 16
        %v5332 = vrot.slane %v5330, 1
        %v5333 = vor.u32 %v5328, %v5332
        %v5335 = vshll.u32 %v5256, 16
        %v5337 = vrot.slane %v5335, 1
        %v5338 = vsel %vm1106, %v5333, %v5337
        %v5340 = vshrl.u32 %v5209, 16
        %v5342 = vshll.u32 %v5209, 16
        %v5344 = vrot.slane %v5342, 1
        %v5345 = vor.u32 %v5340, %v5344
        %v5347 = vshll.u32 %v5257, 16
        %v5349 = vrot.slane %v5347, 1
        %v5350 = vsel %vm1106, %v5345, %v5349
        %v5352 = vshrl.u32 %v5210, 16
        %v5354 = vshll.u32 %v5210, 16
        %v5356 = vrot.slane %v5354, 1
        %v5357 = vor.u32 %v5352, %v5356
        %v5359 = vshll.u32 %v5258, 16
        %v5361 = vrot.slane %v5359, 1
        %v5362 = vsel %vm1106, %v5357, %v5361
        %v5364 = vshrl.u32 %v5211, 16
        %v5366 = vshll.u32 %v5211, 16
        %v5368 = vrot.slane %v5366, 1
        %v5369 = vor.u32 %v5364, %v5368
        %v5371 = vshll.u32 %v5259, 16
        %v5373 = vrot.slane %v5371, 1
        %v5374 = vsel %vm1106, %v5369, %v5373
        %v5376 = vshrl.u32 %v5212, 16
        %v5378 = vshll.u32 %v5212, 16
        %v5380 = vrot.slane %v5378, 1
        %v5381 = vor.u32 %v5376, %v5380
        %v5383 = vshll.u32 %v5260, 16
        %v5385 = vrot.slane %v5383, 1
        %v5386 = vsel %vm1106, %v5381, %v5385
        %v5388 = vshrl.u32 %v5213, 16
        %v5390 = vshll.u32 %v5213, 16
        %v5392 = vrot.slane %v5390, 1
        %v5393 = vor.u32 %v5388, %v5392
        %v5395 = vshll.u32 %v5261, 16
        %v5397 = vrot.slane %v5395, 1
        %v5398 = vsel %vm1106, %v5393, %v5397
        %v5400 = vshrl.u32 %v5214, 16
        %v5402 = vshll.u32 %v5214, 16
        %v5404 = vrot.slane %v5402, 1
        %v5405 = vor.u32 %v5400, %v5404
        %v5407 = vshll.u32 %v5262, 16
        %v5409 = vrot.slane %v5407, 1
        %v5410 = vsel %vm1106, %v5405, %v5409
        %v5412 = vshrl.u32 %v5215, 16
        %v5414 = vshll.u32 %v5215, 16
        %v5416 = vrot.slane %v5414, 1
        %v5417 = vor.u32 %v5412, %v5416
        %v5419 = vshll.u32 %v5263, 16
        %v5421 = vrot.slane %v5419, 1
        %v5422 = vsel %vm1106, %v5417, %v5421
        %v5424 = vshrl.u32 %v5216, 16
        %v5426 = vshll.u32 %v5216, 16
        %v5428 = vrot.slane %v5426, 1
        %v5429 = vor.u32 %v5424, %v5428
        %v5431 = vshll.u32 %v5264, 16
        %v5433 = vrot.slane %v5431, 1
        %v5434 = vsel %vm1106, %v5429, %v5433
        %v5436 = vshrl.u32 %v5217, 16
        %v5438 = vshll.u32 %v5217, 16
        %v5440 = vrot.slane %v5438, 1
        %v5441 = vor.u32 %v5436, %v5440
        %v5443 = vshll.u32 %v5265, 16
        %v5445 = vrot.slane %v5443, 1
        %v5446 = vsel %vm1106, %v5441, %v5445
        %v5448 = vshrl.u32 %v5218, 16
        %v5450 = vshll.u32 %v5218, 16
        %v5452 = vrot.slane %v5450, 1
        %v5453 = vor.u32 %v5448, %v5452
        %v5455 = vshll.u32 %v5266, 16
        %v5457 = vrot.slane %v5455, 1
        %v5458 = vsel %vm1106, %v5453, %v5457
        %5459 = vrot.lane.b32.xlu0 %v5278, 64
        %v5460 = vpop.permute.xlu0 %5459
        %5461 = vrot.lane.b32.xlu0 %v5290, 64
        %v5462 = vpop.permute.xlu0 %5461
        %5463 = vrot.lane.b32.xlu0 %v5302, 64
        %v5464 = vpop.permute.xlu0 %5463
        %5465 = vrot.lane.b32.xlu0 %v5314, 64
        %v5466 = vpop.permute.xlu0 %5465
        %5467 = vrot.lane.b32.xlu0 %v5326, 64
        %v5468 = vpop.permute.xlu0 %5467
        %5469 = vrot.lane.b32.xlu0 %v5338, 64
        %v5470 = vpop.permute.xlu0 %5469
        %5471 = vrot.lane.b32.xlu0 %v5350, 64
        %v5472 = vpop.permute.xlu0 %5471
        %5473 = vrot.lane.b32.xlu0 %v5362, 64
        %v5474 = vpop.permute.xlu0 %5473
        %5475 = vrot.lane.b32.xlu0 %v5374, 64
        %v5476 = vpop.permute.xlu0 %5475
        %5477 = vrot.lane.b32.xlu0 %v5386, 64
        %v5478 = vpop.permute.xlu0 %5477
        %5479 = vrot.lane.b32.xlu0 %v5398, 64
        %v5480 = vpop.permute.xlu0 %5479
        %5481 = vrot.lane.b32.xlu0 %v5410, 64
        %v5482 = vpop.permute.xlu0 %5481
        %5483 = vrot.lane.b32.xlu0 %v5422, 64
        %v5484 = vpop.permute.xlu0 %5483
        %5485 = vrot.lane.b32.xlu0 %v5434, 64
        %v5486 = vpop.permute.xlu0 %5485
        %5487 = vrot.lane.b32.xlu0 %v5446, 64
        %v5488 = vpop.permute.xlu0 %5487
        %5489 = vrot.lane.b32.xlu0 %v5458, 64
        %v5490 = vpop.permute.xlu0 %5489
        %v5507 = vunpack.c.l.b16 %v5123
        %v5508 = vunpack.c.l.b16 %v5124
        %v5509 = vunpack.c.l.b16 %v5125
        %v5510 = vunpack.c.l.b16 %v5126
        %v5511 = vunpack.c.l.b16 %v5127
        %v5512 = vunpack.c.l.b16 %v5128
        %v5513 = vunpack.c.l.b16 %v5129
        %v5514 = vunpack.c.l.b16 %v5130
        %v5515 = vunpack.c.l.b16 %v5131
        %v5516 = vunpack.c.l.b16 %v5132
        %v5517 = vunpack.c.l.b16 %v5133
        %v5518 = vunpack.c.l.b16 %v5134
        %v5519 = vunpack.c.l.b16 %v5135
        %v5520 = vunpack.c.l.b16 %v5136
        %v5521 = vunpack.c.l.b16 %v5137
        %v5522 = vunpack.c.l.b16 %v5138
        %v5523 = vpack.c.b16 %v5172, %v5507
        %v5524 = vpack.c.b16 %v5174, %v5508
        %v5525 = vpack.c.b16 %v5176, %v5509
        %v5526 = vpack.c.b16 %v5178, %v5510
        %v5527 = vpack.c.b16 %v5180, %v5511
        %v5528 = vpack.c.b16 %v5182, %v5512
        %v5529 = vpack.c.b16 %v5184, %v5513
        %v5530 = vpack.c.b16 %v5186, %v5514
        %v5531 = vpack.c.b16 %v5188, %v5515
        %v5532 = vpack.c.b16 %v5190, %v5516
        %v5533 = vpack.c.b16 %v5192, %v5517
        %v5534 = vpack.c.b16 %v5194, %v5518
        %v5535 = vpack.c.b16 %v5196, %v5519
        %v5536 = vpack.c.b16 %v5198, %v5520
        %v5537 = vpack.c.b16 %v5200, %v5521
        %v5538 = vpack.c.b16 %v5202, %v5522
        %v5539 = vrot.slane %v5523, 1
        %v5540 = vrot.slane %v5251, 1
        %v5541 = vsel %vm1379, %v5539, %v5540
        %v5542 = vrot.slane %v5524, 1
        %v5543 = vrot.slane %v5252, 1
        %v5544 = vsel %vm1379, %v5542, %v5543
        %v5545 = vrot.slane %v5525, 1
        %v5546 = vrot.slane %v5253, 1
        %v5547 = vsel %vm1379, %v5545, %v5546
        %v5548 = vrot.slane %v5526, 1
        %v5549 = vrot.slane %v5254, 1
        %v5550 = vsel %vm1379, %v5548, %v5549
        %v5551 = vrot.slane %v5527, 1
        %v5552 = vrot.slane %v5255, 1
        %v5553 = vsel %vm1379, %v5551, %v5552
        %v5554 = vrot.slane %v5528, 1
        %v5555 = vrot.slane %v5256, 1
        %v5556 = vsel %vm1379, %v5554, %v5555
        %v5557 = vrot.slane %v5529, 1
        %v5558 = vrot.slane %v5257, 1
        %v5559 = vsel %vm1379, %v5557, %v5558
        %v5560 = vrot.slane %v5530, 1
        %v5561 = vrot.slane %v5258, 1
        %v5562 = vsel %vm1379, %v5560, %v5561
        %v5563 = vrot.slane %v5531, 1
        %v5564 = vrot.slane %v5259, 1
        %v5565 = vsel %vm1379, %v5563, %v5564
        %v5566 = vrot.slane %v5532, 1
        %v5567 = vrot.slane %v5260, 1
        %v5568 = vsel %vm1379, %v5566, %v5567
        %v5569 = vrot.slane %v5533, 1
        %v5570 = vrot.slane %v5261, 1
        %v5571 = vsel %vm1379, %v5569, %v5570
        %v5572 = vrot.slane %v5534, 1
        %v5573 = vrot.slane %v5262, 1
        %v5574 = vsel %vm1379, %v5572, %v5573
        %v5575 = vrot.slane %v5535, 1
        %v5576 = vrot.slane %v5263, 1
        %v5577 = vsel %vm1379, %v5575, %v5576
        %v5578 = vrot.slane %v5536, 1
        %v5579 = vrot.slane %v5264, 1
        %v5580 = vsel %vm1379, %v5578, %v5579
        %v5581 = vrot.slane %v5537, 1
        %v5582 = vrot.slane %v5265, 1
        %v5583 = vsel %vm1379, %v5581, %v5582
        %v5584 = vrot.slane %v5538, 1
        %v5585 = vrot.slane %v5266, 1
        %v5586 = vsel %vm1379, %v5584, %v5585
        %v5588 = vsel %vm1428, %v5203, %v5460
        %v5591 = vsel %vm1428, %v5204, %v5462
        %v5594 = vsel %vm1428, %v5205, %v5464
        %v5597 = vsel %vm1428, %v5206, %v5466
        %v5600 = vsel %vm1428, %v5207, %v5468
        %v5603 = vsel %vm1428, %v5208, %v5470
        %v5606 = vsel %vm1428, %v5209, %v5472
        %v5609 = vsel %vm1428, %v5210, %v5474
        %v5612 = vsel %vm1428, %v5211, %v5476
        %v5615 = vsel %vm1428, %v5212, %v5478
        %v5618 = vsel %vm1428, %v5213, %v5480
        %v5621 = vsel %vm1428, %v5214, %v5482
        %v5624 = vsel %vm1428, %v5215, %v5484
        %v5627 = vsel %vm1428, %v5216, %v5486
        %v5630 = vsel %vm1428, %v5217, %v5488
        %v5633 = vsel %vm1428, %v5218, %v5490
        %s5635 = scalar_lea.vmem %s3, 96
        %v5636 = vld [vmem:[%s5635] sm:$0xf]
        %v5637 = vld [vmem:[%s5635 + $0x4] sm:$0xf]
        %v5638 = vld [vmem:[%s5635 + $0x8] sm:$0xf]
        %v5639 = vld [vmem:[%s5635 + $0xc] sm:$0xf]
        %v5640 = vld [vmem:[%s5635 + $0x10] sm:$0xf]
        %v5641 = vld [vmem:[%s5635 + $0x14] sm:$0xf]
        %v5642 = vld [vmem:[%s5635 + $0x18] sm:$0xf]
        %v5643 = vld [vmem:[%s5635 + $0x1c] sm:$0xf]
        %v5644 = vld [vmem:[%s5635 + $0x20] sm:$0xf]
        %v5645 = vld [vmem:[%s5635 + $0x24] sm:$0xf]
        %v5646 = vld [vmem:[%s5635 + $0x28] sm:$0xf]
        %v5647 = vld [vmem:[%s5635 + $0x2c] sm:$0xf]
        %v5648 = vld [vmem:[%s5635 + $0x30] sm:$0xf]
        %v5649 = vld [vmem:[%s5635 + $0x34] sm:$0xf]
        %v5650 = vld [vmem:[%s5635 + $0x38] sm:$0xf]
        %v5651 = vld [vmem:[%s5635 + $0x3c] sm:$0xf]
        %v5652 = vld [vmem:[%s5635 + $0x40] sm:$0xf]
        %v5653 = vld [vmem:[%s5635 + $0x44] sm:$0xf]
        %v5654 = vld [vmem:[%s5635 + $0x48] sm:$0xf]
        %v5655 = vld [vmem:[%s5635 + $0x4c] sm:$0xf]
        %v5656 = vld [vmem:[%s5635 + $0x50] sm:$0xf]
        %v5657 = vld [vmem:[%s5635 + $0x54] sm:$0xf]
        %v5658 = vld [vmem:[%s5635 + $0x58] sm:$0xf]
        %v5659 = vld [vmem:[%s5635 + $0x5c] sm:$0xf]
        %v5684 = vunpack.c.l.b16 %v5636
        %v5685 = vunpack.c.l.b16 %v5637
        %v5686 = vunpack.c.l.b16 %v5638
        %v5687 = vunpack.c.l.b16 %v5639
        %v5688 = vunpack.c.l.b16 %v5640
        %v5689 = vunpack.c.l.b16 %v5641
        %v5690 = vunpack.c.l.b16 %v5642
        %v5691 = vunpack.c.l.b16 %v5643
        %v5692 = vunpack.c.l.b16 %v5644
        %v5693 = vunpack.c.l.b16 %v5645
        %v5694 = vunpack.c.l.b16 %v5646
        %v5695 = vunpack.c.l.b16 %v5647
        %v5696 = vunpack.c.l.b16 %v5648
        %v5697 = vunpack.c.l.b16 %v5649
        %v5698 = vunpack.c.l.b16 %v5650
        %v5699 = vunpack.c.l.b16 %v5651
        %v5700 = vunpack.c.l.b16 %v5652
        %v5701 = vunpack.c.l.b16 %v5653
        %v5702 = vunpack.c.l.b16 %v5654
        %v5703 = vunpack.c.l.b16 %v5655
        %v5704 = vunpack.c.l.b16 %v5656
        %v5705 = vunpack.c.l.b16 %v5657
        %v5706 = vunpack.c.l.b16 %v5658
        %v5707 = vunpack.c.l.b16 %v5659
        %v5708 = vpack.c.b16 %v5685, %v5684
        %v5709 = vpack.c.b16 %v5687, %v5686
        %v5710 = vpack.c.b16 %v5689, %v5688
        %v5711 = vpack.c.b16 %v5691, %v5690
        %v5712 = vpack.c.b16 %v5693, %v5692
        %v5713 = vpack.c.b16 %v5695, %v5694
        %v5714 = vpack.c.b16 %v5697, %v5696
        %v5715 = vpack.c.b16 %v5699, %v5698
        %v5716 = vpack.c.b16 %v5701, %v5700
        %v5717 = vpack.c.b16 %v5703, %v5702
        %v5718 = vpack.c.b16 %v5705, %v5704
        %v5719 = vpack.c.b16 %v5707, %v5706
        %v5733 = vsel %vm1428, %v5541, 0
        %v5736 = vsel %vm1428, %v5544, 0
        %v5739 = vsel %vm1428, %v5547, 0
        %v5742 = vsel %vm1428, %v5550, 0
        %v5745 = vsel %vm1428, %v5553, 0
        %v5748 = vsel %vm1428, %v5556, 0
        %v5751 = vsel %vm1428, %v5559, 0
        %v5754 = vsel %vm1428, %v5562, 0
        %v5757 = vsel %vm1428, %v5565, 0
        %v5760 = vsel %vm1428, %v5568, 0
        %v5763 = vsel %vm1428, %v5571, 0
        %v5766 = vsel %vm1428, %v5574, 0
        %v5769 = vsel %vm1428, %v5577, 0
        %v5772 = vsel %vm1428, %v5580, 0
        %v5775 = vsel %vm1428, %v5583, 0
        %v5778 = vsel %vm1428, %v5586, 0
        %5780 = vmatprep.subr.bf16.mxu0 0
        %5781 = vmatpush1.bf16.msra.mxu0 %v5715
        %5782 = vmatprep.subr.bf16.mxu0 0
        %5783 = vmatpush1.bf16.msra.mxu0 %v5714
        %5784 = vmatprep.subr.bf16.mxu0 0
        %5785 = vmatpush1.bf16.msra.mxu0 %v5713
        %5786 = vmatprep.subr.bf16.mxu0 0
        %5787 = vmatpush1.bf16.msra.mxu0 %v5712
        %5788 = vmatprep.subr.bf16.mxu0 0
        %5789 = vmatpush1.bf16.msra.mxu0 %v5711
        %5790 = vmatprep.subr.bf16.mxu0 0
        %5791 = vmatpush1.bf16.msra.mxu0 %v5710
        %5792 = vmatprep.subr.bf16.mxu0 0
        %5793 = vmatpush1.bf16.msra.mxu0 %v5709
        %5794 = vmatprep.subr.bf16.mxu0 0
        %5795 = vmatpush1.bf16.msra.mxu0 %v5708
        %5796 = vmatprep.subr.bf16.mxu0 0
        %5797 = vmatpush2.bf16.msra.mxu0 0
        %5798 = vmatprep.subr.bf16.mxu0 0
        %5799 = vmatpush2.bf16.msra.mxu0 0
        %5800 = vmatprep.subr.bf16.mxu0 0
        %5801 = vmatpush2.bf16.msra.mxu0 0
        %5802 = vmatprep.subr.bf16.mxu0 0
        %5803 = vmatpush2.bf16.msra.mxu0 0
        %5804 = vmatprep.subr.bf16.mxu0 0
        %5805 = vmatpush2.bf16.msra.mxu0 %v5719
        %5806 = vmatprep.subr.bf16.mxu0 0
        %5807 = vmatpush2.bf16.msra.mxu0 %v5718
        %5808 = vmatprep.subr.bf16.mxu0 0
        %5809 = vmatpush2.bf16.msra.mxu0 %v5717
        %5810 = vmatprep.subr.bf16.mxu0 0
        %5811 = vmatpush2.bf16.msra.mxu0 %v5716
        %5812 = vmatprep.mubr.bf16.mxu0 %v5733
        %5813 = vmatmul.mubr.bf16.gmra.mxu0 %v5588
        %v5814 = vpop.f32.mrf.mxu0
        %v5815 = vadd.f32 0.0, %v5814
        %v5816 = vpop.f32.mrf.mxu0
        %v5817 = vpop.f32.mrf.mxu0
        %v5818 = vadd.f32 0.0, %v5817
        %v5819 = vpop.f32.mrf.mxu0
        %5820 = vmatprep.mubr.bf16.mxu0 %v5736
        %5821 = vmatmul.mubr.bf16.gmra.mxu0 %v5591
        %v5822 = vpop.f32.mrf.mxu0
        %v5823 = vadd.f32 0.0, %v5822
        %v5824 = vpop.f32.mrf.mxu0
        %v5825 = vpop.f32.mrf.mxu0
        %v5826 = vadd.f32 0.0, %v5825
        %v5827 = vpop.f32.mrf.mxu0
        %5828 = vmatprep.mubr.bf16.mxu0 %v5739
        %5829 = vmatmul.mubr.bf16.gmra.mxu0 %v5594
        %v5830 = vpop.f32.mrf.mxu0
        %v5831 = vadd.f32 0.0, %v5830
        %v5832 = vpop.f32.mrf.mxu0
        %v5833 = vpop.f32.mrf.mxu0
        %v5834 = vadd.f32 0.0, %v5833
        %v5835 = vpop.f32.mrf.mxu0
        %5836 = vmatprep.mubr.bf16.mxu0 %v5742
        %5837 = vmatmul.mubr.bf16.gmra.mxu0 %v5597
        %v5838 = vpop.f32.mrf.mxu0
        %v5839 = vadd.f32 0.0, %v5838
        %v5840 = vpop.f32.mrf.mxu0
        %v5841 = vpop.f32.mrf.mxu0
        %v5842 = vadd.f32 0.0, %v5841
        %v5843 = vpop.f32.mrf.mxu0
        %5844 = vmatprep.mubr.bf16.mxu0 %v5745
        %5845 = vmatmul.mubr.bf16.gmra.mxu0 %v5600
        %v5846 = vpop.f32.mrf.mxu0
        %v5847 = vadd.f32 0.0, %v5846
        %v5848 = vpop.f32.mrf.mxu0
        %v5849 = vpop.f32.mrf.mxu0
        %v5850 = vadd.f32 0.0, %v5849
        %v5851 = vpop.f32.mrf.mxu0
        %5852 = vmatprep.mubr.bf16.mxu0 %v5748
        %5853 = vmatmul.mubr.bf16.gmra.mxu0 %v5603
        %v5854 = vpop.f32.mrf.mxu0
        %v5855 = vadd.f32 0.0, %v5854
        %v5856 = vpop.f32.mrf.mxu0
        %v5857 = vpop.f32.mrf.mxu0
        %v5858 = vadd.f32 0.0, %v5857
        %v5859 = vpop.f32.mrf.mxu0
        %5860 = vmatprep.mubr.bf16.mxu0 %v5751
        %5861 = vmatmul.mubr.bf16.gmra.mxu0 %v5606
        %v5862 = vpop.f32.mrf.mxu0
        %v5863 = vadd.f32 0.0, %v5862
        %v5864 = vpop.f32.mrf.mxu0
        %v5865 = vpop.f32.mrf.mxu0
        %v5866 = vadd.f32 0.0, %v5865
        %v5867 = vpop.f32.mrf.mxu0
        %5868 = vmatprep.mubr.bf16.mxu0 %v5754
        %5869 = vmatmul.mubr.bf16.gmra.mxu0 %v5609
        %v5870 = vpop.f32.mrf.mxu0
        %v5871 = vadd.f32 0.0, %v5870
        %v5872 = vpop.f32.mrf.mxu0
        %v5873 = vpop.f32.mrf.mxu0
        %v5874 = vadd.f32 0.0, %v5873
        %v5875 = vpop.f32.mrf.mxu0
        %5876 = vmatprep.mubr.bf16.mxu0 %v5757
        %5877 = vmatmul.mubr.bf16.gmra.mxu0 %v5612
        %v5878 = vpop.f32.mrf.mxu0
        %v5879 = vadd.f32 0.0, %v5878
        %v5880 = vpop.f32.mrf.mxu0
        %v5881 = vpop.f32.mrf.mxu0
        %v5882 = vadd.f32 0.0, %v5881
        %v5883 = vpop.f32.mrf.mxu0
        %5884 = vmatprep.mubr.bf16.mxu0 %v5760
        %5885 = vmatmul.mubr.bf16.gmra.mxu0 %v5615
        %v5886 = vpop.f32.mrf.mxu0
        %v5887 = vadd.f32 0.0, %v5886
        %v5888 = vpop.f32.mrf.mxu0
        %v5889 = vpop.f32.mrf.mxu0
        %v5890 = vadd.f32 0.0, %v5889
        %v5891 = vpop.f32.mrf.mxu0
        %5892 = vmatprep.mubr.bf16.mxu0 %v5763
        %5893 = vmatmul.mubr.bf16.gmra.mxu0 %v5618
        %v5894 = vpop.f32.mrf.mxu0
        %v5895 = vadd.f32 0.0, %v5894
        %v5896 = vpop.f32.mrf.mxu0
        %v5897 = vpop.f32.mrf.mxu0
        %v5898 = vadd.f32 0.0, %v5897
        %v5899 = vpop.f32.mrf.mxu0
        %5900 = vmatprep.mubr.bf16.mxu0 %v5766
        %5901 = vmatmul.mubr.bf16.gmra.mxu0 %v5621
        %v5902 = vpop.f32.mrf.mxu0
        %v5903 = vadd.f32 0.0, %v5902
        %v5904 = vpop.f32.mrf.mxu0
        %v5905 = vpop.f32.mrf.mxu0
        %v5906 = vadd.f32 0.0, %v5905
        %v5907 = vpop.f32.mrf.mxu0
        %5908 = vmatprep.mubr.bf16.mxu0 %v5769
        %5909 = vmatmul.mubr.bf16.gmra.mxu0 %v5624
        %v5910 = vpop.f32.mrf.mxu0
        %v5911 = vadd.f32 0.0, %v5910
        %v5912 = vpop.f32.mrf.mxu0
        %v5913 = vpop.f32.mrf.mxu0
        %v5914 = vadd.f32 0.0, %v5913
        %v5915 = vpop.f32.mrf.mxu0
        %5916 = vmatprep.mubr.bf16.mxu0 %v5772
        %5917 = vmatmul.mubr.bf16.gmra.mxu0 %v5627
        %v5918 = vpop.f32.mrf.mxu0
        %v5919 = vadd.f32 0.0, %v5918
        %v5920 = vpop.f32.mrf.mxu0
        %v5921 = vpop.f32.mrf.mxu0
        %v5922 = vadd.f32 0.0, %v5921
        %v5923 = vpop.f32.mrf.mxu0
        %5924 = vmatprep.mubr.bf16.mxu0 %v5775
        %5925 = vmatmul.mubr.bf16.gmra.mxu0 %v5630
        %v5926 = vpop.f32.mrf.mxu0
        %v5927 = vadd.f32 0.0, %v5926
        %v5928 = vpop.f32.mrf.mxu0
        %v5929 = vpop.f32.mrf.mxu0
        %v5930 = vadd.f32 0.0, %v5929
        %v5931 = vpop.f32.mrf.mxu0
        %5932 = vmatprep.mubr.bf16.mxu0 %v5778
        %5933 = vmatmul.mubr.bf16.gmra.mxu0 %v5633
        %v5934 = vpop.f32.mrf.mxu0
        %v5935 = vadd.f32 0.0, %v5934
        %v5936 = vpop.f32.mrf.mxu0
        %v5937 = vpop.f32.mrf.mxu0
        %v5938 = vadd.f32 0.0, %v5937
        %v5939 = vpop.f32.mrf.mxu0
        %5940 = vdwg.mxu0
        %v5941 = vadd.f32 %v5043, %v5815
        %v5942 = vadd.f32 %v5044, %v5818
        %v5943 = vadd.f32 %v5045, %v5823
        %v5944 = vadd.f32 %v5046, %v5826
        %v5945 = vadd.f32 %v5047, %v5831
        %v5946 = vadd.f32 %v5048, %v5834
        %v5947 = vadd.f32 %v5049, %v5839
        %v5948 = vadd.f32 %v5050, %v5842
        %v5949 = vadd.f32 %v5051, %v5847
        %v5950 = vadd.f32 %v5052, %v5850
        %v5951 = vadd.f32 %v5053, %v5855
        %v5952 = vadd.f32 %v5054, %v5858
        %v5953 = vadd.f32 %v5055, %v5863
        %v5954 = vadd.f32 %v5056, %v5866
        %v5955 = vadd.f32 %v5057, %v5871
        %v5956 = vadd.f32 %v5058, %v5874
        %v5957 = vadd.f32 %v5059, %v5879
        %v5958 = vadd.f32 %v5060, %v5882
        %v5959 = vadd.f32 %v5061, %v5887
        %v5960 = vadd.f32 %v5062, %v5890
        %v5961 = vadd.f32 %v5063, %v5895
        %v5962 = vadd.f32 %v5064, %v5898
        %v5963 = vadd.f32 %v5065, %v5903
        %v5964 = vadd.f32 %v5066, %v5906
        %v5965 = vadd.f32 %v5067, %v5911
        %v5966 = vadd.f32 %v5068, %v5914
        %v5967 = vadd.f32 %v5069, %v5919
        %v5968 = vadd.f32 %v5070, %v5922
        %v5969 = vadd.f32 %v5071, %v5927
        %v5970 = vadd.f32 %v5072, %v5930
        %v5971 = vadd.f32 %v5073, %v5935
        %v5972 = vadd.f32 %v5074, %v5938
        %s5973 = scalar_lea.vmem [#allocation3], 24
        %v5974 = vld [vmem:[%s5973] sm:$0xf]
        %v5975 = vld [vmem:[%s5973 + $0x4] sm:$0xf]
        %v5976 = vld [vmem:[%s5973 + $0xc] sm:$0xf]
        %v5977 = vld [vmem:[%s5973 + $0x10] sm:$0xf]
        %v5978 = vld [vmem:[%s5973 + $0x18] sm:$0xf]
        %v5979 = vld [vmem:[%s5973 + $0x1c] sm:$0xf]
        %v5980 = vld [vmem:[%s5973 + $0x24] sm:$0xf]
        %v5981 = vld [vmem:[%s5973 + $0x28] sm:$0xf]
        %v5982 = vld [vmem:[%s5973 + $0x30] sm:$0xf]
        %v5983 = vld [vmem:[%s5973 + $0x34] sm:$0xf]
        %v5984 = vld [vmem:[%s5973 + $0x3c] sm:$0xf]
        %v5985 = vld [vmem:[%s5973 + $0x40] sm:$0xf]
        %v5986 = vld [vmem:[%s5973 + $0x48] sm:$0xf]
        %v5987 = vld [vmem:[%s5973 + $0x4c] sm:$0xf]
        %v5988 = vld [vmem:[%s5973 + $0x54] sm:$0xf]
        %v5989 = vld [vmem:[%s5973 + $0x58] sm:$0xf]
        %v5990 = vld [vmem:[%s5973 + $0x60] sm:$0xf]
        %v5991 = vld [vmem:[%s5973 + $0x64] sm:$0xf]
        %v5992 = vld [vmem:[%s5973 + $0x6c] sm:$0xf]
        %v5993 = vld [vmem:[%s5973 + $0x70] sm:$0xf]
        %v5994 = vld [vmem:[%s5973 + $0x78] sm:$0xf]
        %v5995 = vld [vmem:[%s5973 + $0x7c] sm:$0xf]
        %v5996 = vld [vmem:[%s5973 + $0x84] sm:$0xf]
        %v5997 = vld [vmem:[%s5973 + $0x88] sm:$0xf]
        %v5998 = vld [vmem:[%s5973 + $0x90] sm:$0xf]
        %v5999 = vld [vmem:[%s5973 + $0x94] sm:$0xf]
        %v6000 = vld [vmem:[%s5973 + $0x9c] sm:$0xf]
        %v6001 = vld [vmem:[%s5973 + $0xa0] sm:$0xf]
        %v6002 = vld [vmem:[%s5973 + $0xa8] sm:$0xf]
        %v6003 = vld [vmem:[%s5973 + $0xac] sm:$0xf]
        %v6004 = vld [vmem:[%s5973 + $0xb4] sm:$0xf]
        %v6005 = vld [vmem:[%s5973 + $0xb8] sm:$0xf]
        %v6006 = vld [vmem:[%s5973 + $0x8] sm:$0x1]
        %v6007 = vld [vmem:[%s5973 + $0x14] sm:$0x1]
        %v6008 = vld [vmem:[%s5973 + $0x20] sm:$0x1]
        %v6009 = vld [vmem:[%s5973 + $0x2c] sm:$0x1]
        %v6010 = vld [vmem:[%s5973 + $0x38] sm:$0x1]
        %v6011 = vld [vmem:[%s5973 + $0x44] sm:$0x1]
        %v6012 = vld [vmem:[%s5973 + $0x50] sm:$0x1]
        %v6013 = vld [vmem:[%s5973 + $0x5c] sm:$0x1]
        %v6014 = vld [vmem:[%s5973 + $0x68] sm:$0x1]
        %v6015 = vld [vmem:[%s5973 + $0x74] sm:$0x1]
        %v6016 = vld [vmem:[%s5973 + $0x80] sm:$0x1]
        %v6017 = vld [vmem:[%s5973 + $0x8c] sm:$0x1]
        %v6018 = vld [vmem:[%s5973 + $0x98] sm:$0x1]
        %v6019 = vld [vmem:[%s5973 + $0xa4] sm:$0x1]
        %v6020 = vld [vmem:[%s5973 + $0xb0] sm:$0x1]
        %v6021 = vld [vmem:[%s5973 + $0xbc] sm:$0x1]
        %v6022 = vld [vmem:[%s5973] sm:$0xe]
        %v6023 = vld [vmem:[%s5973 + $0xc] sm:$0xe]
        %v6024 = vld [vmem:[%s5973 + $0x18] sm:$0xe]
        %v6025 = vld [vmem:[%s5973 + $0x24] sm:$0xe]
        %v6026 = vld [vmem:[%s5973 + $0x30] sm:$0xe]
        %v6027 = vld [vmem:[%s5973 + $0x3c] sm:$0xe]
        %v6028 = vld [vmem:[%s5973 + $0x48] sm:$0xe]
        %v6029 = vld [vmem:[%s5973 + $0x54] sm:$0xe]
        %v6030 = vld [vmem:[%s5973 + $0x60] sm:$0xe]
        %v6031 = vld [vmem:[%s5973 + $0x6c] sm:$0xe]
        %v6032 = vld [vmem:[%s5973 + $0x78] sm:$0xe]
        %v6033 = vld [vmem:[%s5973 + $0x84] sm:$0xe]
        %v6034 = vld [vmem:[%s5973 + $0x90] sm:$0xe]
        %v6035 = vld [vmem:[%s5973 + $0x9c] sm:$0xe]
        %v6036 = vld [vmem:[%s5973 + $0xa8] sm:$0xe]
        %v6037 = vld [vmem:[%s5973 + $0xb4] sm:$0xe]
        %v6070 = vunpack.c.l.b16 %v5974
        %v6071 = vunpack.c.l.b16 %v5975
        %v6072 = vunpack.c.l.b16 %v5976
        %v6073 = vunpack.c.l.b16 %v5977
        %v6074 = vunpack.c.l.b16 %v5978
        %v6075 = vunpack.c.l.b16 %v5979
        %v6076 = vunpack.c.l.b16 %v5980
        %v6077 = vunpack.c.l.b16 %v5981
        %v6078 = vunpack.c.l.b16 %v5982
        %v6079 = vunpack.c.l.b16 %v5983
        %v6080 = vunpack.c.l.b16 %v5984
        %v6081 = vunpack.c.l.b16 %v5985
        %v6082 = vunpack.c.l.b16 %v5986
        %v6083 = vunpack.c.l.b16 %v5987
        %v6084 = vunpack.c.l.b16 %v5988
        %v6085 = vunpack.c.l.b16 %v5989
        %v6086 = vunpack.c.l.b16 %v5990
        %v6087 = vunpack.c.l.b16 %v5991
        %v6088 = vunpack.c.l.b16 %v5992
        %v6089 = vunpack.c.l.b16 %v5993
        %v6090 = vunpack.c.l.b16 %v5994
        %v6091 = vunpack.c.l.b16 %v5995
        %v6092 = vunpack.c.l.b16 %v5996
        %v6093 = vunpack.c.l.b16 %v5997
        %v6094 = vunpack.c.l.b16 %v5998
        %v6095 = vunpack.c.l.b16 %v5999
        %v6096 = vunpack.c.l.b16 %v6000
        %v6097 = vunpack.c.l.b16 %v6001
        %v6098 = vunpack.c.l.b16 %v6002
        %v6099 = vunpack.c.l.b16 %v6003
        %v6100 = vunpack.c.l.b16 %v6004
        %v6101 = vunpack.c.l.b16 %v6005
        %v6102 = vpack.c.b16 %v6071, %v6070
        %v6103 = vpack.c.b16 %v6073, %v6072
        %v6104 = vpack.c.b16 %v6075, %v6074
        %v6105 = vpack.c.b16 %v6077, %v6076
        %v6106 = vpack.c.b16 %v6079, %v6078
        %v6107 = vpack.c.b16 %v6081, %v6080
        %v6108 = vpack.c.b16 %v6083, %v6082
        %v6109 = vpack.c.b16 %v6085, %v6084
        %v6110 = vpack.c.b16 %v6087, %v6086
        %v6111 = vpack.c.b16 %v6089, %v6088
        %v6112 = vpack.c.b16 %v6091, %v6090
        %v6113 = vpack.c.b16 %v6093, %v6092
        %v6114 = vpack.c.b16 %v6095, %v6094
        %v6115 = vpack.c.b16 %v6097, %v6096
        %v6116 = vpack.c.b16 %v6099, %v6098
        %v6117 = vpack.c.b16 %v6101, %v6100
        %v6134 = vunpack.c.l.b16 %v6006
        %v6135 = vunpack.c.l.b16 %v6007
        %v6136 = vunpack.c.l.b16 %v6008
        %v6137 = vunpack.c.l.b16 %v6009
        %v6138 = vunpack.c.l.b16 %v6010
        %v6139 = vunpack.c.l.b16 %v6011
        %v6140 = vunpack.c.l.b16 %v6012
        %v6141 = vunpack.c.l.b16 %v6013
        %v6142 = vunpack.c.l.b16 %v6014
        %v6143 = vunpack.c.l.b16 %v6015
        %v6144 = vunpack.c.l.b16 %v6016
        %v6145 = vunpack.c.l.b16 %v6017
        %v6146 = vunpack.c.l.b16 %v6018
        %v6147 = vunpack.c.l.b16 %v6019
        %v6148 = vunpack.c.l.b16 %v6020
        %v6149 = vunpack.c.l.b16 %v6021
        %v6150 = vpack.c.b16 %v6134, %v6134
        %v6151 = vpack.c.b16 %v6135, %v6135
        %v6152 = vpack.c.b16 %v6136, %v6136
        %v6153 = vpack.c.b16 %v6137, %v6137
        %v6154 = vpack.c.b16 %v6138, %v6138
        %v6155 = vpack.c.b16 %v6139, %v6139
        %v6156 = vpack.c.b16 %v6140, %v6140
        %v6157 = vpack.c.b16 %v6141, %v6141
        %v6158 = vpack.c.b16 %v6142, %v6142
        %v6159 = vpack.c.b16 %v6143, %v6143
        %v6160 = vpack.c.b16 %v6144, %v6144
        %v6161 = vpack.c.b16 %v6145, %v6145
        %v6162 = vpack.c.b16 %v6146, %v6146
        %v6163 = vpack.c.b16 %v6147, %v6147
        %v6164 = vpack.c.b16 %v6148, %v6148
        %v6165 = vpack.c.b16 %v6149, %v6149
        %v6167 = vshrl.u32 %v6102, 16
        %v6169 = vshll.u32 %v6102, 16
        %v6171 = vrot.slane %v6169, 1
        %v6172 = vor.u32 %v6167, %v6171
        %v6174 = vshll.u32 %v6150, 16
        %v6176 = vrot.slane %v6174, 1
        %v6177 = vsel %vm1106, %v6172, %v6176
        %v6179 = vshrl.u32 %v6103, 16
        %v6181 = vshll.u32 %v6103, 16
        %v6183 = vrot.slane %v6181, 1
        %v6184 = vor.u32 %v6179, %v6183
        %v6186 = vshll.u32 %v6151, 16
        %v6188 = vrot.slane %v6186, 1
        %v6189 = vsel %vm1106, %v6184, %v6188
        %v6191 = vshrl.u32 %v6104, 16
        %v6193 = vshll.u32 %v6104, 16
        %v6195 = vrot.slane %v6193, 1
        %v6196 = vor.u32 %v6191, %v6195
        %v6198 = vshll.u32 %v6152, 16
        %v6200 = vrot.slane %v6198, 1
        %v6201 = vsel %vm1106, %v6196, %v6200
        %v6203 = vshrl.u32 %v6105, 16
        %v6205 = vshll.u32 %v6105, 16
        %v6207 = vrot.slane %v6205, 1
        %v6208 = vor.u32 %v6203, %v6207
        %v6210 = vshll.u32 %v6153, 16
        %v6212 = vrot.slane %v6210, 1
        %v6213 = vsel %vm1106, %v6208, %v6212
        %v6215 = vshrl.u32 %v6106, 16
        %v6217 = vshll.u32 %v6106, 16
        %v6219 = vrot.slane %v6217, 1
        %v6220 = vor.u32 %v6215, %v6219
        %v6222 = vshll.u32 %v6154, 16
        %v6224 = vrot.slane %v6222, 1
        %v6225 = vsel %vm1106, %v6220, %v6224
        %v6227 = vshrl.u32 %v6107, 16
        %v6229 = vshll.u32 %v6107, 16
        %v6231 = vrot.slane %v6229, 1
        %v6232 = vor.u32 %v6227, %v6231
        %v6234 = vshll.u32 %v6155, 16
        %v6236 = vrot.slane %v6234, 1
        %v6237 = vsel %vm1106, %v6232, %v6236
        %v6239 = vshrl.u32 %v6108, 16
        %v6241 = vshll.u32 %v6108, 16
        %v6243 = vrot.slane %v6241, 1
        %v6244 = vor.u32 %v6239, %v6243
        %v6246 = vshll.u32 %v6156, 16
        %v6248 = vrot.slane %v6246, 1
        %v6249 = vsel %vm1106, %v6244, %v6248
        %v6251 = vshrl.u32 %v6109, 16
        %v6253 = vshll.u32 %v6109, 16
        %v6255 = vrot.slane %v6253, 1
        %v6256 = vor.u32 %v6251, %v6255
        %v6258 = vshll.u32 %v6157, 16
        %v6260 = vrot.slane %v6258, 1
        %v6261 = vsel %vm1106, %v6256, %v6260
        %v6263 = vshrl.u32 %v6110, 16
        %v6265 = vshll.u32 %v6110, 16
        %v6267 = vrot.slane %v6265, 1
        %v6268 = vor.u32 %v6263, %v6267
        %v6270 = vshll.u32 %v6158, 16
        %v6272 = vrot.slane %v6270, 1
        %v6273 = vsel %vm1106, %v6268, %v6272
        %v6275 = vshrl.u32 %v6111, 16
        %v6277 = vshll.u32 %v6111, 16
        %v6279 = vrot.slane %v6277, 1
        %v6280 = vor.u32 %v6275, %v6279
        %v6282 = vshll.u32 %v6159, 16
        %v6284 = vrot.slane %v6282, 1
        %v6285 = vsel %vm1106, %v6280, %v6284
        %v6287 = vshrl.u32 %v6112, 16
        %v6289 = vshll.u32 %v6112, 16
        %v6291 = vrot.slane %v6289, 1
        %v6292 = vor.u32 %v6287, %v6291
        %v6294 = vshll.u32 %v6160, 16
        %v6296 = vrot.slane %v6294, 1
        %v6297 = vsel %vm1106, %v6292, %v6296
        %v6299 = vshrl.u32 %v6113, 16
        %v6301 = vshll.u32 %v6113, 16
        %v6303 = vrot.slane %v6301, 1
        %v6304 = vor.u32 %v6299, %v6303
        %v6306 = vshll.u32 %v6161, 16
        %v6308 = vrot.slane %v6306, 1
        %v6309 = vsel %vm1106, %v6304, %v6308
        %v6311 = vshrl.u32 %v6114, 16
        %v6313 = vshll.u32 %v6114, 16
        %v6315 = vrot.slane %v6313, 1
        %v6316 = vor.u32 %v6311, %v6315
        %v6318 = vshll.u32 %v6162, 16
        %v6320 = vrot.slane %v6318, 1
        %v6321 = vsel %vm1106, %v6316, %v6320
        %v6323 = vshrl.u32 %v6115, 16
        %v6325 = vshll.u32 %v6115, 16
        %v6327 = vrot.slane %v6325, 1
        %v6328 = vor.u32 %v6323, %v6327
        %v6330 = vshll.u32 %v6163, 16
        %v6332 = vrot.slane %v6330, 1
        %v6333 = vsel %vm1106, %v6328, %v6332
        %v6335 = vshrl.u32 %v6116, 16
        %v6337 = vshll.u32 %v6116, 16
        %v6339 = vrot.slane %v6337, 1
        %v6340 = vor.u32 %v6335, %v6339
        %v6342 = vshll.u32 %v6164, 16
        %v6344 = vrot.slane %v6342, 1
        %v6345 = vsel %vm1106, %v6340, %v6344
        %v6347 = vshrl.u32 %v6117, 16
        %v6349 = vshll.u32 %v6117, 16
        %v6351 = vrot.slane %v6349, 1
        %v6352 = vor.u32 %v6347, %v6351
        %v6354 = vshll.u32 %v6165, 16
        %v6356 = vrot.slane %v6354, 1
        %v6357 = vsel %vm1106, %v6352, %v6356
        %6358 = vrot.lane.b32.xlu0 %v6177, 64
        %v6359 = vpop.permute.xlu0 %6358
        %6360 = vrot.lane.b32.xlu0 %v6189, 64
        %v6361 = vpop.permute.xlu0 %6360
        %6362 = vrot.lane.b32.xlu0 %v6201, 64
        %v6363 = vpop.permute.xlu0 %6362
        %6364 = vrot.lane.b32.xlu0 %v6213, 64
        %v6365 = vpop.permute.xlu0 %6364
        %6366 = vrot.lane.b32.xlu0 %v6225, 64
        %v6367 = vpop.permute.xlu0 %6366
        %6368 = vrot.lane.b32.xlu0 %v6237, 64
        %v6369 = vpop.permute.xlu0 %6368
        %6370 = vrot.lane.b32.xlu0 %v6249, 64
        %v6371 = vpop.permute.xlu0 %6370
        %6372 = vrot.lane.b32.xlu0 %v6261, 64
        %v6373 = vpop.permute.xlu0 %6372
        %6374 = vrot.lane.b32.xlu0 %v6273, 64
        %v6375 = vpop.permute.xlu0 %6374
        %6376 = vrot.lane.b32.xlu0 %v6285, 64
        %v6377 = vpop.permute.xlu0 %6376
        %6378 = vrot.lane.b32.xlu0 %v6297, 64
        %v6379 = vpop.permute.xlu0 %6378
        %6380 = vrot.lane.b32.xlu0 %v6309, 64
        %v6381 = vpop.permute.xlu0 %6380
        %6382 = vrot.lane.b32.xlu0 %v6321, 64
        %v6383 = vpop.permute.xlu0 %6382
        %6384 = vrot.lane.b32.xlu0 %v6333, 64
        %v6385 = vpop.permute.xlu0 %6384
        %6386 = vrot.lane.b32.xlu0 %v6345, 64
        %v6387 = vpop.permute.xlu0 %6386
        %6388 = vrot.lane.b32.xlu0 %v6357, 64
        %v6389 = vpop.permute.xlu0 %6388
        %v6406 = vunpack.c.l.b16 %v6022
        %v6407 = vunpack.c.l.b16 %v6023
        %v6408 = vunpack.c.l.b16 %v6024
        %v6409 = vunpack.c.l.b16 %v6025
        %v6410 = vunpack.c.l.b16 %v6026
        %v6411 = vunpack.c.l.b16 %v6027
        %v6412 = vunpack.c.l.b16 %v6028
        %v6413 = vunpack.c.l.b16 %v6029
        %v6414 = vunpack.c.l.b16 %v6030
        %v6415 = vunpack.c.l.b16 %v6031
        %v6416 = vunpack.c.l.b16 %v6032
        %v6417 = vunpack.c.l.b16 %v6033
        %v6418 = vunpack.c.l.b16 %v6034
        %v6419 = vunpack.c.l.b16 %v6035
        %v6420 = vunpack.c.l.b16 %v6036
        %v6421 = vunpack.c.l.b16 %v6037
        %v6422 = vpack.c.b16 %v6071, %v6406
        %v6423 = vpack.c.b16 %v6073, %v6407
        %v6424 = vpack.c.b16 %v6075, %v6408
        %v6425 = vpack.c.b16 %v6077, %v6409
        %v6426 = vpack.c.b16 %v6079, %v6410
        %v6427 = vpack.c.b16 %v6081, %v6411
        %v6428 = vpack.c.b16 %v6083, %v6412
        %v6429 = vpack.c.b16 %v6085, %v6413
        %v6430 = vpack.c.b16 %v6087, %v6414
        %v6431 = vpack.c.b16 %v6089, %v6415
        %v6432 = vpack.c.b16 %v6091, %v6416
        %v6433 = vpack.c.b16 %v6093, %v6417
        %v6434 = vpack.c.b16 %v6095, %v6418
        %v6435 = vpack.c.b16 %v6097, %v6419
        %v6436 = vpack.c.b16 %v6099, %v6420
        %v6437 = vpack.c.b16 %v6101, %v6421
        %v6438 = vrot.slane %v6422, 1
        %v6439 = vrot.slane %v6150, 1
        %v6440 = vsel %vm1379, %v6438, %v6439
        %v6441 = vrot.slane %v6423, 1
        %v6442 = vrot.slane %v6151, 1
        %v6443 = vsel %vm1379, %v6441, %v6442
        %v6444 = vrot.slane %v6424, 1
        %v6445 = vrot.slane %v6152, 1
        %v6446 = vsel %vm1379, %v6444, %v6445
        %v6447 = vrot.slane %v6425, 1
        %v6448 = vrot.slane %v6153, 1
        %v6449 = vsel %vm1379, %v6447, %v6448
        %v6450 = vrot.slane %v6426, 1
        %v6451 = vrot.slane %v6154, 1
        %v6452 = vsel %vm1379, %v6450, %v6451
        %v6453 = vrot.slane %v6427, 1
        %v6454 = vrot.slane %v6155, 1
        %v6455 = vsel %vm1379, %v6453, %v6454
        %v6456 = vrot.slane %v6428, 1
        %v6457 = vrot.slane %v6156, 1
        %v6458 = vsel %vm1379, %v6456, %v6457
        %v6459 = vrot.slane %v6429, 1
        %v6460 = vrot.slane %v6157, 1
        %v6461 = vsel %vm1379, %v6459, %v6460
        %v6462 = vrot.slane %v6430, 1
        %v6463 = vrot.slane %v6158, 1
        %v6464 = vsel %vm1379, %v6462, %v6463
        %v6465 = vrot.slane %v6431, 1
        %v6466 = vrot.slane %v6159, 1
        %v6467 = vsel %vm1379, %v6465, %v6466
        %v6468 = vrot.slane %v6432, 1
        %v6469 = vrot.slane %v6160, 1
        %v6470 = vsel %vm1379, %v6468, %v6469
        %v6471 = vrot.slane %v6433, 1
        %v6472 = vrot.slane %v6161, 1
        %v6473 = vsel %vm1379, %v6471, %v6472
        %v6474 = vrot.slane %v6434, 1
        %v6475 = vrot.slane %v6162, 1
        %v6476 = vsel %vm1379, %v6474, %v6475
        %v6477 = vrot.slane %v6435, 1
        %v6478 = vrot.slane %v6163, 1
        %v6479 = vsel %vm1379, %v6477, %v6478
        %v6480 = vrot.slane %v6436, 1
        %v6481 = vrot.slane %v6164, 1
        %v6482 = vsel %vm1379, %v6480, %v6481
        %v6483 = vrot.slane %v6437, 1
        %v6484 = vrot.slane %v6165, 1
        %v6485 = vsel %vm1379, %v6483, %v6484
        %v6487 = vsel %vm1428, %v6102, %v6359
        %v6490 = vsel %vm1428, %v6103, %v6361
        %v6493 = vsel %vm1428, %v6104, %v6363
        %v6496 = vsel %vm1428, %v6105, %v6365
        %v6499 = vsel %vm1428, %v6106, %v6367
        %v6502 = vsel %vm1428, %v6107, %v6369
        %v6505 = vsel %vm1428, %v6108, %v6371
        %v6508 = vsel %vm1428, %v6109, %v6373
        %v6511 = vsel %vm1428, %v6110, %v6375
        %v6514 = vsel %vm1428, %v6111, %v6377
        %v6517 = vsel %vm1428, %v6112, %v6379
        %v6520 = vsel %vm1428, %v6113, %v6381
        %v6523 = vsel %vm1428, %v6114, %v6383
        %v6526 = vsel %vm1428, %v6115, %v6385
        %v6529 = vsel %vm1428, %v6116, %v6387
        %v6532 = vsel %vm1428, %v6117, %v6389
        %s6534 = scalar_lea.vmem %s3, 192
        %v6535 = vld [vmem:[%s6534] sm:$0xf]
        %v6536 = vld [vmem:[%s6534 + $0x4] sm:$0xf]
        %v6537 = vld [vmem:[%s6534 + $0x8] sm:$0xf]
        %v6538 = vld [vmem:[%s6534 + $0xc] sm:$0xf]
        %v6539 = vld [vmem:[%s6534 + $0x10] sm:$0xf]
        %v6540 = vld [vmem:[%s6534 + $0x14] sm:$0xf]
        %v6541 = vld [vmem:[%s6534 + $0x18] sm:$0xf]
        %v6542 = vld [vmem:[%s6534 + $0x1c] sm:$0xf]
        %v6543 = vld [vmem:[%s6534 + $0x20] sm:$0xf]
        %v6544 = vld [vmem:[%s6534 + $0x24] sm:$0xf]
        %v6545 = vld [vmem:[%s6534 + $0x28] sm:$0xf]
        %v6546 = vld [vmem:[%s6534 + $0x2c] sm:$0xf]
        %v6547 = vld [vmem:[%s6534 + $0x30] sm:$0xf]
        %v6548 = vld [vmem:[%s6534 + $0x34] sm:$0xf]
        %v6549 = vld [vmem:[%s6534 + $0x38] sm:$0xf]
        %v6550 = vld [vmem:[%s6534 + $0x3c] sm:$0xf]
        %v6551 = vld [vmem:[%s6534 + $0x40] sm:$0xf]
        %v6552 = vld [vmem:[%s6534 + $0x44] sm:$0xf]
        %v6553 = vld [vmem:[%s6534 + $0x48] sm:$0xf]
        %v6554 = vld [vmem:[%s6534 + $0x4c] sm:$0xf]
        %v6555 = vld [vmem:[%s6534 + $0x50] sm:$0xf]
        %v6556 = vld [vmem:[%s6534 + $0x54] sm:$0xf]
        %v6557 = vld [vmem:[%s6534 + $0x58] sm:$0xf]
        %v6558 = vld [vmem:[%s6534 + $0x5c] sm:$0xf]
        %v6583 = vunpack.c.l.b16 %v6535
        %v6584 = vunpack.c.l.b16 %v6536
        %v6585 = vunpack.c.l.b16 %v6537
        %v6586 = vunpack.c.l.b16 %v6538
        %v6587 = vunpack.c.l.b16 %v6539
        %v6588 = vunpack.c.l.b16 %v6540
        %v6589 = vunpack.c.l.b16 %v6541
        %v6590 = vunpack.c.l.b16 %v6542
        %v6591 = vunpack.c.l.b16 %v6543
        %v6592 = vunpack.c.l.b16 %v6544
        %v6593 = vunpack.c.l.b16 %v6545
        %v6594 = vunpack.c.l.b16 %v6546
        %v6595 = vunpack.c.l.b16 %v6547
        %v6596 = vunpack.c.l.b16 %v6548
        %v6597 = vunpack.c.l.b16 %v6549
        %v6598 = vunpack.c.l.b16 %v6550
        %v6599 = vunpack.c.l.b16 %v6551
        %v6600 = vunpack.c.l.b16 %v6552
        %v6601 = vunpack.c.l.b16 %v6553
        %v6602 = vunpack.c.l.b16 %v6554
        %v6603 = vunpack.c.l.b16 %v6555
        %v6604 = vunpack.c.l.b16 %v6556
        %v6605 = vunpack.c.l.b16 %v6557
        %v6606 = vunpack.c.l.b16 %v6558
        %v6607 = vpack.c.b16 %v6584, %v6583
        %v6608 = vpack.c.b16 %v6586, %v6585
        %v6609 = vpack.c.b16 %v6588, %v6587
        %v6610 = vpack.c.b16 %v6590, %v6589
        %v6611 = vpack.c.b16 %v6592, %v6591
        %v6612 = vpack.c.b16 %v6594, %v6593
        %v6613 = vpack.c.b16 %v6596, %v6595
        %v6614 = vpack.c.b16 %v6598, %v6597
        %v6615 = vpack.c.b16 %v6600, %v6599
        %v6616 = vpack.c.b16 %v6602, %v6601
        %v6617 = vpack.c.b16 %v6604, %v6603
        %v6618 = vpack.c.b16 %v6606, %v6605
        %v6632 = vsel %vm1428, %v6440, 0
        %v6635 = vsel %vm1428, %v6443, 0
        %v6638 = vsel %vm1428, %v6446, 0
        %v6641 = vsel %vm1428, %v6449, 0
        %v6644 = vsel %vm1428, %v6452, 0
        %v6647 = vsel %vm1428, %v6455, 0
        %v6650 = vsel %vm1428, %v6458, 0
        %v6653 = vsel %vm1428, %v6461, 0
        %v6656 = vsel %vm1428, %v6464, 0
        %v6659 = vsel %vm1428, %v6467, 0
        %v6662 = vsel %vm1428, %v6470, 0
        %v6665 = vsel %vm1428, %v6473, 0
        %v6668 = vsel %vm1428, %v6476, 0
        %v6671 = vsel %vm1428, %v6479, 0
        %v6674 = vsel %vm1428, %v6482, 0
        %v6677 = vsel %vm1428, %v6485, 0
        %6679 = vmatprep.subr.bf16.mxu0 0
        %6680 = vmatpush1.bf16.msra.mxu0 %v6614
        %6681 = vmatprep.subr.bf16.mxu0 0
        %6682 = vmatpush1.bf16.msra.mxu0 %v6613
        %6683 = vmatprep.subr.bf16.mxu0 0
        %6684 = vmatpush1.bf16.msra.mxu0 %v6612
        %6685 = vmatprep.subr.bf16.mxu0 0
        %6686 = vmatpush1.bf16.msra.mxu0 %v6611
        %6687 = vmatprep.subr.bf16.mxu0 0
        %6688 = vmatpush1.bf16.msra.mxu0 %v6610
        %6689 = vmatprep.subr.bf16.mxu0 0
        %6690 = vmatpush1.bf16.msra.mxu0 %v6609
        %6691 = vmatprep.subr.bf16.mxu0 0
        %6692 = vmatpush1.bf16.msra.mxu0 %v6608
        %6693 = vmatprep.subr.bf16.mxu0 0
        %6694 = vmatpush1.bf16.msra.mxu0 %v6607
        %6695 = vmatprep.subr.bf16.mxu0 0
        %6696 = vmatpush2.bf16.msra.mxu0 0
        %6697 = vmatprep.subr.bf16.mxu0 0
        %6698 = vmatpush2.bf16.msra.mxu0 0
        %6699 = vmatprep.subr.bf16.mxu0 0
        %6700 = vmatpush2.bf16.msra.mxu0 0
        %6701 = vmatprep.subr.bf16.mxu0 0
        %6702 = vmatpush2.bf16.msra.mxu0 0
        %6703 = vmatprep.subr.bf16.mxu0 0
        %6704 = vmatpush2.bf16.msra.mxu0 %v6618
        %6705 = vmatprep.subr.bf16.mxu0 0
        %6706 = vmatpush2.bf16.msra.mxu0 %v6617
        %6707 = vmatprep.subr.bf16.mxu0 0
        %6708 = vmatpush2.bf16.msra.mxu0 %v6616
        %6709 = vmatprep.subr.bf16.mxu0 0
        %6710 = vmatpush2.bf16.msra.mxu0 %v6615
        %6711 = vmatprep.mubr.bf16.mxu0 %v6632
        %6712 = vmatmul.mubr.bf16.gmra.mxu0 %v6487
        %v6713 = vpop.f32.mrf.mxu0
        %v6714 = vadd.f32 0.0, %v6713
        %v6715 = vpop.f32.mrf.mxu0
        %v6716 = vpop.f32.mrf.mxu0
        %v6717 = vadd.f32 0.0, %v6716
        %v6718 = vpop.f32.mrf.mxu0
        %6719 = vmatprep.mubr.bf16.mxu0 %v6635
        %6720 = vmatmul.mubr.bf16.gmra.mxu0 %v6490
        %v6721 = vpop.f32.mrf.mxu0
        %v6722 = vadd.f32 0.0, %v6721
        %v6723 = vpop.f32.mrf.mxu0
        %v6724 = vpop.f32.mrf.mxu0
        %v6725 = vadd.f32 0.0, %v6724
        %v6726 = vpop.f32.mrf.mxu0
        %6727 = vmatprep.mubr.bf16.mxu0 %v6638
        %6728 = vmatmul.mubr.bf16.gmra.mxu0 %v6493
        %v6729 = vpop.f32.mrf.mxu0
        %v6730 = vadd.f32 0.0, %v6729
        %v6731 = vpop.f32.mrf.mxu0
        %v6732 = vpop.f32.mrf.mxu0
        %v6733 = vadd.f32 0.0, %v6732
        %v6734 = vpop.f32.mrf.mxu0
        %6735 = vmatprep.mubr.bf16.mxu0 %v6641
        %6736 = vmatmul.mubr.bf16.gmra.mxu0 %v6496
        %v6737 = vpop.f32.mrf.mxu0
        %v6738 = vadd.f32 0.0, %v6737
        %v6739 = vpop.f32.mrf.mxu0
        %v6740 = vpop.f32.mrf.mxu0
        %v6741 = vadd.f32 0.0, %v6740
        %v6742 = vpop.f32.mrf.mxu0
        %6743 = vmatprep.mubr.bf16.mxu0 %v6644
        %6744 = vmatmul.mubr.bf16.gmra.mxu0 %v6499
        %v6745 = vpop.f32.mrf.mxu0
        %v6746 = vadd.f32 0.0, %v6745
        %v6747 = vpop.f32.mrf.mxu0
        %v6748 = vpop.f32.mrf.mxu0
        %v6749 = vadd.f32 0.0, %v6748
        %v6750 = vpop.f32.mrf.mxu0
        %6751 = vmatprep.mubr.bf16.mxu0 %v6647
        %6752 = vmatmul.mubr.bf16.gmra.mxu0 %v6502
        %v6753 = vpop.f32.mrf.mxu0
        %v6754 = vadd.f32 0.0, %v6753
        %v6755 = vpop.f32.mrf.mxu0
        %v6756 = vpop.f32.mrf.mxu0
        %v6757 = vadd.f32 0.0, %v6756
        %v6758 = vpop.f32.mrf.mxu0
        %6759 = vmatprep.mubr.bf16.mxu0 %v6650
        %6760 = vmatmul.mubr.bf16.gmra.mxu0 %v6505
        %v6761 = vpop.f32.mrf.mxu0
        %v6762 = vadd.f32 0.0, %v6761
        %v6763 = vpop.f32.mrf.mxu0
        %v6764 = vpop.f32.mrf.mxu0
        %v6765 = vadd.f32 0.0, %v6764
        %v6766 = vpop.f32.mrf.mxu0
        %6767 = vmatprep.mubr.bf16.mxu0 %v6653
        %6768 = vmatmul.mubr.bf16.gmra.mxu0 %v6508
        %v6769 = vpop.f32.mrf.mxu0
        %v6770 = vadd.f32 0.0, %v6769
        %v6771 = vpop.f32.mrf.mxu0
        %v6772 = vpop.f32.mrf.mxu0
        %v6773 = vadd.f32 0.0, %v6772
        %v6774 = vpop.f32.mrf.mxu0
        %6775 = vmatprep.mubr.bf16.mxu0 %v6656
        %6776 = vmatmul.mubr.bf16.gmra.mxu0 %v6511
        %v6777 = vpop.f32.mrf.mxu0
        %v6778 = vadd.f32 0.0, %v6777
        %v6779 = vpop.f32.mrf.mxu0
        %v6780 = vpop.f32.mrf.mxu0
        %v6781 = vadd.f32 0.0, %v6780
        %v6782 = vpop.f32.mrf.mxu0
        %6783 = vmatprep.mubr.bf16.mxu0 %v6659
        %6784 = vmatmul.mubr.bf16.gmra.mxu0 %v6514
        %v6785 = vpop.f32.mrf.mxu0
        %v6786 = vadd.f32 0.0, %v6785
        %v6787 = vpop.f32.mrf.mxu0
        %v6788 = vpop.f32.mrf.mxu0
        %v6789 = vadd.f32 0.0, %v6788
        %v6790 = vpop.f32.mrf.mxu0
        %6791 = vmatprep.mubr.bf16.mxu0 %v6662
        %6792 = vmatmul.mubr.bf16.gmra.mxu0 %v6517
        %v6793 = vpop.f32.mrf.mxu0
        %v6794 = vadd.f32 0.0, %v6793
        %v6795 = vpop.f32.mrf.mxu0
        %v6796 = vpop.f32.mrf.mxu0
        %v6797 = vadd.f32 0.0, %v6796
        %v6798 = vpop.f32.mrf.mxu0
        %6799 = vmatprep.mubr.bf16.mxu0 %v6665
        %6800 = vmatmul.mubr.bf16.gmra.mxu0 %v6520
        %v6801 = vpop.f32.mrf.mxu0
        %v6802 = vadd.f32 0.0, %v6801
        %v6803 = vpop.f32.mrf.mxu0
        %v6804 = vpop.f32.mrf.mxu0
        %v6805 = vadd.f32 0.0, %v6804
        %v6806 = vpop.f32.mrf.mxu0
        %6807 = vmatprep.mubr.bf16.mxu0 %v6668
        %6808 = vmatmul.mubr.bf16.gmra.mxu0 %v6523
        %v6809 = vpop.f32.mrf.mxu0
        %v6810 = vadd.f32 0.0, %v6809
        %v6811 = vpop.f32.mrf.mxu0
        %v6812 = vpop.f32.mrf.mxu0
        %v6813 = vadd.f32 0.0, %v6812
        %v6814 = vpop.f32.mrf.mxu0
        %6815 = vmatprep.mubr.bf16.mxu0 %v6671
        %6816 = vmatmul.mubr.bf16.gmra.mxu0 %v6526
        %v6817 = vpop.f32.mrf.mxu0
        %v6818 = vadd.f32 0.0, %v6817
        %v6819 = vpop.f32.mrf.mxu0
        %v6820 = vpop.f32.mrf.mxu0
        %v6821 = vadd.f32 0.0, %v6820
        %v6822 = vpop.f32.mrf.mxu0
        %6823 = vmatprep.mubr.bf16.mxu0 %v6674
        %6824 = vmatmul.mubr.bf16.gmra.mxu0 %v6529
        %v6825 = vpop.f32.mrf.mxu0
        %v6826 = vadd.f32 0.0, %v6825
        %v6827 = vpop.f32.mrf.mxu0
        %v6828 = vpop.f32.mrf.mxu0
        %v6829 = vadd.f32 0.0, %v6828
        %v6830 = vpop.f32.mrf.mxu0
        %6831 = vmatprep.mubr.bf16.mxu0 %v6677
        %6832 = vmatmul.mubr.bf16.gmra.mxu0 %v6532
        %v6833 = vpop.f32.mrf.mxu0
        %v6834 = vadd.f32 0.0, %v6833
        %v6835 = vpop.f32.mrf.mxu0
        %v6836 = vpop.f32.mrf.mxu0
        %v6837 = vadd.f32 0.0, %v6836
        %v6838 = vpop.f32.mrf.mxu0
        %6839 = vdwg.mxu0
        %v6840 = vadd.f32 %v5941, %v6714
        %v6841 = vadd.f32 %v5942, %v6717
        %v6842 = vadd.f32 %v5943, %v6722
        %v6843 = vadd.f32 %v5944, %v6725
        %v6844 = vadd.f32 %v5945, %v6730
        %v6845 = vadd.f32 %v5946, %v6733
        %v6846 = vadd.f32 %v5947, %v6738
        %v6847 = vadd.f32 %v5948, %v6741
        %v6848 = vadd.f32 %v5949, %v6746
        %v6849 = vadd.f32 %v5950, %v6749
        %v6850 = vadd.f32 %v5951, %v6754
        %v6851 = vadd.f32 %v5952, %v6757
        %v6852 = vadd.f32 %v5953, %v6762
        %v6853 = vadd.f32 %v5954, %v6765
        %v6854 = vadd.f32 %v5955, %v6770
        %v6855 = vadd.f32 %v5956, %v6773
        %v6856 = vadd.f32 %v5957, %v6778
        %v6857 = vadd.f32 %v5958, %v6781
        %v6858 = vadd.f32 %v5959, %v6786
        %v6859 = vadd.f32 %v5960, %v6789
        %v6860 = vadd.f32 %v5961, %v6794
        %v6861 = vadd.f32 %v5962, %v6797
        %v6862 = vadd.f32 %v5963, %v6802
        %v6863 = vadd.f32 %v5964, %v6805
        %v6864 = vadd.f32 %v5965, %v6810
        %v6865 = vadd.f32 %v5966, %v6813
        %v6866 = vadd.f32 %v5967, %v6818
        %v6867 = vadd.f32 %v5968, %v6821
        %v6868 = vadd.f32 %v5969, %v6826
        %v6869 = vadd.f32 %v5970, %v6829
        %v6870 = vadd.f32 %v5971, %v6834
        %v6871 = vadd.f32 %v5972, %v6837
        %v6872 = vld [vmem:[%s222] sm:$0xf]
        %v6873 = vld [vmem:[%s222 + $0x4] sm:$0xf]
        %v6874 = vld [vmem:[%s222 + $0x8] sm:$0xf]
        %v6875 = vld [vmem:[%s222 + $0xc] sm:$0xf]
        %v6876 = vld [vmem:[%s222 + $0x10] sm:$0xf]
        %v6877 = vld [vmem:[%s222 + $0x14] sm:$0xf]
        %v6878 = vld [vmem:[%s222 + $0x18] sm:$0xf]
        %v6879 = vld [vmem:[%s222 + $0x1c] sm:$0xf]
        %v6880 = vld [vmem:[%s222 + $0x20] sm:$0xf]
        %v6881 = vld [vmem:[%s222 + $0x24] sm:$0xf]
        %v6882 = vld [vmem:[%s222 + $0x28] sm:$0xf]
        %v6883 = vld [vmem:[%s222 + $0x2c] sm:$0xf]
        %v6884 = vld [vmem:[%s222 + $0x30] sm:$0xf]
        %v6885 = vld [vmem:[%s222 + $0x34] sm:$0xf]
        %v6886 = vld [vmem:[%s222 + $0x38] sm:$0xf]
        %v6887 = vld [vmem:[%s222 + $0x3c] sm:$0xf]
        %v6888 = vld [vmem:[%s222 + $0x40] sm:$0xf]
        %v6889 = vld [vmem:[%s222 + $0x44] sm:$0xf]
        %v6890 = vld [vmem:[%s222 + $0x48] sm:$0xf]
        %v6891 = vld [vmem:[%s222 + $0x4c] sm:$0xf]
        %v6892 = vld [vmem:[%s222 + $0x50] sm:$0xf]
        %v6893 = vld [vmem:[%s222 + $0x54] sm:$0xf]
        %v6894 = vld [vmem:[%s222 + $0x58] sm:$0xf]
        %v6895 = vld [vmem:[%s222 + $0x5c] sm:$0xf]
        %v6896 = vld [vmem:[%s222 + $0x60] sm:$0xf]
        %v6897 = vld [vmem:[%s222 + $0x64] sm:$0xf]
        %v6898 = vld [vmem:[%s222 + $0x68] sm:$0xf]
        %v6899 = vld [vmem:[%s222 + $0x6c] sm:$0xf]
        %v6900 = vld [vmem:[%s222 + $0x70] sm:$0xf]
        %v6901 = vld [vmem:[%s222 + $0x74] sm:$0xf]
        %v6902 = vld [vmem:[%s222 + $0x78] sm:$0xf]
        %v6903 = vld [vmem:[%s222 + $0x7c] sm:$0xf]
        %v6904 = vunpack.c.l.bf16 %v6872
        %v6905 = vunpack.c.l.bf16 %v6873
        %v6906 = vunpack.c.l.bf16 %v6874
        %v6907 = vunpack.c.l.bf16 %v6875
        %v6908 = vunpack.c.l.bf16 %v6876
        %v6909 = vunpack.c.l.bf16 %v6877
        %v6910 = vunpack.c.l.bf16 %v6878
        %v6911 = vunpack.c.l.bf16 %v6879
        %v6912 = vunpack.c.l.bf16 %v6880
        %v6913 = vunpack.c.l.bf16 %v6881
        %v6914 = vunpack.c.l.bf16 %v6882
        %v6915 = vunpack.c.l.bf16 %v6883
        %v6916 = vunpack.c.l.bf16 %v6884
        %v6917 = vunpack.c.l.bf16 %v6885
        %v6918 = vunpack.c.l.bf16 %v6886
        %v6919 = vunpack.c.l.bf16 %v6887
        %v6920 = vunpack.c.l.bf16 %v6888
        %v6921 = vunpack.c.l.bf16 %v6889
        %v6922 = vunpack.c.l.bf16 %v6890
        %v6923 = vunpack.c.l.bf16 %v6891
        %v6924 = vunpack.c.l.bf16 %v6892
        %v6925 = vunpack.c.l.bf16 %v6893
        %v6926 = vunpack.c.l.bf16 %v6894
        %v6927 = vunpack.c.l.bf16 %v6895
        %v6928 = vunpack.c.l.bf16 %v6896
        %v6929 = vunpack.c.l.bf16 %v6897
        %v6930 = vunpack.c.l.bf16 %v6898
        %v6931 = vunpack.c.l.bf16 %v6899
        %v6932 = vunpack.c.l.bf16 %v6900
        %v6933 = vunpack.c.l.bf16 %v6901
        %v6934 = vunpack.c.l.bf16 %v6902
        %v6935 = vunpack.c.l.bf16 %v6903
        %v6936 = vadd.f32 %v6840, %v6904
        %v6937 = vadd.f32 %v6841, %v6905
        %v6938 = vadd.f32 %v6842, %v6906
        %v6939 = vadd.f32 %v6843, %v6907
        %v6940 = vadd.f32 %v6844, %v6908
        %v6941 = vadd.f32 %v6845, %v6909
        %v6942 = vadd.f32 %v6846, %v6910
        %v6943 = vadd.f32 %v6847, %v6911
        %v6944 = vadd.f32 %v6848, %v6912
        %v6945 = vadd.f32 %v6849, %v6913
        %v6946 = vadd.f32 %v6850, %v6914
        %v6947 = vadd.f32 %v6851, %v6915
        %v6948 = vadd.f32 %v6852, %v6916
        %v6949 = vadd.f32 %v6853, %v6917
        %v6950 = vadd.f32 %v6854, %v6918
        %v6951 = vadd.f32 %v6855, %v6919
        %v6952 = vadd.f32 %v6856, %v6920
        %v6953 = vadd.f32 %v6857, %v6921
        %v6954 = vadd.f32 %v6858, %v6922
        %v6955 = vadd.f32 %v6859, %v6923
        %v6956 = vadd.f32 %v6860, %v6924
        %v6957 = vadd.f32 %v6861, %v6925
        %v6958 = vadd.f32 %v6862, %v6926
        %v6959 = vadd.f32 %v6863, %v6927
        %v6960 = vadd.f32 %v6864, %v6928
        %v6961 = vadd.f32 %v6865, %v6929
        %v6962 = vadd.f32 %v6866, %v6930
        %v6963 = vadd.f32 %v6867, %v6931
        %v6964 = vadd.f32 %v6868, %v6932
        %v6965 = vadd.f32 %v6869, %v6933
        %v6966 = vadd.f32 %v6870, %v6934
        %v6967 = vadd.f32 %v6871, %v6935
        %6968 = vst.msk [vmem:[%s217] sm:$0xff] %vm1428, %v6936
        %6969 = vst.msk [vmem:[%s217 + $0x8] sm:$0xff] %vm1428, %v6937
        %6970 = vst.msk [vmem:[%s217 + $0x10] sm:$0xff] %vm1428, %v6938
        %6971 = vst.msk [vmem:[%s217 + $0x18] sm:$0xff] %vm1428, %v6939
        %6972 = vst.msk [vmem:[%s217 + $0x20] sm:$0xff] %vm1428, %v6940
        %6973 = vst.msk [vmem:[%s217 + $0x28] sm:$0xff] %vm1428, %v6941
        %6974 = vst.msk [vmem:[%s217 + $0x30] sm:$0xff] %vm1428, %v6942
        %6975 = vst.msk [vmem:[%s217 + $0x38] sm:$0xff] %vm1428, %v6943
        %6976 = vst.msk [vmem:[%s217 + $0x40] sm:$0xff] %vm1428, %v6944
        %6977 = vst.msk [vmem:[%s217 + $0x48] sm:$0xff] %vm1428, %v6945
        %6978 = vst.msk [vmem:[%s217 + $0x50] sm:$0xff] %vm1428, %v6946
        %6979 = vst.msk [vmem:[%s217 + $0x58] sm:$0xff] %vm1428, %v6947
        %6980 = vst.msk [vmem:[%s217 + $0x60] sm:$0xff] %vm1428, %v6948
        %6981 = vst.msk [vmem:[%s217 + $0x68] sm:$0xff] %vm1428, %v6949
        %6982 = vst.msk [vmem:[%s217 + $0x70] sm:$0xff] %vm1428, %v6950
        %6983 = vst.msk [vmem:[%s217 + $0x78] sm:$0xff] %vm1428, %v6951
        %6984 = vst.msk [vmem:[%s217 + $0x80] sm:$0xff] %vm1428, %v6952
        %6985 = vst.msk [vmem:[%s217 + $0x88] sm:$0xff] %vm1428, %v6953
        %6986 = vst.msk [vmem:[%s217 + $0x90] sm:$0xff] %vm1428, %v6954
        %6987 = vst.msk [vmem:[%s217 + $0x98] sm:$0xff] %vm1428, %v6955
        %6988 = vst.msk [vmem:[%s217 + $0xa0] sm:$0xff] %vm1428, %v6956
        %6989 = vst.msk [vmem:[%s217 + $0xa8] sm:$0xff] %vm1428, %v6957
        %6990 = vst.msk [vmem:[%s217 + $0xb0] sm:$0xff] %vm1428, %v6958
        %6991 = vst.msk [vmem:[%s217 + $0xb8] sm:$0xff] %vm1428, %v6959
        %6992 = vst.msk [vmem:[%s217 + $0xc0] sm:$0xff] %vm1428, %v6960
        %6993 = vst.msk [vmem:[%s217 + $0xc8] sm:$0xff] %vm1428, %v6961
        %6994 = vst.msk [vmem:[%s217 + $0xd0] sm:$0xff] %vm1428, %v6962
        %6995 = vst.msk [vmem:[%s217 + $0xd8] sm:$0xff] %vm1428, %v6963
        %6996 = vst.msk [vmem:[%s217 + $0xe0] sm:$0xff] %vm1428, %v6964
        %6997 = vst.msk [vmem:[%s217 + $0xe8] sm:$0xff] %vm1428, %v6965
        %6998 = vst.msk [vmem:[%s217 + $0xf0] sm:$0xff] %vm1428, %v6966
        %6999 = vst.msk [vmem:[%s217 + $0xf8] sm:$0xff] %vm1428, %v6967
        %s7000 = sand.u32 %s137, 1
        %s7001 = scalar_lea.sflag [#allocation5], %s7000
        %s7002 = sand.u32 %s137, 1
        %s7003 = smul.addr %s7002, 256
        %s7004 = scalar_lea.vmem [#allocation4], %s7003
        // Predicated region
        $region41: #{resblock_db.1} parent=39 // pred_check
          %p7005 = pneg %p147
        $region42: #{resblock_db.1} parent=39 // pred_check_branch
          %7007 = sbr.rel (%p7005) target = $region44
        $region43: #{resblock_db.1} parent=39 // pred_region
          %s7009 = ssub.s32 4096, 4096
          %7010 = vsyncadd %s7001, %s7009
          %s7011 = smul.addr %s19, 32
          %s7012 = smul.addr %s7011, 128
          %s7013 = scalar_lea.hbm %s5, %s7012
          %s7014 = sshll.u32 %s7004, 4
          %s7015 = int_to_ptr.vmem [resolvable:$true] %s7014
          %7020 = dma.vmem_to_hbm [thread:$0]  %s7015, 4096, %s7013, %s7001, 128, 128, 8
        $region44: #{resblock_db.1} parent=39 // pred_fallthru
          _
      $region40: #{resblock_db.1} parent=5 // pred_fallthru
        _
      %p7021 = scmp.le.s32.totalorder 2, %s14
      // Predicated region
      $region45: #{resblock_db.1} parent=5 // pred_check
        %p7022 = pneg %p7021
      $region46: #{resblock_db.1} parent=5 // pred_check_branch
        %7024 = sbr.rel (%p7022) target = $region48
      $region47: #{resblock_db.1} parent=5 // pred_region
        %s7025 = ssub.s32 %s14, 2
        // Predicated region
        $region49: #{resblock_db.1} parent=47 // pred_check
          %p7026 = pneg %p153
        $region50: #{resblock_db.1} parent=47 // pred_check_branch
          %7028 = sbr.rel (%p7026) target = $region52
        $region51: #{resblock_db.1} parent=47 // pred_region
          %s7029 = sand.u32 %s138, 1
          %s7030 = scalar_lea.sflag [#allocation5], %s7029
          %s7031 = sand.u32 %s138, 1
          %s7032 = smul.addr %s7031, 256
          %s7033 = scalar_lea.vmem [#allocation4], %s7032
          %7034 = dma.done %s7030, 4096
        $region52: #{resblock_db.1} parent=47 // pred_fallthru
          _
      $region48: #{resblock_db.1} parent=5 // pred_fallthru
        _
    $region6: #{resblock_db.1} parent=1 // loop_footer
      %s18 = sadd.s32 1, %s14
    $region7: #{resblock_db.1} parent=1 // loop_footer_branch
      %13 = sbr.rel target = $region3
    $region8: #{resblock_db.1} parent=1 // loop_exit
      _
    %7035 = vsyncpa [#allocation5], 1
    %s7036 = scalar_lea.sflag [#allocation5], 1
    %7037 = vsyncpa %s7036, 1

</llo_original>
